<compile_context>
chip_gen: v7x
topology: tpu7x:2x2x1
jax: 0.10.0
libtpu: 0.0.40
codegen_flags: <defaults>
</compile_context>

<pallas_src>
import functools

import jax
import jax.numpy as jnp
from jax.experimental import pallas as pl
from jax.experimental.pallas import tpu as pltpu


def _ca_kernel(*refs, groups, pe_multiplier, pe_bias):
    """One (batch, query-tile) step: pairwise relation MLPs + grouped key-axis attention."""
    out_ref, logits_ref = refs[-2], refs[-1]
    it = iter(refs[:-2])
    q_ref, k_ref, v_ref = next(it), next(it), next(it)
    if pe_multiplier:
        pam_ref, pbm_ref, wm2_ref, bm2_ref = next(it), next(it), next(it), next(it)
    if pe_bias:
        pab_ref, pbb_ref, wb2_ref, bb2_ref = next(it), next(it), next(it), next(it)
    ww1_ref, bw1_ref, ww2_ref, bw2_ref, expand_ref = (next(it), next(it), next(it),
                                                      next(it), next(it))

    q = q_ref[0]          # (T, C)  query tile of set "a"   (f32)
    k = k_ref[0]          # (M, C)  keys of set "b"         (f32)
    v = v_ref[0]          # (M, C)  values of set "b"       (f32)
    T, C = q.shape
    M = k.shape[0]
    G = groups
    GM = G * M
    bf16 = jnp.bfloat16

    # relation_qk[t, m, :] = key_b[m] - query_a[t], flattened row-major over (t, m)
    rel = (k[None, :, :] - q[:, None, :]).reshape(T * M, C)

    peb = None
    if pe_multiplier:
        # first PE layer factored by linearity: pam already holds ca@W1 + b1, pbm holds cb@W1
        hm = jnp.maximum((pam_ref[0][:, None, :] - pbm_ref[0][None, :, :]).reshape(T * M, C), 0.0)
        pem = jnp.dot(hm.astype(bf16), wm2_ref[...],
                      preferred_element_type=jnp.float32) + bm2_ref[...]
        rel = rel * pem
    if pe_bias:
        hb = jnp.maximum((pab_ref[0][:, None, :] - pbb_ref[0][None, :, :]).reshape(T * M, C), 0.0)
        peb = jnp.dot(hb.astype(bf16), wb2_ref[...],
                      preferred_element_type=jnp.float32) + bb2_ref[...]
        rel = rel + peb

    # weight_encoding MLP: (T*M, C) -> (T*M, G); bf16 operands, f32 accumulation
    h = jnp.maximum(jnp.dot(rel.astype(bf16), ww1_ref[...],
                            preferred_element_type=jnp.float32) + bw1_ref[...], 0.0)
    w = jnp.dot(h.astype(bf16), ww2_ref[...],
                preferred_element_type=jnp.float32) + bw2_ref[...]            # (T*M, G)

    # single minor-axis transpose: put the key axis M on lanes for the key-axis softmax
    w3 = w.reshape(T, M, G)                          # leading split (cheap)
    w_tgm = jnp.swapaxes(w3, 1, 2)                   # (T, G, M)

    # raw logits emitted lane-dense (flattened, bf16); the query-axis softmax is finished outside.
    logits_ref[0] = w_tgm.reshape(T, GM).astype(logits_ref.dtype)

    # key-axis softmax (torch dim=2), lane-dense over M
    wmax = jnp.max(w_tgm, axis=2, keepdims=True)                              # (T, G, 1)
    we = jnp.exp(w_tgm - wmax)
    winv = pl.reciprocal(jnp.sum(we, axis=2, keepdims=True), approx=True)     # (T, G, 1)
    w_mult = we * winv                                                        # (T, G, M)

    # value aggregation as ONE MXU contraction against a block-diagonal value matrix:
    #   V_blk[g*M + m, c] = v[m, c] * expand[g, c]   (expand = one-hot group->channel map)
    v_blk = (v.astype(bf16)[None, :, :] * expand_ref[...][:, None, :]).reshape(GM, C)
    out = jnp.dot(w_mult.reshape(T, GM).astype(bf16), v_blk,
                  preferred_element_type=jnp.float32)                         # (T, C)

    if pe_bias:
        # pairwise pe-bias correction: + sum_m w_mult[t, g(c), m] * peb[t, m, c]
        # w_mult recomputed directly in (T, M, G) layout from the broadcast max / reciprocal-sum
        # (EUP slot) — avoids a second XLU transpose of the (T, G, M) slab.
        w_mult_tmg = jnp.exp(w3 - wmax.reshape(T, 1, G)) * winv.reshape(T, 1, G)
        w_rep = jnp.dot(w_mult_tmg.reshape(T * M, G).astype(bf16), expand_ref[...],
                        preferred_element_type=jnp.float32)                   # (T*M, C)
        out = out + jnp.sum((peb * w_rep).reshape(T, M, C), axis=1)

    out_ref[0] = out.astype(out_ref.dtype)


def _round_up(x, m):
    return ((x + m - 1) // m) * m


def _vmem_capacity_bytes():
    """Physical per-core VMEM (generation-aware); conservative v7x default on failure."""
    try:
        info = pltpu.get_tpu_info()
        cap = getattr(info, "vmem_capacity_bytes", None)
        if cap:
            return int(cap)
    except Exception:
        pass
    return 64 * 1024 * 1024


def _choose_tile_n(N, M, C, G, vmem_limit_bytes, pe_multiplier, pe_bias):
    """Largest query tile whose footprint (double-buffered I/O tiles + resident weights + live
    pairwise (tile*M, C) slabs) fits within ~85% of the per-kernel VMEM limit."""
    n8 = _round_up(max(N, 1), 8)
    budget = int(vmem_limit_bytes * 0.85)
    # tile-size independent: double-buffered per-batch key-side inputs + resident weight blocks
    n_full = 2 + int(pe_multiplier) + int(pe_bias)                 # k, v, pbm, pbb
    fixed = 2 * n_full * M * C * 4
    fixed += 2 * (2 * C * C + C * G + G * G + G * C) * 2           # bf16 weights (x2 buffers)
    fixed += 2 * 4 * (3 * C + 2 * G)                               # f32 bias rows
    # per query-row: live pairwise slabs + double-buffered query-side / output tiles
    n_slabs = 3                                                    # rel f32 + bf16 dot copy + headroom
    if pe_multiplier:
        n_slabs += 2                                               # hm + pem
    if pe_bias:
        n_slabs += 3                                               # peb (long-lived) + hb / w_rep
    per_row = n_slabs * M * C * 4
    per_row += 2 * (1 + int(pe_multiplier) + int(pe_bias)) * C * 4   # q, pam, pab tiles
    per_row += 2 * (C * 4 + G * M * 2)                               # out (f32) + logits (bf16)
    tile = (budget - fixed) // max(per_row, 1)
    tile = max(8, min(1024, (tile // 8) * 8))
    return min(tile, n8)


def _pairwise(q_a, k_b, v_b, pam, pbm, pab, pbb, p, *, groups, pe_multiplier, pe_bias, vmem_cap):
    """Queries `a` against keys/values `b`: returns (feats_out, weight_to_output)."""
    B, N, C = q_a.shape
    M = k_b.shape[1]
    G = groups
    GM = G * M
    bf16 = jnp.bfloat16

    vmem_limit = max(32 * 1024 * 1024, min(int(vmem_cap * 0.75), 100 * 1024 * 1024))
    tile = _choose_tile_n(N, M, C, G, vmem_limit, pe_multiplier, pe_bias)
    # v7x megacore balance: guarantee >= 2 parallel grid steps whenever the query axis allows it.
    if B * pl.cdiv(N, tile) < 2 and N > 8:
        tile = max(8, _round_up(pl.cdiv(N, 2), 8))
    n_pad = _round_up(N, tile)
    if n_pad != N:
        pad = lambda x: jnp.pad(x, ((0, 0), (0, n_pad - N), (0, 0)))
        q_a = pad(q_a)
        if pe_multiplier:
            pam = pad(pam)
        if pe_bias:
            pab = pad(pab)

    # group -> channel one-hot expansion, built once outside the kernel (hoisted constant)
    expand = (jnp.arange(C)[None, :] // (C // G) == jnp.arange(G)[:, None]).astype(bf16)  # (G, C)

    tile_spec = pl.BlockSpec((1, tile, C), lambda b, t: (b, t, 0))      # per (batch, N-tile)
    full_spec = pl.BlockSpec((1, M, C), lambda b, t: (b, 0, 0))         # per batch, full key set

    def const_spec(a):
        return pl.BlockSpec(a.shape, lambda b, t, _nd=a.ndim: (0,) * _nd)

    inputs, in_specs = [], []

    def add(x, spec=None):
        inputs.append(x)
        in_specs.append(spec if spec is not None else const_spec(x))

    add(q_a, tile_spec)
    add(k_b, full_spec)
    add(v_b, full_spec)
    if pe_multiplier:
        add(pam, tile_spec)
        add(pbm, full_spec)
        add(p["wm2"].astype(bf16))
        add(p["bm2"])
    if pe_bias:
        add(pab, tile_spec)
        add(pbb, full_spec)
        add(p["wb2"].astype(bf16))
        add(p["bb2"])
    add(p["ww1"].astype(bf16))
    add(p["bw1"])
    add(p["ww2"].astype(bf16))
    add(p["bw2"])
    add(expand)

    kern = functools.partial(_ca_kernel, groups=G,
                             pe_multiplier=pe_multiplier, pe_bias=pe_bias)

    out, logits = pl.pallas_call(
        kern,
        out_shape=(jax.ShapeDtypeStruct((B, n_pad, C), jnp.float32),
                   jax.ShapeDtypeStruct((B, n_pad, GM), jnp.bfloat16)),
        grid_spec=pltpu.PrefetchScalarGridSpec(
            num_scalar_prefetch=0,
            grid=(B, n_pad // tile),
            in_specs=in_specs,
            out_specs=[pl.BlockSpec((1, tile, C), lambda b, t: (b, t, 0)),
                       pl.BlockSpec((1, tile, GM), lambda b, t: (b, t, 0))]),
        compiler_params=pltpu.CompilerParams(
            dimension_semantics=("parallel", "parallel"),
            vmem_limit_bytes=vmem_limit),
    )(*inputs)

    out = out[:, :N]
    # second pass (plain JAX, f32): query-axis softmax across all N tiles, then mean over groups.
    logits = logits[:, :N].astype(jnp.float32).reshape(B, N, G, M)
    w_out = jnp.mean(jax.nn.softmax(logits, axis=1), axis=2)            # (B, N, M)
    return out, w_out


def grouped_vector_ca_forward(feats1, coords1, feats2, coords2, p, *,
                              groups, pe_multiplier=True, pe_bias=True):
    # q/k/v projections (Linear + folded-BN + ReLU for q/k, plain Linear for v) — glue in plain JAX.
    def proj_qk(x, W, b):
        return jnp.maximum(x @ W + b, 0.0)

    q1 = proj_qk(feats1, p["wq"], p["bq"])
    k1 = proj_qk(feats1, p["wk"], p["bk"])
    v1 = feats1 @ p["wv"] + p["bv"]
    q2 = proj_qk(feats2, p["wq"], p["bq"])
    k2 = proj_qk(feats2, p["wk"], p["bk"])
    v2 = feats2 @ p["wv"] + p["bv"]

    # First PE layers are linear in (ca - cb): precompute per-point coordinate projections once.
    c1m = c2m = c1b = c2b = pam1 = pam2 = pab1 = pab2 = None
    if pe_multiplier:
        c1m, c2m = coords1 @ p["wm1"], coords2 @ p["wm1"]
        pam1, pam2 = c1m + p["bm1"], c2m + p["bm1"]
    if pe_bias:
        c1b, c2b = coords1 @ p["wb1"], coords2 @ p["wb1"]
        pab1, pab2 = c1b + p["bb1"], c2b + p["bb1"]

    vmem_cap = _vmem_capacity_bytes()
    kwargs = dict(groups=groups, pe_multiplier=pe_multiplier, pe_bias=pe_bias, vmem_cap=vmem_cap)

    # direction 1: queries from set 1, keys/values from set 2
    f1_out, w1_out = _pairwise(q1, k2, v2, pam1, c2m, pab1, c2b, p, **kwargs)
    # direction 2: queries from set 2, keys/values from set 1
    f2_out, w2_out = _pairwise(q2, k1, v1, pam2, c1m, pab2, c1b, p, **kwargs)
    return f1_out, w1_out, f2_out, w2_out


def init_params(key, C, G):
    keys = iter(jax.random.split(key, 28))

    def lin(din, dout, scale=0.1):
        W = jax.random.normal(next(keys), (din, dout), jnp.float32) * scale
        b = jax.random.normal(next(keys), (dout,), jnp.float32) * scale
        return W, b

    def bn_affine(d, eps=1e-5):
        gamma = 1.0 + 0.1 * jax.random.normal(next(keys), (d,), jnp.float32)
        beta = 0.1 * jax.random.normal(next(keys), (d,), jnp.float32)
        # fresh BatchNorm1d in eval mode: running_mean=0, running_var=1
        return gamma / jnp.sqrt(1.0 + eps), beta

    def fold(W, b, scale, shift):
        return W * scale[None, :], b * scale + shift

    p = {}
    # linear_q / linear_k: Linear(C,C,bias) + BN(C) folded
    Wq, bq = lin(C, C); sq, tq = bn_affine(C); p["wq"], p["bq"] = fold(Wq, bq, sq, tq)
    Wk, bk = lin(C, C); sk, tk = bn_affine(C); p["wk"], p["bk"] = fold(Wk, bk, sk, tk)
    # linear_v: Linear(C,C,bias)
    p["wv"], p["bv"] = lin(C, C)
    # linear_p_multiplier: Linear(3,C)+BN+ReLU+Linear(C,C)
    Wm1, bm1 = lin(3, C); sm, tm = bn_affine(C); p["wm1"], p["bm1"] = fold(Wm1, bm1, sm, tm)
    p["wm2"], p["bm2"] = lin(C, C)
    # linear_p_bias: Linear(3,C)+BN+ReLU+Linear(C,C)
    Wb1, bb1 = lin(3, C); sb, tb = bn_affine(C); p["wb1"], p["bb1"] = fold(Wb1, bb1, sb, tb)
    p["wb2"], p["bb2"] = lin(C, C)
    # weight_encoding: Linear(C,G)+BN(G)+ReLU+Linear(G,G)
    Ww1, bw1 = lin(C, G); sw, tw = bn_affine(G); p["ww1"], p["bw1"] = fold(Ww1, bw1, sw, tw)
    p["ww2"], p["bw2"] = lin(G, G)

    # biases as (1, d) rows for VMEM-friendly broadcasting inside the kernel
    for name in ["bq", "bk", "bv", "bm1", "bm2", "bb1", "bb2", "bw1", "bw2"]:
        p[name] = p[name].reshape(1, -1)
    return p


def reference_forward(feats1, coords1, feats2, coords2, p, groups, pe_multiplier, pe_bias):
    """Pure-JAX mirror of the PyTorch forward (eval-mode BN/dropout)."""
    B, N, C = feats1.shape
    M = feats2.shape[1]
    G = groups

    def proj_qk(x, W, b):
        return jnp.maximum(x @ W + b, 0.0)

    q1, k1, v1 = proj_qk(feats1, p["wq"], p["bq"]), proj_qk(feats1, p["wk"], p["bk"]), feats1 @ p["wv"] + p["bv"]
    q2, k2, v2 = proj_qk(feats2, p["wq"], p["bq"]), proj_qk(feats2, p["wk"], p["bk"]), feats2 @ p["wv"] + p["bv"]

    def mlp_p(x, w1, b1, w2, b2):
        return jnp.maximum(x @ w1 + b1, 0.0) @ w2 + b2

    def direction(q_a, k_b, v_b, c_a, c_b):
        Na, Mb = q_a.shape[1], k_b.shape[1]
        rel = k_b[:, None, :, :] - q_a[:, :, None, :]                # (B, Na, Mb, C)
        val = jnp.broadcast_to(v_b[:, None, :, :], (B, Na, Mb, C))
        pdiff = c_a[:, :, None, :] - c_b[:, None, :, :]              # (B, Na, Mb, 3)
        if pe_multiplier:
            rel = rel * mlp_p(pdiff, p["wm1"], p["bm1"], p["wm2"], p["bm2"])
        if pe_bias:
            peb = mlp_p(pdiff, p["wb1"], p["bb1"], p["wb2"], p["bb2"])
            rel = rel + peb
            val = val + peb
        w = mlp_p(rel, p["ww1"], p["bw1"], p["ww2"], p["bw2"])       # (B, Na, Mb, G)
        w_mult = jax.nn.softmax(w, axis=2)
        w_out = jnp.mean(jax.nn.softmax(w, axis=1), axis=-1)
        val = val.reshape(B, Na, Mb, G, C // G)
        out = jnp.einsum("bnmgi,bnmg->bngi", val, w_mult).reshape(B, Na, C)
        return out, w_out

    o1, wo1 = direction(q1, k2, v2, coords1, coords2)
    o2, wo2 = direction(q2, k1, v1, coords2, coords1)
    return o1, wo1, o2, wo2


if __name__ == "__main__":
    B, N, M, C, G = 2, 16, 8, 32, 4  # embed_channels=32, groups=4
    key = jax.random.PRNGKey(0)
    kf1, kc1, kf2, kc2, kp = jax.random.split(key, 5)
    feats1 = jax.random.normal(kf1, (B, N, C), jnp.float32)
    coords1 = jax.random.normal(kc1, (B, N, 3), jnp.float32)
    feats2 = jax.random.normal(kf2, (B, M, C), jnp.float32)
    coords2 = jax.random.normal(kc2, (B, M, 3), jnp.float32)
    params = init_params(kp, C, G)

    outs = grouped_vector_ca_forward(feats1, coords1, feats2, coords2, params,
                                     groups=G, pe_multiplier=True, pe_bias=True)
    outs = jax.block_until_ready(outs)

    refs = reference_forward(feats1, coords1, feats2, coords2, params, G, True, True)
    names = ["feats1_output", "weight_to_output_1", "feats2_output", "weight_to_output_2"]
    # tolerances cover bf16 MXU operands + bf16 logits writeback + pl.reciprocal(approx=True);
    # observed errors are a few 1e-3 absolute, so 2e-2 / 1e-2 leave comfortable headroom.
    tols = [2e-2, 1e-2, 2e-2, 1e-2]
    for name, o, r, tol in zip(names, outs, refs, tols):
        assert o.shape == r.shape, (name, o.shape, r.shape)
        assert jnp.allclose(o, r, rtol=tol, atol=tol), (name, float(jnp.abs(o - r).max()))

    print("KERNEL_OK")
</pallas_src>

<mosaic_0001>
module attributes {stable_mosaic.version = 11 : i64} {
  func.func @_ca_kernel(%arg0: i32, %arg1: i32, %arg2: memref<1x16x32xf32, #tpu.memory_space<vmem>>, %arg3: memref<1x8x32xf32, #tpu.memory_space<vmem>>, %arg4: memref<1x8x32xf32, #tpu.memory_space<vmem>>, %arg5: memref<1x16x32xf32, #tpu.memory_space<vmem>>, %arg6: memref<1x8x32xf32, #tpu.memory_space<vmem>>, %arg7: memref<32x32xbf16, #tpu.memory_space<vmem>>, %arg8: memref<1x32xf32, #tpu.memory_space<vmem>>, %arg9: memref<1x16x32xf32, #tpu.memory_space<vmem>>, %arg10: memref<1x8x32xf32, #tpu.memory_space<vmem>>, %arg11: memref<32x32xbf16, #tpu.memory_space<vmem>>, %arg12: memref<1x32xf32, #tpu.memory_space<vmem>>, %arg13: memref<32x4xbf16, #tpu.memory_space<vmem>>, %arg14: memref<1x4xf32, #tpu.memory_space<vmem>>, %arg15: memref<4x4xbf16, #tpu.memory_space<vmem>>, %arg16: memref<1x4xf32, #tpu.memory_space<vmem>>, %arg17: memref<4x32xbf16, #tpu.memory_space<vmem>>, %arg18: memref<1x16x32xf32, #tpu.memory_space<vmem>>, %arg19: memref<1x16x32xbf16, #tpu.memory_space<vmem>>) attributes {dimension_semantics = [#tpu.dimension_semantics<parallel>, #tpu.dimension_semantics<parallel>], iteration_bounds = array<i64: 2, 1>, scalar_prefetch = 0 : i64, scratch_operands = 0 : i64, tpu.core_type = #tpu.core_type<tc>, window_params = [{transform_indices = @transform_0, window_bounds = array<i64: 1, 16, 32>}, {transform_indices = @transform_1, window_bounds = array<i64: 1, 8, 32>}, {transform_indices = @transform_2, window_bounds = array<i64: 1, 8, 32>}, {transform_indices = @transform_3, window_bounds = array<i64: 1, 16, 32>}, {transform_indices = @transform_4, window_bounds = array<i64: 1, 8, 32>}, {pipeline_mode = #tpu.pipeline_mode<synchronous>, transform_indices = @transform_5, window_bounds = array<i64: 32, 32>}, {pipeline_mode = #tpu.pipeline_mode<synchronous>, transform_indices = @transform_6, window_bounds = array<i64: 1, 32>}, {transform_indices = @transform_7, window_bounds = array<i64: 1, 16, 32>}, {transform_indices = @transform_8, window_bounds = array<i64: 1, 8, 32>}, {pipeline_mode = #tpu.pipeline_mode<synchronous>, transform_indices = @transform_9, window_bounds = array<i64: 32, 32>}, {pipeline_mode = #tpu.pipeline_mode<synchronous>, transform_indices = @transform_10, window_bounds = array<i64: 1, 32>}, {pipeline_mode = #tpu.pipeline_mode<synchronous>, transform_indices = @transform_11, window_bounds = array<i64: 32, 4>}, {pipeline_mode = #tpu.pipeline_mode<synchronous>, transform_indices = @transform_12, window_bounds = array<i64: 1, 4>}, {pipeline_mode = #tpu.pipeline_mode<synchronous>, transform_indices = @transform_13, window_bounds = array<i64: 4, 4>}, {pipeline_mode = #tpu.pipeline_mode<synchronous>, transform_indices = @transform_14, window_bounds = array<i64: 1, 4>}, {pipeline_mode = #tpu.pipeline_mode<synchronous>, transform_indices = @transform_15, window_bounds = array<i64: 4, 32>}, {transform_indices = @transform_16, window_bounds = array<i64: 1, 16, 32>}, {transform_indices = @transform_17, window_bounds = array<i64: 1, 16, 32>}]} {
    %c0 = arith.constant 0 : index
    %c0_0 = arith.constant 0 : index
    %c0_1 = arith.constant 0 : index
    %0 = vector.load %arg2[%c0, %c0_0, %c0_1] : memref<1x16x32xf32, #tpu.memory_space<vmem>>, vector<1x16x32xf32>
    %1 = vector.shape_cast %0 : vector<1x16x32xf32> to vector<16x32xf32>
    %c0_2 = arith.constant 0 : index
    %c0_3 = arith.constant 0 : index
    %c0_4 = arith.constant 0 : index
    %2 = vector.load %arg3[%c0_2, %c0_3, %c0_4] : memref<1x8x32xf32, #tpu.memory_space<vmem>>, vector<1x8x32xf32>
    %3 = vector.shape_cast %2 : vector<1x8x32xf32> to vector<8x32xf32>
    %c0_5 = arith.constant 0 : index
    %c0_6 = arith.constant 0 : index
    %c0_7 = arith.constant 0 : index
    %4 = vector.load %arg4[%c0_5, %c0_6, %c0_7] : memref<1x8x32xf32, #tpu.memory_space<vmem>>, vector<1x8x32xf32>
    %5 = vector.shape_cast %4 : vector<1x8x32xf32> to vector<8x32xf32>
    %6 = vector.shape_cast %3 : vector<8x32xf32> to vector<1x8x32xf32>
    %7 = vector.shape_cast %1 : vector<16x32xf32> to vector<16x1x32xf32>
    %8 = vector.broadcast %6 : vector<1x8x32xf32> to vector<16x8x32xf32>
    %9 = vector.broadcast %7 : vector<16x1x32xf32> to vector<16x8x32xf32>
    %10 = arith.subf %8, %9 : vector<16x8x32xf32>
    %11 = vector.shape_cast %10 : vector<16x8x32xf32> to vector<128x32xf32>
    %c0_8 = arith.constant 0 : index
    %c0_9 = arith.constant 0 : index
    %c0_10 = arith.constant 0 : index
    %12 = vector.load %arg5[%c0_8, %c0_9, %c0_10] : memref<1x16x32xf32, #tpu.memory_space<vmem>>, vector<1x16x32xf32>
    %13 = vector.shape_cast %12 : vector<1x16x32xf32> to vector<16x32xf32>
    %14 = vector.shape_cast %13 : vector<16x32xf32> to vector<16x1x32xf32>
    %c0_11 = arith.constant 0 : index
    %c0_12 = arith.constant 0 : index
    %c0_13 = arith.constant 0 : index
    %15 = vector.load %arg6[%c0_11, %c0_12, %c0_13] : memref<1x8x32xf32, #tpu.memory_space<vmem>>, vector<1x8x32xf32>
    %16 = vector.shape_cast %15 : vector<1x8x32xf32> to vector<8x32xf32>
    %17 = vector.shape_cast %16 : vector<8x32xf32> to vector<1x8x32xf32>
    %18 = vector.broadcast %14 : vector<16x1x32xf32> to vector<16x8x32xf32>
    %19 = vector.broadcast %17 : vector<1x8x32xf32> to vector<16x8x32xf32>
    %20 = arith.subf %18, %19 : vector<16x8x32xf32>
    %21 = vector.shape_cast %20 : vector<16x8x32xf32> to vector<128x32xf32>
    %cst = arith.constant 0.000000e+00 : f32
    %22 = vector.broadcast %cst : f32 to vector<128x32xf32>
    %23 = arith.maximumf %21, %22 : vector<128x32xf32>
    %24 = arith.truncf %23 : vector<128x32xf32> to vector<128x32xbf16>
    %c0_14 = arith.constant 0 : index
    %c0_15 = arith.constant 0 : index
    %25 = vector.load %arg7[%c0_14, %c0_15] : memref<32x32xbf16, #tpu.memory_space<vmem>>, vector<32x32xbf16>
    %cst_16 = arith.constant dense<0.000000e+00> : vector<128x32xf32>
    %26 = tpu.matmul %24, %25, %cst_16 {dimension_numbers = #tpu.dot_dimension_numbers<[1], [0], [0], [1], [0, 0, 1, 1], [], []>} : vector<128x32xbf16>, vector<32x32xbf16>, vector<128x32xf32> -> vector<128x32xf32>
    %c0_17 = arith.constant 0 : index
    %c0_18 = arith.constant 0 : index
    %27 = vector.load %arg8[%c0_17, %c0_18] : memref<1x32xf32, #tpu.memory_space<vmem>>, vector<1x32xf32>
    %28 = vector.broadcast %27 : vector<1x32xf32> to vector<128x32xf32>
    %29 = arith.addf %26, %28 : vector<128x32xf32>
    %30 = arith.mulf %11, %29 : vector<128x32xf32>
    %c0_19 = arith.constant 0 : index
    %c0_20 = arith.constant 0 : index
    %c0_21 = arith.constant 0 : index
    %31 = vector.load %arg9[%c0_19, %c0_20, %c0_21] : memref<1x16x32xf32, #tpu.memory_space<vmem>>, vector<1x16x32xf32>
    %32 = vector.shape_cast %31 : vector<1x16x32xf32> to vector<16x32xf32>
    %33 = vector.shape_cast %32 : vector<16x32xf32> to vector<16x1x32xf32>
    %c0_22 = arith.constant 0 : index
    %c0_23 = arith.constant 0 : index
    %c0_24 = arith.constant 0 : index
    %34 = vector.load %arg10[%c0_22, %c0_23, %c0_24] : memref<1x8x32xf32, #tpu.memory_space<vmem>>, vector<1x8x32xf32>
    %35 = vector.shape_cast %34 : vector<1x8x32xf32> to vector<8x32xf32>
    %36 = vector.shape_cast %35 : vector<8x32xf32> to vector<1x8x32xf32>
    %37 = vector.broadcast %33 : vector<16x1x32xf32> to vector<16x8x32xf32>
    %38 = vector.broadcast %36 : vector<1x8x32xf32> to vector<16x8x32xf32>
    %39 = arith.subf %37, %38 : vector<16x8x32xf32>
    %40 = vector.shape_cast %39 : vector<16x8x32xf32> to vector<128x32xf32>
    %cst_25 = arith.constant 0.000000e+00 : f32
    %41 = vector.broadcast %cst_25 : f32 to vector<128x32xf32>
    %42 = arith.maximumf %40, %41 : vector<128x32xf32>
    %43 = arith.truncf %42 : vector<128x32xf32> to vector<128x32xbf16>
    %c0_26 = arith.constant 0 : index
    %c0_27 = arith.constant 0 : index
    %44 = vector.load %arg11[%c0_26, %c0_27] : memref<32x32xbf16, #tpu.memory_space<vmem>>, vector<32x32xbf16>
    %cst_28 = arith.constant dense<0.000000e+00> : vector<128x32xf32>
    %45 = tpu.matmul %43, %44, %cst_28 {dimension_numbers = #tpu.dot_dimension_numbers<[1], [0], [0], [1], [0, 0, 1, 1], [], []>} : vector<128x32xbf16>, vector<32x32xbf16>, vector<128x32xf32> -> vector<128x32xf32>
    %c0_29 = arith.constant 0 : index
    %c0_30 = arith.constant 0 : index
    %46 = vector.load %arg12[%c0_29, %c0_30] : memref<1x32xf32, #tpu.memory_space<vmem>>, vector<1x32xf32>
    %47 = vector.broadcast %46 : vector<1x32xf32> to vector<128x32xf32>
    %48 = arith.addf %45, %47 : vector<128x32xf32>
    %49 = arith.addf %30, %48 : vector<128x32xf32>
    %50 = arith.truncf %49 : vector<128x32xf32> to vector<128x32xbf16>
    %c0_31 = arith.constant 0 : index
    %c0_32 = arith.constant 0 : index
    %51 = vector.load %arg13[%c0_31, %c0_32] : memref<32x4xbf16, #tpu.memory_space<vmem>>, vector<32x4xbf16>
    %cst_33 = arith.constant dense<0.000000e+00> : vector<128x4xf32>
    %52 = tpu.matmul %50, %51, %cst_33 {dimension_numbers = #tpu.dot_dimension_numbers<[1], [0], [0], [1], [0, 0, 1, 1], [], []>} : vector<128x32xbf16>, vector<32x4xbf16>, vector<128x4xf32> -> vector<128x4xf32>
    %c0_34 = arith.constant 0 : index
    %c0_35 = arith.constant 0 : index
    %53 = vector.load %arg14[%c0_34, %c0_35] : memref<1x4xf32, #tpu.memory_space<vmem>>, vector<1x4xf32>
    %54 = vector.broadcast %53 : vector<1x4xf32> to vector<128x4xf32>
    %55 = arith.addf %52, %54 : vector<128x4xf32>
    %cst_36 = arith.constant 0.000000e+00 : f32
    %56 = vector.broadcast %cst_36 : f32 to vector<128x4xf32>
    %57 = arith.maximumf %55, %56 : vector<128x4xf32>
    %58 = arith.truncf %57 : vector<128x4xf32> to vector<128x4xbf16>
    %c0_37 = arith.constant 0 : index
    %c0_38 = arith.constant 0 : index
    %59 = vector.load %arg15[%c0_37, %c0_38] : memref<4x4xbf16, #tpu.memory_space<vmem>>, vector<4x4xbf16>
    %cst_39 = arith.constant dense<0.000000e+00> : vector<128x4xf32>
    %60 = tpu.matmul %58, %59, %cst_39 {dimension_numbers = #tpu.dot_dimension_numbers<[1], [0], [0], [1], [0, 0, 1, 1], [], []>} : vector<128x4xbf16>, vector<4x4xbf16>, vector<128x4xf32> -> vector<128x4xf32>
    %c0_40 = arith.constant 0 : index
    %c0_41 = arith.constant 0 : index
    %61 = vector.load %arg16[%c0_40, %c0_41] : memref<1x4xf32, #tpu.memory_space<vmem>>, vector<1x4xf32>
    %62 = vector.broadcast %61 : vector<1x4xf32> to vector<128x4xf32>
    %63 = arith.addf %60, %62 : vector<128x4xf32>
    %64 = vector.shape_cast %63 : vector<128x4xf32> to vector<16x8x4xf32>
    %65 = tpu.transpose %64, [0, 2, 1] : vector<16x8x4xf32> -> vector<16x4x8xf32>
    %66 = vector.shape_cast %65 : vector<16x4x8xf32> to vector<16x32xf32>
    %67 = arith.truncf %66 : vector<16x32xf32> to vector<16x32xbf16>
    %c0_42 = arith.constant 0 : index
    %c0_43 = arith.constant 0 : index
    %c0_44 = arith.constant 0 : index
    %68 = vector.load %arg19[%c0_42, %c0_43, %c0_44] : memref<1x16x32xbf16, #tpu.memory_space<vmem>>, vector<1x16x32xbf16>
    %69 = vector.shape_cast %68 : vector<1x16x32xbf16> to vector<16x32xbf16>
    %70 = vector.shape_cast %67 : vector<16x32xbf16> to vector<1x16x32xbf16>
    tpu.vector_store %arg19[%c0_42, %c0_43, %c0_44], %70 {strides = array<i32>} : memref<1x16x32xbf16, #tpu.memory_space<vmem>>, vector<1x16x32xbf16>,
    %cst_45 = arith.constant dense<0xFF800000> : vector<16x4xf32>
    %71 = vector.multi_reduction <maximumf>, %65, %cst_45 [2] : vector<16x4x8xf32> to vector<16x4xf32>
    %72 = vector.shape_cast %71 : vector<16x4xf32> to vector<16x4x1xf32>
    %73 = vector.broadcast %72 : vector<16x4x1xf32> to vector<16x4x8xf32>
    %74 = arith.subf %65, %73 : vector<16x4x8xf32>
    %75 = math.exp %74 : vector<16x4x8xf32>
    %cst_46 = arith.constant dense<0.000000e+00> : vector<16x4xf32>
    %76 = vector.multi_reduction <add>, %75, %cst_46 [2] : vector<16x4x8xf32> to vector<16x4xf32>
    %77 = vector.shape_cast %76 : vector<16x4xf32> to vector<16x4x1xf32>
    %78 = tpu.reciprocal %77 {approx = true} : vector<16x4x1xf32> -> vector<16x4x1xf32>
    %79 = vector.broadcast %78 : vector<16x4x1xf32> to vector<16x4x8xf32>
    %80 = arith.mulf %75, %79 : vector<16x4x8xf32>
    %81 = arith.truncf %5 : vector<8x32xf32> to vector<8x32xbf16>
    %82 = vector.shape_cast %81 : vector<8x32xbf16> to vector<1x8x32xbf16>
    %c0_47 = arith.constant 0 : index
    %c0_48 = arith.constant 0 : index
    %83 = vector.load %arg17[%c0_47, %c0_48] : memref<4x32xbf16, #tpu.memory_space<vmem>>, vector<4x32xbf16>
    %84 = vector.shape_cast %83 : vector<4x32xbf16> to vector<4x1x32xbf16>
    %85 = vector.broadcast %82 : vector<1x8x32xbf16> to vector<4x8x32xbf16>
    %86 = vector.broadcast %84 : vector<4x1x32xbf16> to vector<4x8x32xbf16>
    %87 = arith.mulf %85, %86 : vector<4x8x32xbf16>
    %88 = vector.shape_cast %87 : vector<4x8x32xbf16> to vector<32x32xbf16>
    %89 = vector.shape_cast %80 : vector<16x4x8xf32> to vector<16x32xf32>
    %90 = arith.truncf %89 : vector<16x32xf32> to vector<16x32xbf16>
    %cst_49 = arith.constant dense<0.000000e+00> : vector<16x32xf32>
    %91 = tpu.matmul %90, %88, %cst_49 {dimension_numbers = #tpu.dot_dimension_numbers<[1], [0], [0], [1], [0, 0, 1, 1], [], []>} : vector<16x32xbf16>, vector<32x32xbf16>, vector<16x32xf32> -> vector<16x32xf32>
    %92 = vector.shape_cast %72 : vector<16x4x1xf32> to vector<16x1x4xf32>
    %93 = vector.broadcast %92 : vector<16x1x4xf32> to vector<16x8x4xf32>
    %94 = arith.subf %64, %93 : vector<16x8x4xf32>
    %95 = math.exp %94 : vector<16x8x4xf32>
    %96 = vector.shape_cast %78 : vector<16x4x1xf32> to vector<16x1x4xf32>
    %97 = vector.broadcast %96 : vector<16x1x4xf32> to vector<16x8x4xf32>
    %98 = arith.mulf %95, %97 : vector<16x8x4xf32>
    %99 = vector.shape_cast %98 : vector<16x8x4xf32> to vector<128x4xf32>
    %100 = arith.truncf %99 : vector<128x4xf32> to vector<128x4xbf16>
    %c0_50 = arith.constant 0 : index
    %c0_51 = arith.constant 0 : index
    %101 = vector.load %arg17[%c0_50, %c0_51] : memref<4x32xbf16, #tpu.memory_space<vmem>>, vector<4x32xbf16>
    %cst_52 = arith.constant dense<0.000000e+00> : vector<128x32xf32>
    %102 = tpu.matmul %100, %101, %cst_52 {dimension_numbers = #tpu.dot_dimension_numbers<[1], [0], [0], [1], [0, 0, 1, 1], [], []>} : vector<128x4xbf16>, vector<4x32xbf16>, vector<128x32xf32> -> vector<128x32xf32>
    %103 = arith.mulf %48, %102 : vector<128x32xf32>
    %104 = vector.shape_cast %103 : vector<128x32xf32> to vector<16x8x32xf32>
    %cst_53 = arith.constant dense<0.000000e+00> : vector<16x32xf32>
    %105 = vector.multi_reduction <add>, %104, %cst_53 [1] : vector<16x8x32xf32> to vector<16x32xf32>
    %106 = arith.addf %91, %105 : vector<16x32xf32>
    %c0_54 = arith.constant 0 : index
    %c0_55 = arith.constant 0 : index
    %c0_56 = arith.constant 0 : index
    %107 = vector.load %arg18[%c0_54, %c0_55, %c0_56] : memref<1x16x32xf32, #tpu.memory_space<vmem>>, vector<1x16x32xf32>
    %108 = vector.shape_cast %107 : vector<1x16x32xf32> to vector<16x32xf32>
    %109 = vector.shape_cast %106 : vector<16x32xf32> to vector<1x16x32xf32>
    tpu.vector_store %arg18[%c0_54, %c0_55, %c0_56], %109 {strides = array<i32>} : memref<1x16x32xf32, #tpu.memory_space<vmem>>, vector<1x16x32xf32>,
    return
  }
  func.func @transform_0(%arg0: i32, %arg1: i32) -> (i32, i32, i32) {
    %c0_i32 = arith.constant 0 : i32
    %c0_i32_0 = arith.constant 0 : i32
    return %arg0, %arg1, %c0_i32 : i32, i32, i32
  }
  func.func @transform_1(%arg0: i32, %arg1: i32) -> (i32, i32, i32) {
    %c0_i32 = arith.constant 0 : i32
    %c0_i32_0 = arith.constant 0 : i32
    %c0_i32_1 = arith.constant 0 : i32
    return %arg0, %c0_i32, %c0_i32_0 : i32, i32, i32
  }
  func.func @transform_2(%arg0: i32, %arg1: i32) -> (i32, i32, i32) {
    %c0_i32 = arith.constant 0 : i32
    %c0_i32_0 = arith.constant 0 : i32
    %c0_i32_1 = arith.constant 0 : i32
    return %arg0, %c0_i32, %c0_i32_0 : i32, i32, i32
  }
  func.func @transform_3(%arg0: i32, %arg1: i32) -> (i32, i32, i32) {
    %c0_i32 = arith.constant 0 : i32
    %c0_i32_0 = arith.constant 0 : i32
    return %arg0, %arg1, %c0_i32 : i32, i32, i32
  }
  func.func @transform_4(%arg0: i32, %arg1: i32) -> (i32, i32, i32) {
    %c0_i32 = arith.constant 0 : i32
    %c0_i32_0 = arith.constant 0 : i32
    %c0_i32_1 = arith.constant 0 : i32
    return %arg0, %c0_i32, %c0_i32_0 : i32, i32, i32
  }
  func.func @transform_5(%arg0: i32, %arg1: i32) -> (i32, i32) {
    %c0_i32 = arith.constant 0 : i32
    %c0_i32_0 = arith.constant 0 : i32
    %c0_i32_1 = arith.constant 0 : i32
    return %c0_i32, %c0_i32_0 : i32, i32
  }
  func.func @transform_6(%arg0: i32, %arg1: i32) -> (i32, i32) {
    %c0_i32 = arith.constant 0 : i32
    %c0_i32_0 = arith.constant 0 : i32
    %c0_i32_1 = arith.constant 0 : i32
    return %c0_i32, %c0_i32_0 : i32, i32
  }
  func.func @transform_7(%arg0: i32, %arg1: i32) -> (i32, i32, i32) {
    %c0_i32 = arith.constant 0 : i32
    %c0_i32_0 = arith.constant 0 : i32
    return %arg0, %arg1, %c0_i32 : i32, i32, i32
  }
  func.func @transform_8(%arg0: i32, %arg1: i32) -> (i32, i32, i32) {
    %c0_i32 = arith.constant 0 : i32
    %c0_i32_0 = arith.constant 0 : i32
    %c0_i32_1 = arith.constant 0 : i32
    return %arg0, %c0_i32, %c0_i32_0 : i32, i32, i32
  }
  func.func @transform_9(%arg0: i32, %arg1: i32) -> (i32, i32) {
    %c0_i32 = arith.constant 0 : i32
    %c0_i32_0 = arith.constant 0 : i32
    %c0_i32_1 = arith.constant 0 : i32
    return %c0_i32, %c0_i32_0 : i32, i32
  }
  func.func @transform_10(%arg0: i32, %arg1: i32) -> (i32, i32) {
    %c0_i32 = arith.constant 0 : i32
    %c0_i32_0 = arith.constant 0 : i32
    %c0_i32_1 = arith.constant 0 : i32
    return %c0_i32, %c0_i32_0 : i32, i32
  }
  func.func @transform_11(%arg0: i32, %arg1: i32) -> (i32, i32) {
    %c0_i32 = arith.constant 0 : i32
    %c0_i32_0 = arith.constant 0 : i32
    %c0_i32_1 = arith.constant 0 : i32
    return %c0_i32, %c0_i32_0 : i32, i32
  }
  func.func @transform_12(%arg0: i32, %arg1: i32) -> (i32, i32) {
    %c0_i32 = arith.constant 0 : i32
    %c0_i32_0 = arith.constant 0 : i32
    %c0_i32_1 = arith.constant 0 : i32
    return %c0_i32, %c0_i32_0 : i32, i32
  }
  func.func @transform_13(%arg0: i32, %arg1: i32) -> (i32, i32) {
    %c0_i32 = arith.constant 0 : i32
    %c0_i32_0 = arith.constant 0 : i32
    %c0_i32_1 = arith.constant 0 : i32
    return %c0_i32, %c0_i32_0 : i32, i32
  }
  func.func @transform_14(%arg0: i32, %arg1: i32) -> (i32, i32) {
    %c0_i32 = arith.constant 0 : i32
    %c0_i32_0 = arith.constant 0 : i32
    %c0_i32_1 = arith.constant 0 : i32
    return %c0_i32, %c0_i32_0 : i32, i32
  }
  func.func @transform_15(%arg0: i32, %arg1: i32) -> (i32, i32) {
    %c0_i32 = arith.constant 0 : i32
    %c0_i32_0 = arith.constant 0 : i32
    %c0_i32_1 = arith.constant 0 : i32
    return %c0_i32, %c0_i32_0 : i32, i32
  }
  func.func @transform_16(%arg0: i32, %arg1: i32) -> (i32, i32, i32) {
    %c0_i32 = arith.constant 0 : i32
    %c0_i32_0 = arith.constant 0 : i32
    return %arg0, %arg1, %c0_i32 : i32, i32, i32
  }
  func.func @transform_17(%arg0: i32, %arg1: i32) -> (i32, i32, i32) {
    %c0_i32 = arith.constant 0 : i32
    %c0_i32_0 = arith.constant 0 : i32
    return %arg0, %arg1, %c0_i32 : i32, i32, i32
  }
}

</mosaic_0001>

<llo_original>
// kernel: tpu_custom_call.1
$region0: #{tpu_custom_call.1}
  #allocation0 [shape = 'u32[]', space=smem, size = 0x4, offset = 0x4, fixed_abs, tag = 'smem constant byte address 0x4 - core index']
  #allocation1 [shape = 'u32[144,128]{1,0:T(1,128)}', space=vmem, size = 0x12000, scoped, tag = 'internal scratch']
  %s0 = inlined_call_operand.hbm [shape: f32[2,16,32], index: 0, kind: input, shape index: {}]
  %s1 = inlined_call_operand.hbm [shape: f32[2,8,32], index: 1, kind: input, shape index: {}]
  %s2 = inlined_call_operand.hbm [shape: f32[2,8,32], index: 2, kind: input, shape index: {}]
  %s3 = inlined_call_operand.hbm [shape: f32[2,16,32], index: 3, kind: input, shape index: {}]
  %s4 = inlined_call_operand.hbm [shape: f32[2,8,32], index: 4, kind: input, shape index: {}]
  %s5 = inlined_call_operand.hbm [shape: bf16[32,32], index: 5, kind: input, shape index: {}]
  %s6 = inlined_call_operand.hbm [shape: f32[1,32], index: 6, kind: input, shape index: {}]
  %s7 = inlined_call_operand.vmem [shape: f32[2,16,32], index: 7, kind: input, shape index: {}]
  %s8 = inlined_call_operand.vmem [shape: f32[2,8,32], index: 8, kind: input, shape index: {}]
  %s9 = inlined_call_operand.hbm [shape: bf16[32,32], index: 9, kind: input, shape index: {}]
  %s10 = inlined_call_operand.vmem [shape: f32[1,32], index: 10, kind: input, shape index: {}]
  %s11 = inlined_call_operand.vmem [shape: bf16[32,4], index: 11, kind: input, shape index: {}]
  %s12 = inlined_call_operand.vmem [shape: f32[1,4], index: 12, kind: input, shape index: {}]
  %s13 = inlined_call_operand.vmem [shape: bf16[4,4], index: 13, kind: input, shape index: {}]
  %s14 = inlined_call_operand.vmem [shape: f32[1,4], index: 14, kind: input, shape index: {}]
  %s15 = inlined_call_operand.vmem [shape: bf16[4,32], index: 15, kind: input, shape index: {}]
  %s16 = inlined_call_operand.hbm [shape: f32[2,16,32], index: 16, kind: output, shape index: {0}]
  %s17 = inlined_call_operand.hbm [shape: bf16[2,16,32], index: 17, kind: output, shape index: {1}]
  %18 = xla_tuple %s16, %s17
  %s19 = sld [smem:[#allocation0]]
  $region137: #{tpu_custom_call.1} parent=0
    _
  %s21 = ssub.s32 1, %s19
  %s22 = scalar_select 0, %s21, %s19
  $region1: #{tpu_custom_call.1} parent=0
    #allocation2 [shape = 'u8[16384]{0}', space=vmem, size = 0x4000, scoped, tag = 'input window, operand 0']
    #allocation3 [shape = 's32[2]{0}', space=sflag, size = 0x8, scoped, tag = 'scoped memory for tpu_custom_call.1']
    #allocation4 [shape = 's32[2]{0}', space=sflag, size = 0x8, scoped, tag = 'scoped memory for tpu_custom_call.1']
    #allocation5 [shape = 'u8[8192]{0}', space=vmem, size = 0x2000, scoped, tag = 'input window, operand 1']
    #allocation6 [shape = 's32[2]{0}', space=sflag, size = 0x8, scoped, tag = 'scoped memory for tpu_custom_call.1']
    #allocation7 [shape = 'u8[8192]{0}', space=vmem, size = 0x2000, scoped, tag = 'input window, operand 2']
    #allocation8 [shape = 'u8[16384]{0}', space=vmem, size = 0x4000, scoped, tag = 'input window, operand 3']
    #allocation9 [shape = 's32[2]{0}', space=sflag, size = 0x8, scoped, tag = 'scoped memory for tpu_custom_call.1']
    #allocation10 [shape = 'u8[8192]{0}', space=vmem, size = 0x2000, scoped, tag = 'input window, operand 4']
    #allocation11 [shape = 'u8[8192]{0}', space=vmem, size = 0x2000, scoped, tag = 'input window, operand 5, single buffered']
    #allocation12 [shape = 's32[1]{0}', space=sflag, size = 0x4, scoped, tag = 'scoped memory for tpu_custom_call.1']
    #allocation13 [shape = 'u8[512]{0}', space=vmem, size = 0x400, scoped, tag = 'input window, operand 6, single buffered']
    #allocation14 [shape = 'u8[8192]{0}', space=vmem, size = 0x2000, scoped, tag = 'input window, operand 9, single buffered']
    #allocation15 [shape = 's32[1]{0}', space=sflag, size = 0x4, scoped, tag = 'scoped memory for tpu_custom_call.1']
    #allocation16 [shape = 'u8[16384]{0}', space=vmem, size = 0x4000, scoped, tag = 'output window, operand 0']
    #allocation17 [shape = 'u8[8192]{0}', space=vmem, size = 0x2000, scoped, tag = 'output window, operand 1']
    #allocation18 [shape = 's32[2]{0}', space=sflag, size = 0x8, scoped, tag = 'scoped memory for tpu_custom_call.1']
    %23 = vsyncpa [#allocation3], 0
    %s24 = scalar_lea.sflag [#allocation3], 1
    %25 = vsyncpa %s24, 0
    %26 = vsyncpa [#allocation6], 0
    %s27 = scalar_lea.sflag [#allocation6], 1
    %28 = vsyncpa %s27, 0
    %29 = vsyncpa [#allocation9], 0
    %s30 = scalar_lea.sflag [#allocation9], 1
    %31 = vsyncpa %s30, 0
    %32 = vsyncpa [#allocation12], 0
    %33 = vsyncpa [#allocation15], 0
    %34 = vsyncpa [#allocation4], 0
    %s35 = scalar_lea.sflag [#allocation4], 1
    %36 = vsyncpa %s35, 0
    %37 = vsyncpa [#allocation18], 0
    %s38 = scalar_lea.sflag [#allocation18], 1
    %39 = vsyncpa %s38, 0
    loop: start=0, step=1, limit=4
    $region2: #{tpu_custom_call.1} parent=1 // loop_pre_header
      _
    $region3: #{tpu_custom_call.1} parent=1 // loop_header
      %s41 = sphi 0, %s45
      %p42 = scmp.ge.s32.totalorder %s41, 4
      %s48 = sphi 0, %s60
      %s49 = sphi 0, %s56
      %s50 = sphi 0, %s48
      %s51 = sphi 0, %s49
      %s52 = sphi 0, %s50
      %s53 = sphi 0, %s51
      %s65 = sphi 0, %s67
      %s68 = sphi 0, %s65
      %s69 = sphi 0, %s68
      %s85 = sphi 0, %s69
      %s91 = sphi 0, %s93
      %s94 = sphi 0, %s91
      %s95 = sphi 0, %s94
      %s111 = sphi 0, %s95
      %s117 = sphi 0, %s119
      %s120 = sphi 0, %s117
      %s121 = sphi 0, %s120
      %s137 = sphi 0, %s121
      %s145 = sphi 0, %s147
      %s148 = sphi 0, %s145
      %s149 = sphi 0, %s148
      %s165 = sphi 0, %s149
      %s171 = sphi 0, %s173
      %s174 = sphi 0, %s171
      %s175 = sphi 0, %s174
      %s191 = sphi 0, %s175
      %s195 = sphi 0, %s195
      %s197 = sphi 0, %s195
      %s198 = sphi 0, %s197
      %s212 = sphi 0, %s198
      %s216 = sphi 0, %s216
      %s218 = sphi 0, %s216
      %s219 = sphi 0, %s218
      %s233 = sphi 0, %s219
      %s241 = sphi 0, %s243
      %s244 = sphi 0, %s241
      %s245 = sphi 0, %s244
      %s261 = sphi 0, %s245
      %s267 = sphi 0, %s269
      %s270 = sphi 0, %s267
      %s271 = sphi 0, %s270
      %s287 = sphi 0, %s271
      %s291 = sphi 0, %s291
      %s293 = sphi 0, %s291
      %s294 = sphi 0, %s293
      %s308 = sphi 0, %s294
      %s312 = sphi 0, %s312
      %s314 = sphi 0, %s312
      %s315 = sphi 0, %s314
      %s329 = sphi 0, %s315
      %s333 = sphi 0, %s333
      %s335 = sphi 0, %s333
      %s336 = sphi 0, %s335
      %s350 = sphi 0, %s336
      %s354 = sphi 0, %s354
      %s356 = sphi 0, %s354
      %s357 = sphi 0, %s356
      %s371 = sphi 0, %s357
      %s375 = sphi 0, %s375
      %s377 = sphi 0, %s375
      %s378 = sphi 0, %s377
      %s392 = sphi 0, %s378
      %s396 = sphi 0, %s396
      %s398 = sphi 0, %s396
      %s399 = sphi 0, %s398
      %s413 = sphi 0, %s399
      %s417 = sphi 0, %s417
      %s419 = sphi 0, %s417
      %s420 = sphi 0, %s419
      %s434 = sphi 0, %s420
      %s442 = sphi 0, %s444
      %s445 = sphi 0, %s442
      %s446 = sphi 0, %s445
      %s462 = sphi 0, %s446
      %s470 = sphi 0, %s472
      %s473 = sphi 0, %s470
      %s474 = sphi 0, %s473
      %s490 = sphi 0, %s474
    $region4: #{tpu_custom_call.1} parent=1 // loop_header_branch
      %44 = sbr.rel (%p42) target = $region8
    $region5: #{tpu_custom_call.1} parent=1 // loop_body
      %s46 = ssub.s32 %s41, 1
      %s47 = ssub.s32 %s41, 2
      %s54 = sadd.s32 1, %s49
      %p55 = scmp.ge.s32.totalorder %s54, 1
      %s56 = scalar_select %p55, 0, %s54
      %s57 = sadd.s32 1, %s48
      %s58 = scalar_select %p55, %s57, %s48
      %p59 = scmp.ge.s32.totalorder %s58, 2
      %s60 = scalar_select %p59, 0, %s58
      %s61 = ssub.s32 %s48, %s60
      %s62 = ssub.s32 %s49, %s56
      %s63 = sor.u32 %s61, %s62
      %p64 = scmp.eq.s32.totalorder %s63, 0
      %s66 = sadd.s32 %s65, 1
      %s67 = scalar_select %p64, %s65, %s66
      %p70 = pneg %p64
      %p71 = scmp.eq.s32.totalorder %s41, 1
      %p72 = por %p70, %p71
      %p73 = scmp.ne.s32.totalorder %s65, %s68
      %p74 = scmp.eq.s32.totalorder %s41, 0
      %p75 = por %p73, %p74
      %p76 = scmp.ne.s32.totalorder %s65, %s68
      %p77 = scmp.eq.s32.totalorder %s46, 1
      %p78 = por %p76, %p77
      %p79 = scmp.ne.s32.totalorder %s68, %s69
      %p80 = scmp.eq.s32.totalorder %s46, 0
      %p81 = por %p79, %p80
      %p82 = scmp.ne.s32.totalorder %s68, %s69
      %p83 = scmp.eq.s32.totalorder %s47, 1
      %p84 = por %p82, %p83
      %p86 = scmp.ne.s32.totalorder %s69, %s85
      %p87 = scmp.eq.s32.totalorder %s47, 0
      %p88 = por %p86, %p87
      %s89 = ssub.s32 %s48, %s60
      %p90 = scmp.eq.s32.totalorder %s89, 0
      %s92 = sadd.s32 %s91, 1
      %s93 = scalar_select %p90, %s91, %s92
      %p96 = pneg %p90
      %p97 = scmp.eq.s32.totalorder %s41, 1
      %p98 = por %p96, %p97
      %p99 = scmp.ne.s32.totalorder %s91, %s94
      %p100 = scmp.eq.s32.totalorder %s41, 0
      %p101 = por %p99, %p100
      %p102 = scmp.ne.s32.totalorder %s91, %s94
      %p103 = scmp.eq.s32.totalorder %s46, 1
      %p104 = por %p102, %p103
      %p105 = scmp.ne.s32.totalorder %s94, %s95
      %p106 = scmp.eq.s32.totalorder %s46, 0
      %p107 = por %p105, %p106
      %p108 = scmp.ne.s32.totalorder %s94, %s95
      %p109 = scmp.eq.s32.totalorder %s47, 1
      %p110 = por %p108, %p109
      %p112 = scmp.ne.s32.totalorder %s95, %s111
      %p113 = scmp.eq.s32.totalorder %s47, 0
      %p114 = por %p112, %p113
      %s115 = ssub.s32 %s48, %s60
      %p116 = scmp.eq.s32.totalorder %s115, 0
      %s118 = sadd.s32 %s117, 1
      %s119 = scalar_select %p116, %s117, %s118
      %p122 = pneg %p116
      %p123 = scmp.eq.s32.totalorder %s41, 1
      %p124 = por %p122, %p123
      %p125 = scmp.ne.s32.totalorder %s117, %s120
      %p126 = scmp.eq.s32.totalorder %s41, 0
      %p127 = por %p125, %p126
      %p128 = scmp.ne.s32.totalorder %s117, %s120
      %p129 = scmp.eq.s32.totalorder %s46, 1
      %p130 = por %p128, %p129
      %p131 = scmp.ne.s32.totalorder %s120, %s121
      %p132 = scmp.eq.s32.totalorder %s46, 0
      %p133 = por %p131, %p132
      %p134 = scmp.ne.s32.totalorder %s120, %s121
      %p135 = scmp.eq.s32.totalorder %s47, 1
      %p136 = por %p134, %p135
      %p138 = scmp.ne.s32.totalorder %s121, %s137
      %p139 = scmp.eq.s32.totalorder %s47, 0
      %p140 = por %p138, %p139
      %s141 = ssub.s32 %s48, %s60
      %s142 = ssub.s32 %s49, %s56
      %s143 = sor.u32 %s141, %s142
      %p144 = scmp.eq.s32.totalorder %s143, 0
      %s146 = sadd.s32 %s145, 1
      %s147 = scalar_select %p144, %s145, %s146
      %p150 = pneg %p144
      %p151 = scmp.eq.s32.totalorder %s41, 1
      %p152 = por %p150, %p151
      %p153 = scmp.ne.s32.totalorder %s145, %s148
      %p154 = scmp.eq.s32.totalorder %s41, 0
      %p155 = por %p153, %p154
      %p156 = scmp.ne.s32.totalorder %s145, %s148
      %p157 = scmp.eq.s32.totalorder %s46, 1
      %p158 = por %p156, %p157
      %p159 = scmp.ne.s32.totalorder %s148, %s149
      %p160 = scmp.eq.s32.totalorder %s46, 0
      %p161 = por %p159, %p160
      %p162 = scmp.ne.s32.totalorder %s148, %s149
      %p163 = scmp.eq.s32.totalorder %s47, 1
      %p164 = por %p162, %p163
      %p166 = scmp.ne.s32.totalorder %s149, %s165
      %p167 = scmp.eq.s32.totalorder %s47, 0
      %p168 = por %p166, %p167
      %s169 = ssub.s32 %s48, %s60
      %p170 = scmp.eq.s32.totalorder %s169, 0
      %s172 = sadd.s32 %s171, 1
      %s173 = scalar_select %p170, %s171, %s172
      %p176 = pneg %p170
      %p177 = scmp.eq.s32.totalorder %s41, 1
      %p178 = por %p176, %p177
      %p179 = scmp.ne.s32.totalorder %s171, %s174
      %p180 = scmp.eq.s32.totalorder %s41, 0
      %p181 = por %p179, %p180
      %p182 = scmp.ne.s32.totalorder %s171, %s174
      %p183 = scmp.eq.s32.totalorder %s46, 1
      %p184 = por %p182, %p183
      %p185 = scmp.ne.s32.totalorder %s174, %s175
      %p186 = scmp.eq.s32.totalorder %s46, 0
      %p187 = por %p185, %p186
      %p188 = scmp.ne.s32.totalorder %s174, %s175
      %p189 = scmp.eq.s32.totalorder %s47, 1
      %p190 = por %p188, %p189
      %p192 = scmp.ne.s32.totalorder %s175, %s191
      %p193 = scmp.eq.s32.totalorder %s47, 0
      %p194 = por %p192, %p193
      %s196 = sadd.s32 %s195, 1
      %p199 = scmp.eq.s32.totalorder %s41, 1
      %p200 = scmp.ne.s32.totalorder %s195, %s197
      %p201 = scmp.eq.s32.totalorder %s41, 0
      %p202 = por %p200, %p201
      %p203 = scmp.ne.s32.totalorder %s195, %s197
      %p204 = scmp.eq.s32.totalorder %s46, 1
      %p205 = por %p203, %p204
      %p206 = scmp.ne.s32.totalorder %s197, %s198
      %p207 = scmp.eq.s32.totalorder %s46, 0
      %p208 = por %p206, %p207
      %p209 = scmp.ne.s32.totalorder %s197, %s198
      %p210 = scmp.eq.s32.totalorder %s47, 1
      %p211 = por %p209, %p210
      %p213 = scmp.ne.s32.totalorder %s198, %s212
      %p214 = scmp.eq.s32.totalorder %s47, 0
      %p215 = por %p213, %p214
      %s217 = sadd.s32 %s216, 1
      %p220 = scmp.eq.s32.totalorder %s41, 1
      %p221 = scmp.ne.s32.totalorder %s216, %s218
      %p222 = scmp.eq.s32.totalorder %s41, 0
      %p223 = por %p221, %p222
      %p224 = scmp.ne.s32.totalorder %s216, %s218
      %p225 = scmp.eq.s32.totalorder %s46, 1
      %p226 = por %p224, %p225
      %p227 = scmp.ne.s32.totalorder %s218, %s219
      %p228 = scmp.eq.s32.totalorder %s46, 0
      %p229 = por %p227, %p228
      %p230 = scmp.ne.s32.totalorder %s218, %s219
      %p231 = scmp.eq.s32.totalorder %s47, 1
      %p232 = por %p230, %p231
      %p234 = scmp.ne.s32.totalorder %s219, %s233
      %p235 = scmp.eq.s32.totalorder %s47, 0
      %p236 = por %p234, %p235
      %s237 = ssub.s32 %s48, %s60
      %s238 = ssub.s32 %s49, %s56
      %s239 = sor.u32 %s237, %s238
      %p240 = scmp.eq.s32.totalorder %s239, 0
      %s242 = sadd.s32 %s241, 1
      %s243 = scalar_select %p240, %s241, %s242
      %p246 = pneg %p240
      %p247 = scmp.eq.s32.totalorder %s41, 1
      %p248 = por %p246, %p247
      %p249 = scmp.ne.s32.totalorder %s241, %s244
      %p250 = scmp.eq.s32.totalorder %s41, 0
      %p251 = por %p249, %p250
      %p252 = scmp.ne.s32.totalorder %s241, %s244
      %p253 = scmp.eq.s32.totalorder %s46, 1
      %p254 = por %p252, %p253
      %p255 = scmp.ne.s32.totalorder %s244, %s245
      %p256 = scmp.eq.s32.totalorder %s46, 0
      %p257 = por %p255, %p256
      %p258 = scmp.ne.s32.totalorder %s244, %s245
      %p259 = scmp.eq.s32.totalorder %s47, 1
      %p260 = por %p258, %p259
      %p262 = scmp.ne.s32.totalorder %s245, %s261
      %p263 = scmp.eq.s32.totalorder %s47, 0
      %p264 = por %p262, %p263
      %s265 = ssub.s32 %s48, %s60
      %p266 = scmp.eq.s32.totalorder %s265, 0
      %s268 = sadd.s32 %s267, 1
      %s269 = scalar_select %p266, %s267, %s268
      %p272 = pneg %p266
      %p273 = scmp.eq.s32.totalorder %s41, 1
      %p274 = por %p272, %p273
      %p275 = scmp.ne.s32.totalorder %s267, %s270
      %p276 = scmp.eq.s32.totalorder %s41, 0
      %p277 = por %p275, %p276
      %p278 = scmp.ne.s32.totalorder %s267, %s270
      %p279 = scmp.eq.s32.totalorder %s46, 1
      %p280 = por %p278, %p279
      %p281 = scmp.ne.s32.totalorder %s270, %s271
      %p282 = scmp.eq.s32.totalorder %s46, 0
      %p283 = por %p281, %p282
      %p284 = scmp.ne.s32.totalorder %s270, %s271
      %p285 = scmp.eq.s32.totalorder %s47, 1
      %p286 = por %p284, %p285
      %p288 = scmp.ne.s32.totalorder %s271, %s287
      %p289 = scmp.eq.s32.totalorder %s47, 0
      %p290 = por %p288, %p289
      %s292 = sadd.s32 %s291, 1
      %p295 = scmp.eq.s32.totalorder %s41, 1
      %p296 = scmp.ne.s32.totalorder %s291, %s293
      %p297 = scmp.eq.s32.totalorder %s41, 0
      %p298 = por %p296, %p297
      %p299 = scmp.ne.s32.totalorder %s291, %s293
      %p300 = scmp.eq.s32.totalorder %s46, 1
      %p301 = por %p299, %p300
      %p302 = scmp.ne.s32.totalorder %s293, %s294
      %p303 = scmp.eq.s32.totalorder %s46, 0
      %p304 = por %p302, %p303
      %p305 = scmp.ne.s32.totalorder %s293, %s294
      %p306 = scmp.eq.s32.totalorder %s47, 1
      %p307 = por %p305, %p306
      %p309 = scmp.ne.s32.totalorder %s294, %s308
      %p310 = scmp.eq.s32.totalorder %s47, 0
      %p311 = por %p309, %p310
      %s313 = sadd.s32 %s312, 1
      %p316 = scmp.eq.s32.totalorder %s41, 1
      %p317 = scmp.ne.s32.totalorder %s312, %s314
      %p318 = scmp.eq.s32.totalorder %s41, 0
      %p319 = por %p317, %p318
      %p320 = scmp.ne.s32.totalorder %s312, %s314
      %p321 = scmp.eq.s32.totalorder %s46, 1
      %p322 = por %p320, %p321
      %p323 = scmp.ne.s32.totalorder %s314, %s315
      %p324 = scmp.eq.s32.totalorder %s46, 0
      %p325 = por %p323, %p324
      %p326 = scmp.ne.s32.totalorder %s314, %s315
      %p327 = scmp.eq.s32.totalorder %s47, 1
      %p328 = por %p326, %p327
      %p330 = scmp.ne.s32.totalorder %s315, %s329
      %p331 = scmp.eq.s32.totalorder %s47, 0
      %p332 = por %p330, %p331
      %s334 = sadd.s32 %s333, 1
      %p337 = scmp.eq.s32.totalorder %s41, 1
      %p338 = scmp.ne.s32.totalorder %s333, %s335
      %p339 = scmp.eq.s32.totalorder %s41, 0
      %p340 = por %p338, %p339
      %p341 = scmp.ne.s32.totalorder %s333, %s335
      %p342 = scmp.eq.s32.totalorder %s46, 1
      %p343 = por %p341, %p342
      %p344 = scmp.ne.s32.totalorder %s335, %s336
      %p345 = scmp.eq.s32.totalorder %s46, 0
      %p346 = por %p344, %p345
      %p347 = scmp.ne.s32.totalorder %s335, %s336
      %p348 = scmp.eq.s32.totalorder %s47, 1
      %p349 = por %p347, %p348
      %p351 = scmp.ne.s32.totalorder %s336, %s350
      %p352 = scmp.eq.s32.totalorder %s47, 0
      %p353 = por %p351, %p352
      %s355 = sadd.s32 %s354, 1
      %p358 = scmp.eq.s32.totalorder %s41, 1
      %p359 = scmp.ne.s32.totalorder %s354, %s356
      %p360 = scmp.eq.s32.totalorder %s41, 0
      %p361 = por %p359, %p360
      %p362 = scmp.ne.s32.totalorder %s354, %s356
      %p363 = scmp.eq.s32.totalorder %s46, 1
      %p364 = por %p362, %p363
      %p365 = scmp.ne.s32.totalorder %s356, %s357
      %p366 = scmp.eq.s32.totalorder %s46, 0
      %p367 = por %p365, %p366
      %p368 = scmp.ne.s32.totalorder %s356, %s357
      %p369 = scmp.eq.s32.totalorder %s47, 1
      %p370 = por %p368, %p369
      %p372 = scmp.ne.s32.totalorder %s357, %s371
      %p373 = scmp.eq.s32.totalorder %s47, 0
      %p374 = por %p372, %p373
      %s376 = sadd.s32 %s375, 1
      %p379 = scmp.eq.s32.totalorder %s41, 1
      %p380 = scmp.ne.s32.totalorder %s375, %s377
      %p381 = scmp.eq.s32.totalorder %s41, 0
      %p382 = por %p380, %p381
      %p383 = scmp.ne.s32.totalorder %s375, %s377
      %p384 = scmp.eq.s32.totalorder %s46, 1
      %p385 = por %p383, %p384
      %p386 = scmp.ne.s32.totalorder %s377, %s378
      %p387 = scmp.eq.s32.totalorder %s46, 0
      %p388 = por %p386, %p387
      %p389 = scmp.ne.s32.totalorder %s377, %s378
      %p390 = scmp.eq.s32.totalorder %s47, 1
      %p391 = por %p389, %p390
      %p393 = scmp.ne.s32.totalorder %s378, %s392
      %p394 = scmp.eq.s32.totalorder %s47, 0
      %p395 = por %p393, %p394
      %s397 = sadd.s32 %s396, 1
      %p400 = scmp.eq.s32.totalorder %s41, 1
      %p401 = scmp.ne.s32.totalorder %s396, %s398
      %p402 = scmp.eq.s32.totalorder %s41, 0
      %p403 = por %p401, %p402
      %p404 = scmp.ne.s32.totalorder %s396, %s398
      %p405 = scmp.eq.s32.totalorder %s46, 1
      %p406 = por %p404, %p405
      %p407 = scmp.ne.s32.totalorder %s398, %s399
      %p408 = scmp.eq.s32.totalorder %s46, 0
      %p409 = por %p407, %p408
      %p410 = scmp.ne.s32.totalorder %s398, %s399
      %p411 = scmp.eq.s32.totalorder %s47, 1
      %p412 = por %p410, %p411
      %p414 = scmp.ne.s32.totalorder %s399, %s413
      %p415 = scmp.eq.s32.totalorder %s47, 0
      %p416 = por %p414, %p415
      %s418 = sadd.s32 %s417, 1
      %p421 = scmp.eq.s32.totalorder %s41, 1
      %p422 = scmp.ne.s32.totalorder %s417, %s419
      %p423 = scmp.eq.s32.totalorder %s41, 0
      %p424 = por %p422, %p423
      %p425 = scmp.ne.s32.totalorder %s417, %s419
      %p426 = scmp.eq.s32.totalorder %s46, 1
      %p427 = por %p425, %p426
      %p428 = scmp.ne.s32.totalorder %s419, %s420
      %p429 = scmp.eq.s32.totalorder %s46, 0
      %p430 = por %p428, %p429
      %p431 = scmp.ne.s32.totalorder %s419, %s420
      %p432 = scmp.eq.s32.totalorder %s47, 1
      %p433 = por %p431, %p432
      %p435 = scmp.ne.s32.totalorder %s420, %s434
      %p436 = scmp.eq.s32.totalorder %s47, 0
      %p437 = por %p435, %p436
      %s438 = ssub.s32 %s48, %s60
      %s439 = ssub.s32 %s49, %s56
      %s440 = sor.u32 %s438, %s439
      %p441 = scmp.eq.s32.totalorder %s440, 0
      %s443 = sadd.s32 %s442, 1
      %s444 = scalar_select %p441, %s442, %s443
      %p447 = pneg %p441
      %p448 = scmp.eq.s32.totalorder %s41, 1
      %p449 = por %p447, %p448
      %p450 = scmp.ne.s32.totalorder %s442, %s445
      %p451 = scmp.eq.s32.totalorder %s41, 0
      %p452 = por %p450, %p451
      %p453 = scmp.ne.s32.totalorder %s442, %s445
      %p454 = scmp.eq.s32.totalorder %s46, 1
      %p455 = por %p453, %p454
      %p456 = scmp.ne.s32.totalorder %s445, %s446
      %p457 = scmp.eq.s32.totalorder %s46, 0
      %p458 = por %p456, %p457
      %p459 = scmp.ne.s32.totalorder %s445, %s446
      %p460 = scmp.eq.s32.totalorder %s47, 1
      %p461 = por %p459, %p460
      %p463 = scmp.ne.s32.totalorder %s446, %s462
      %p464 = scmp.eq.s32.totalorder %s47, 0
      %p465 = por %p463, %p464
      %s466 = ssub.s32 %s48, %s60
      %s467 = ssub.s32 %s49, %s56
      %s468 = sor.u32 %s466, %s467
      %p469 = scmp.eq.s32.totalorder %s468, 0
      %s471 = sadd.s32 %s470, 1
      %s472 = scalar_select %p469, %s470, %s471
      %p475 = pneg %p469
      %p476 = scmp.eq.s32.totalorder %s41, 1
      %p477 = por %p475, %p476
      %p478 = scmp.ne.s32.totalorder %s470, %s473
      %p479 = scmp.eq.s32.totalorder %s41, 0
      %p480 = por %p478, %p479
      %p481 = scmp.ne.s32.totalorder %s470, %s473
      %p482 = scmp.eq.s32.totalorder %s46, 1
      %p483 = por %p481, %p482
      %p484 = scmp.ne.s32.totalorder %s473, %s474
      %p485 = scmp.eq.s32.totalorder %s46, 0
      %p486 = por %p484, %p485
      %p487 = scmp.ne.s32.totalorder %s473, %s474
      %p488 = scmp.eq.s32.totalorder %s47, 1
      %p489 = por %p487, %p488
      %p491 = scmp.ne.s32.totalorder %s474, %s490
      %p492 = scmp.eq.s32.totalorder %s47, 0
      %p493 = por %p491, %p492
      %p494 = scmp.le.s32.totalorder 1, %s41
      %p495 = scmp.lt.s32.totalorder %s41, 3
      %p496 = pnand %p494, %p495
      %p497 = pneg %p496
      // Predicated region
      $region9: #{tpu_custom_call.1} parent=5 // pred_check
        _
      $region10: #{tpu_custom_call.1} parent=5 // pred_check_branch
        %499 = sbr.rel (%p496) target = $region12
      $region11: #{tpu_custom_call.1} parent=5 // pred_region
        %s500 = ssub.s32 %s41, 1
        // Predicated region
        $region13: #{tpu_custom_call.1} parent=11 // pred_check
          %p501 = pneg %p208
        $region14: #{tpu_custom_call.1} parent=11 // pred_check_branch
          %503 = sbr.rel (%p501) target = $region16
        $region15: #{tpu_custom_call.1} parent=11 // pred_region
          %s505 = ssub.s32 256, 256
          %506 = vsyncadd [#allocation12], %s505
          %s507 = sshll.u32 [#allocation11], 4
          %s508 = int_to_ptr.vmem [resolvable:$true] %s507
          %513 = dma.hbm_to_vmem [thread:$0]  %s5, 256, %s508, [#allocation12], 64, 64, 4
        $region16: #{tpu_custom_call.1} parent=11 // pred_fallthru
          _
        // Predicated region
        $region17: #{tpu_custom_call.1} parent=11 // pred_check
          %p514 = pneg %p229
        $region18: #{tpu_custom_call.1} parent=11 // pred_check_branch
          %516 = sbr.rel (%p514) target = $region20
        $region19: #{tpu_custom_call.1} parent=11 // pred_region
          %s518 = ssub.s32 16, 16
          %519 = vsyncadd [#allocation12], %s518
          %s521 = sshll.u32 [#allocation13], 4
          %s522 = int_to_ptr.vmem [resolvable:$true] %s521
          %524 = dma.hbm_to_vmem [thread:$0]  %s6, 16, %s522, [#allocation12]
        $region20: #{tpu_custom_call.1} parent=11 // pred_fallthru
          _
        // Predicated region
        $region21: #{tpu_custom_call.1} parent=11 // pred_check
          %p525 = pneg %p304
        $region22: #{tpu_custom_call.1} parent=11 // pred_check_branch
          %527 = sbr.rel (%p525) target = $region24
        $region23: #{tpu_custom_call.1} parent=11 // pred_region
          %s529 = ssub.s32 256, 256
          %530 = vsyncadd [#allocation15], %s529
          %s531 = sshll.u32 [#allocation14], 4
          %s532 = int_to_ptr.vmem [resolvable:$true] %s531
          %537 = dma.hbm_to_vmem [thread:$0]  %s9, 256, %s532, [#allocation15], 64, 64, 4
        $region24: #{tpu_custom_call.1} parent=11 // pred_fallthru
          _
        // Predicated region
        $region25: #{tpu_custom_call.1} parent=11 // pred_check
          %p538 = pneg %p325
        $region26: #{tpu_custom_call.1} parent=11 // pred_check_branch
          %540 = sbr.rel (%p538) target = $region28
        $region27: #{tpu_custom_call.1} parent=11 // pred_region
          _
        $region28: #{tpu_custom_call.1} parent=11 // pred_fallthru
          _
        // Predicated region
        $region29: #{tpu_custom_call.1} parent=11 // pred_check
          %p541 = pneg %p346
        $region30: #{tpu_custom_call.1} parent=11 // pred_check_branch
          %543 = sbr.rel (%p541) target = $region32
        $region31: #{tpu_custom_call.1} parent=11 // pred_region
          _
        $region32: #{tpu_custom_call.1} parent=11 // pred_fallthru
          _
        // Predicated region
        $region33: #{tpu_custom_call.1} parent=11 // pred_check
          %p544 = pneg %p367
        $region34: #{tpu_custom_call.1} parent=11 // pred_check_branch
          %546 = sbr.rel (%p544) target = $region36
        $region35: #{tpu_custom_call.1} parent=11 // pred_region
          _
        $region36: #{tpu_custom_call.1} parent=11 // pred_fallthru
          _
        // Predicated region
        $region37: #{tpu_custom_call.1} parent=11 // pred_check
          %p547 = pneg %p388
        $region38: #{tpu_custom_call.1} parent=11 // pred_check_branch
          %549 = sbr.rel (%p547) target = $region40
        $region39: #{tpu_custom_call.1} parent=11 // pred_region
          _
        $region40: #{tpu_custom_call.1} parent=11 // pred_fallthru
          _
        // Predicated region
        $region41: #{tpu_custom_call.1} parent=11 // pred_check
          %p550 = pneg %p409
        $region42: #{tpu_custom_call.1} parent=11 // pred_check_branch
          %552 = sbr.rel (%p550) target = $region44
        $region43: #{tpu_custom_call.1} parent=11 // pred_region
          _
        $region44: #{tpu_custom_call.1} parent=11 // pred_fallthru
          _
        // Predicated region
        $region45: #{tpu_custom_call.1} parent=11 // pred_check
          %p553 = pneg %p430
        $region46: #{tpu_custom_call.1} parent=11 // pred_check_branch
          %555 = sbr.rel (%p553) target = $region48
        $region47: #{tpu_custom_call.1} parent=11 // pred_region
          _
        $region48: #{tpu_custom_call.1} parent=11 // pred_fallthru
          _
      $region12: #{tpu_custom_call.1} parent=5 // pred_fallthru
        _
      %p556 = scmp.lt.s32.totalorder %s41, 2
      // Predicated region
      $region49: #{tpu_custom_call.1} parent=5 // pred_check
        %p557 = pneg %p556
      $region50: #{tpu_custom_call.1} parent=5 // pred_check_branch
        %559 = sbr.rel (%p557) target = $region52
      $region51: #{tpu_custom_call.1} parent=5 // pred_region
        // Predicated region
        $region53: #{tpu_custom_call.1} parent=51 // pred_check
          %p560 = pneg %p75
        $region54: #{tpu_custom_call.1} parent=51 // pred_check_branch
          %562 = sbr.rel (%p560) target = $region56
        $region55: #{tpu_custom_call.1} parent=51 // pred_region
          %s563 = sand.u32 %s65, 1
          %s564 = scalar_lea.sflag [#allocation3], %s563
          %s565 = sand.u32 %s65, 1
          %s566 = smul.addr %s565, 16
          %s567 = scalar_lea.vmem [#allocation2], %s566
          %s568 = smul.u32 2, %s49
          %s570 = ssub.s32 256, 256
          %571 = vsyncadd %s564, %s570
          %s572 = smul.addr %s48, 2
          %s573 = sadd.s32 %s568, %s572
          %s574 = smul.addr %s573, 128
          %s575 = scalar_lea.hbm %s0, %s574
          %s576 = sshll.u32 %s567, 4
          %s577 = int_to_ptr.vmem [resolvable:$true] %s576
          %582 = dma.hbm_to_vmem [thread:$0]  %s575, 256, %s577, %s564, 128, 128, 8
        $region56: #{tpu_custom_call.1} parent=51 // pred_fallthru
          _
        // Predicated region
        $region57: #{tpu_custom_call.1} parent=51 // pred_check
          %p583 = pneg %p101
        $region58: #{tpu_custom_call.1} parent=51 // pred_check_branch
          %585 = sbr.rel (%p583) target = $region60
        $region59: #{tpu_custom_call.1} parent=51 // pred_region
          %s586 = sand.u32 %s41, 1
          %s587 = scalar_lea.sflag [#allocation6], %s586
          %s588 = sand.u32 %s91, 1
          %s589 = smul.addr %s588, 8
          %s590 = scalar_lea.vmem [#allocation5], %s589
          %s592 = ssub.s32 128, 128
          %593 = vsyncadd %s587, %s592
          %s594 = smul.addr %s48, 128
          %s595 = scalar_lea.hbm %s1, %s594
          %s597 = sshll.u32 %s590, 4
          %s598 = int_to_ptr.vmem [resolvable:$true] %s597
          %600 = dma.hbm_to_vmem [thread:$0]  %s595, 128, %s598, %s587
        $region60: #{tpu_custom_call.1} parent=51 // pred_fallthru
          _
        // Predicated region
        $region61: #{tpu_custom_call.1} parent=51 // pred_check
          %p601 = pneg %p127
        $region62: #{tpu_custom_call.1} parent=51 // pred_check_branch
          %603 = sbr.rel (%p601) target = $region64
        $region63: #{tpu_custom_call.1} parent=51 // pred_region
          %s604 = sand.u32 %s41, 1
          %s605 = scalar_lea.sflag [#allocation6], %s604
          %s606 = sand.u32 %s117, 1
          %s607 = smul.addr %s606, 8
          %s608 = scalar_lea.vmem [#allocation7], %s607
          %s610 = ssub.s32 128, 128
          %611 = vsyncadd %s605, %s610
          %s612 = smul.addr %s48, 128
          %s613 = scalar_lea.hbm %s2, %s612
          %s615 = sshll.u32 %s608, 4
          %s616 = int_to_ptr.vmem [resolvable:$true] %s615
          %618 = dma.hbm_to_vmem [thread:$0]  %s613, 128, %s616, %s605
        $region64: #{tpu_custom_call.1} parent=51 // pred_fallthru
          _
        // Predicated region
        $region65: #{tpu_custom_call.1} parent=51 // pred_check
          %p619 = pneg %p155
        $region66: #{tpu_custom_call.1} parent=51 // pred_check_branch
          %621 = sbr.rel (%p619) target = $region68
        $region67: #{tpu_custom_call.1} parent=51 // pred_region
          %s622 = sand.u32 %s41, 1
          %s623 = scalar_lea.sflag [#allocation9], %s622
          %s624 = sand.u32 %s145, 1
          %s625 = smul.addr %s624, 16
          %s626 = scalar_lea.vmem [#allocation8], %s625
          %s627 = smul.u32 2, %s49
          %s629 = ssub.s32 256, 256
          %630 = vsyncadd %s623, %s629
          %s631 = smul.addr %s48, 2
          %s632 = sadd.s32 %s627, %s631
          %s633 = smul.addr %s632, 128
          %s634 = scalar_lea.hbm %s3, %s633
          %s635 = sshll.u32 %s626, 4
          %s636 = int_to_ptr.vmem [resolvable:$true] %s635
          %641 = dma.hbm_to_vmem [thread:$0]  %s634, 256, %s636, %s623, 128, 128, 8
        $region68: #{tpu_custom_call.1} parent=51 // pred_fallthru
          _
        // Predicated region
        $region69: #{tpu_custom_call.1} parent=51 // pred_check
          %p642 = pneg %p181
        $region70: #{tpu_custom_call.1} parent=51 // pred_check_branch
          %644 = sbr.rel (%p642) target = $region72
        $region71: #{tpu_custom_call.1} parent=51 // pred_region
          %s645 = sand.u32 %s41, 1
          %s646 = scalar_lea.sflag [#allocation9], %s645
          %s647 = sand.u32 %s171, 1
          %s648 = smul.addr %s647, 8
          %s649 = scalar_lea.vmem [#allocation10], %s648
          %s651 = ssub.s32 128, 128
          %652 = vsyncadd %s646, %s651
          %s653 = smul.addr %s48, 128
          %s654 = scalar_lea.hbm %s4, %s653
          %s656 = sshll.u32 %s649, 4
          %s657 = int_to_ptr.vmem [resolvable:$true] %s656
          %659 = dma.hbm_to_vmem [thread:$0]  %s654, 128, %s657, %s646
        $region72: #{tpu_custom_call.1} parent=51 // pred_fallthru
          _
        // Predicated region
        $region73: #{tpu_custom_call.1} parent=51 // pred_check
          %p660 = pneg %p251
        $region74: #{tpu_custom_call.1} parent=51 // pred_check_branch
          %662 = sbr.rel (%p660) target = $region76
        $region75: #{tpu_custom_call.1} parent=51 // pred_region
          %s663 = smul.u32 2, %s49
          %p664 = scmp.lt.s32.totalorder %s48, 1
          %s665 = scalar_select %p664, %s48, 1
          %p666 = scmp.lt.s32.totalorder %s663, 1
          %s667 = scalar_select %p666, %s663, 1
          %s668 = smul.addr %s665, 2
          %s669 = sadd.s32 %s667, %s668
          %s670 = smul.addr %s669, 8
          %s671 = scalar_lea.vmem %s7, %s670
          %s672 = smul.u32 2, %s49
        $region76: #{tpu_custom_call.1} parent=51 // pred_fallthru
          _
        // Predicated region
        $region77: #{tpu_custom_call.1} parent=51 // pred_check
          %p673 = pneg %p277
        $region78: #{tpu_custom_call.1} parent=51 // pred_check_branch
          %675 = sbr.rel (%p673) target = $region80
        $region79: #{tpu_custom_call.1} parent=51 // pred_region
          %p676 = scmp.lt.s32.totalorder %s48, 1
          %s677 = scalar_select %p676, %s48, 1
          %s678 = smul.addr %s677, 8
          %s679 = scalar_lea.vmem %s8, %s678
        $region80: #{tpu_custom_call.1} parent=51 // pred_fallthru
          _
      $region52: #{tpu_custom_call.1} parent=5 // pred_fallthru
        _
      %p680 = scmp.le.s32.totalorder 1, %s41
      %p681 = scmp.lt.s32.totalorder %s41, 3
      %p682 = pnand %p680, %p681
      %p683 = pneg %p682
      // Predicated region
      $region81: #{tpu_custom_call.1} parent=5 // pred_check
        _
      $region82: #{tpu_custom_call.1} parent=5 // pred_check_branch
        %685 = sbr.rel (%p682) target = $region84
      $region83: #{tpu_custom_call.1} parent=5 // pred_region
        %s686 = ssub.s32 %s41, 1
        %s687 = sand.u32 %s68, 1
        %s688 = scalar_lea.sflag [#allocation3], %s687
        %s689 = sand.u32 %s68, 1
        %s690 = smul.addr %s689, 16
        %s691 = scalar_lea.vmem [#allocation2], %s690
        // Predicated region
        $region85: #{tpu_custom_call.1} parent=83 // pred_check
          %p692 = pneg %p81
        $region86: #{tpu_custom_call.1} parent=83 // pred_check_branch
          %694 = sbr.rel (%p692) target = $region88
        $region87: #{tpu_custom_call.1} parent=83 // pred_region
          %695 = dma.done %s688, 256
        $region88: #{tpu_custom_call.1} parent=83 // pred_fallthru
          _
        %s696 = sand.u32 %s46, 1
        %s697 = scalar_lea.sflag [#allocation6], %s696
        %s698 = sand.u32 %s94, 1
        %s699 = smul.addr %s698, 8
        %s700 = scalar_lea.vmem [#allocation5], %s699
        // Predicated region
        $region89: #{tpu_custom_call.1} parent=83 // pred_check
          %p701 = pneg %p107
        $region90: #{tpu_custom_call.1} parent=83 // pred_check_branch
          %703 = sbr.rel (%p701) target = $region92
        $region91: #{tpu_custom_call.1} parent=83 // pred_region
          %704 = dma.done %s697, 128
        $region92: #{tpu_custom_call.1} parent=83 // pred_fallthru
          _
        %s705 = sand.u32 %s46, 1
        %s706 = scalar_lea.sflag [#allocation6], %s705
        %s707 = sand.u32 %s120, 1
        %s708 = smul.addr %s707, 8
        %s709 = scalar_lea.vmem [#allocation7], %s708
        // Predicated region
        $region93: #{tpu_custom_call.1} parent=83 // pred_check
          %p710 = pneg %p133
        $region94: #{tpu_custom_call.1} parent=83 // pred_check_branch
          %712 = sbr.rel (%p710) target = $region96
        $region95: #{tpu_custom_call.1} parent=83 // pred_region
          %713 = dma.done %s706, 128
        $region96: #{tpu_custom_call.1} parent=83 // pred_fallthru
          _
        %s714 = sand.u32 %s46, 1
        %s715 = scalar_lea.sflag [#allocation9], %s714
        %s716 = sand.u32 %s148, 1
        %s717 = smul.addr %s716, 16
        %s718 = scalar_lea.vmem [#allocation8], %s717
        // Predicated region
        $region97: #{tpu_custom_call.1} parent=83 // pred_check
          %p719 = pneg %p161
        $region98: #{tpu_custom_call.1} parent=83 // pred_check_branch
          %721 = sbr.rel (%p719) target = $region100
        $region99: #{tpu_custom_call.1} parent=83 // pred_region
          %722 = dma.done %s715, 256
        $region100: #{tpu_custom_call.1} parent=83 // pred_fallthru
          _
        %s723 = sand.u32 %s46, 1
        %s724 = scalar_lea.sflag [#allocation9], %s723
        %s725 = sand.u32 %s174, 1
        %s726 = smul.addr %s725, 8
        %s727 = scalar_lea.vmem [#allocation10], %s726
        // Predicated region
        $region101: #{tpu_custom_call.1} parent=83 // pred_check
          %p728 = pneg %p187
        $region102: #{tpu_custom_call.1} parent=83 // pred_check_branch
          %730 = sbr.rel (%p728) target = $region104
        $region103: #{tpu_custom_call.1} parent=83 // pred_region
          %731 = dma.done %s724, 128
        $region104: #{tpu_custom_call.1} parent=83 // pred_fallthru
          _
        // Predicated region
        $region105: #{tpu_custom_call.1} parent=83 // pred_check
          %p732 = pneg %p208
        $region106: #{tpu_custom_call.1} parent=83 // pred_check_branch
          %734 = sbr.rel (%p732) target = $region108
        $region107: #{tpu_custom_call.1} parent=83 // pred_region
          %735 = dma.done [#allocation12], 256
        $region108: #{tpu_custom_call.1} parent=83 // pred_fallthru
          _
        // Predicated region
        $region109: #{tpu_custom_call.1} parent=83 // pred_check
          %p736 = pneg %p229
        $region110: #{tpu_custom_call.1} parent=83 // pred_check_branch
          %738 = sbr.rel (%p736) target = $region112
        $region111: #{tpu_custom_call.1} parent=83 // pred_region
          %739 = dma.done [#allocation12], 16
        $region112: #{tpu_custom_call.1} parent=83 // pred_fallthru
          _
        // Predicated region
        $region113: #{tpu_custom_call.1} parent=83 // pred_check
          %p740 = pneg %p304
        $region114: #{tpu_custom_call.1} parent=83 // pred_check_branch
          %742 = sbr.rel (%p740) target = $region116
        $region115: #{tpu_custom_call.1} parent=83 // pred_region
          %743 = dma.done [#allocation15], 256
        $region116: #{tpu_custom_call.1} parent=83 // pred_fallthru
          _
        %s744 = sand.u32 %s68, 1
        %s745 = scalar_lea.sflag [#allocation3], %s744
        %s746 = sand.u32 %s68, 1
        %s747 = smul.addr %s746, 16
        %s748 = scalar_lea.vmem [#allocation2], %s747
        %p749 = pneg %p81
        %p750 = pneg %p78
        %s751 = sand.u32 %s46, 1
        %s752 = scalar_lea.sflag [#allocation6], %s751
        %s753 = sand.u32 %s94, 1
        %s754 = smul.addr %s753, 8
        %s755 = scalar_lea.vmem [#allocation5], %s754
        %p756 = pneg %p107
        %p757 = pneg %p104
        %s758 = sand.u32 %s46, 1
        %s759 = scalar_lea.sflag [#allocation6], %s758
        %s760 = sand.u32 %s120, 1
        %s761 = smul.addr %s760, 8
        %s762 = scalar_lea.vmem [#allocation7], %s761
        %p763 = pneg %p133
        %p764 = pneg %p130
        %s765 = sand.u32 %s46, 1
        %s766 = scalar_lea.sflag [#allocation9], %s765
        %s767 = sand.u32 %s148, 1
        %s768 = smul.addr %s767, 16
        %s769 = scalar_lea.vmem [#allocation8], %s768
        %p770 = pneg %p161
        %p771 = pneg %p158
        %s772 = sand.u32 %s46, 1
        %s773 = scalar_lea.sflag [#allocation9], %s772
        %s774 = sand.u32 %s174, 1
        %s775 = smul.addr %s774, 8
        %s776 = scalar_lea.vmem [#allocation10], %s775
        %p777 = pneg %p187
        %p778 = pneg %p184
        %p779 = pneg %p208
        %p780 = pneg %p205
        %p781 = pneg %p229
        %p782 = pneg %p226
        %s783 = smul.u32 2, %s51
        %p784 = scmp.lt.s32.totalorder %s50, 1
        %s785 = scalar_select %p784, %s50, 1
        %p786 = scmp.lt.s32.totalorder %s783, 1
        %s787 = scalar_select %p786, %s783, 1
        %s788 = smul.addr %s785, 2
        %s789 = sadd.s32 %s787, %s788
        %s790 = smul.addr %s789, 8
        %s791 = scalar_lea.vmem %s7, %s790
        %p792 = pneg %p257
        %p793 = pneg %p254
        %p794 = scmp.lt.s32.totalorder %s50, 1
        %s795 = scalar_select %p794, %s50, 1
        %s796 = smul.addr %s795, 8
        %s797 = scalar_lea.vmem %s8, %s796
        %p798 = pneg %p283
        %p799 = pneg %p280
        %p800 = pneg %p304
        %p801 = pneg %p301
        %p802 = pneg %p325
        %p803 = pneg %p322
        %p804 = pneg %p346
        %p805 = pneg %p343
        %p806 = pneg %p367
        %p807 = pneg %p364
        %p808 = pneg %p388
        %p809 = pneg %p385
        %p810 = pneg %p409
        %p811 = pneg %p406
        %p812 = pneg %p430
        %p813 = pneg %p427
        %p814 = pneg %p458
        %p815 = pneg %p455
        %s816 = sand.u32 %s445, 1
        %s817 = scalar_lea.sflag [#allocation4], %s816
        %s818 = sand.u32 %s445, 1
        %s819 = smul.addr %s818, 16
        %s820 = scalar_lea.vmem [#allocation16], %s819
        %p821 = pneg %p486
        %p822 = pneg %p483
        %s823 = sand.u32 %s473, 1
        %s824 = scalar_lea.sflag [#allocation18], %s823
        %s825 = sand.u32 %s473, 1
        %s826 = smul.addr %s825, 8
        %s827 = scalar_lea.vmem [#allocation17], %s826
        %s828 = smul.u32 2, %s51
        %s829 = smul.u32 2, %s51
        %s830 = smul.u32 2, %s51
        %p831 = scmp.lt.s32.totalorder %s50, 1
        %s832 = scalar_select %p831, %s50, 1
        %p833 = scmp.lt.s32.totalorder %s830, 1
        %s834 = scalar_select %p833, %s830, 1
        %s835 = smul.addr %s832, 2
        %s836 = sadd.s32 %s834, %s835
        %s837 = smul.addr %s836, 8
        %s838 = scalar_lea.vmem %s7, %s837
        %s839 = smul.u32 2, %s51
        %p840 = scmp.lt.s32.totalorder %s50, 1
        %s841 = scalar_select %p840, %s50, 1
        %s842 = smul.addr %s841, 8
        %s843 = scalar_lea.vmem %s8, %s842
        %s844 = smul.u32 2, %s51
        %s845 = smul.u32 2, %s51
        %v847 = vld [vmem:[%s691] sm:$0xff]
        %v848 = vld [vmem:[%s691 + $0x8] sm:$0xff]
        %v849 = vld [vmem:[%s700] sm:$0xff]
        %v850 = vld [vmem:[%s709] sm:$0xff]
        %v853 = vcombine.high %v847, %v847
        %v855 = vunpack.c.l.s4 1966171168
        %v856 = vunpack.c.0.s8 %v855
        %v857 = vlaneseq
        %v858 = vshrl.u32 %v857, 7
        %v859 = vsub.s32 %v856, %v858
        %v860 = vrot.slane %v847, %v859
        %v862 = vunpack.c.l.s4 1966171168
        %v863 = vunpack.c.0.s8 %v862
        %v864 = vlaneseq
        %v865 = vshrl.u32 %v864, 7
        %v866 = vsub.s32 %v863, %v865
        %v867 = vrot.slane %v853, %v866
        %v868 = vcombine.high %v860, %v860
        %v869 = vcombine.high %v867, %v867
        %v871 = vunpack.c.l.s4 1966171168
        %v872 = vunpack.c.0.s8 %v871
        %v873 = vlaneseq
        %v874 = vshrl.u32 %v873, 7
        %v875 = vsub.s32 %v872, %v874
        %v876 = vrot.slane %v860, %v875
        %v878 = vunpack.c.l.s4 1966171168
        %v879 = vunpack.c.0.s8 %v878
        %v880 = vlaneseq
        %v881 = vshrl.u32 %v880, 7
        %v882 = vsub.s32 %v879, %v881
        %v883 = vrot.slane %v867, %v882
        %v885 = vunpack.c.l.s4 1966171168
        %v886 = vunpack.c.0.s8 %v885
        %v887 = vlaneseq
        %v888 = vshrl.u32 %v887, 7
        %v889 = vsub.s32 %v886, %v888
        %v890 = vrot.slane %v868, %v889
        %v892 = vunpack.c.l.s4 1966171168
        %v893 = vunpack.c.0.s8 %v892
        %v894 = vlaneseq
        %v895 = vshrl.u32 %v894, 7
        %v896 = vsub.s32 %v893, %v895
        %v897 = vrot.slane %v869, %v896
        %v898 = vcombine.high %v876, %v876
        %v899 = vcombine.high %v883, %v883
        %v900 = vcombine.high %v890, %v890
        %v901 = vcombine.high %v897, %v897
        %v902 = vcombine.high %v848, %v848
        %v904 = vunpack.c.l.s4 1966171168
        %v905 = vunpack.c.0.s8 %v904
        %v906 = vlaneseq
        %v907 = vshrl.u32 %v906, 7
        %v908 = vsub.s32 %v905, %v907
        %v909 = vrot.slane %v848, %v908
        %v911 = vunpack.c.l.s4 1966171168
        %v912 = vunpack.c.0.s8 %v911
        %v913 = vlaneseq
        %v914 = vshrl.u32 %v913, 7
        %v915 = vsub.s32 %v912, %v914
        %v916 = vrot.slane %v902, %v915
        %v917 = vcombine.high %v909, %v909
        %v918 = vcombine.high %v916, %v916
        %v920 = vunpack.c.l.s4 1966171168
        %v921 = vunpack.c.0.s8 %v920
        %v922 = vlaneseq
        %v923 = vshrl.u32 %v922, 7
        %v924 = vsub.s32 %v921, %v923
        %v925 = vrot.slane %v909, %v924
        %v927 = vunpack.c.l.s4 1966171168
        %v928 = vunpack.c.0.s8 %v927
        %v929 = vlaneseq
        %v930 = vshrl.u32 %v929, 7
        %v931 = vsub.s32 %v928, %v930
        %v932 = vrot.slane %v916, %v931
        %v934 = vunpack.c.l.s4 1966171168
        %v935 = vunpack.c.0.s8 %v934
        %v936 = vlaneseq
        %v937 = vshrl.u32 %v936, 7
        %v938 = vsub.s32 %v935, %v937
        %v939 = vrot.slane %v917, %v938
        %v941 = vunpack.c.l.s4 1966171168
        %v942 = vunpack.c.0.s8 %v941
        %v943 = vlaneseq
        %v944 = vshrl.u32 %v943, 7
        %v945 = vsub.s32 %v942, %v944
        %v946 = vrot.slane %v918, %v945
        %v947 = vcombine.high %v925, %v925
        %v948 = vcombine.high %v932, %v932
        %v949 = vcombine.high %v939, %v939
        %v950 = vcombine.high %v946, %v946
        %v951 = vlaneseq
        %v952 = vshrl.u32 %v951, 7
        %v953 = vsub.s32 0, %v952
        %v954 = vrot.slane %v876, %v953
        %v955 = vlaneseq
        %v956 = vshrl.u32 %v955, 7
        %v957 = vsub.s32 0, %v956
        %v958 = vrot.slane %v890, %v957
        %v959 = vlaneseq
        %v960 = vshrl.u32 %v959, 7
        %v961 = vsub.s32 0, %v960
        %v962 = vrot.slane %v898, %v961
        %v963 = vlaneseq
        %v964 = vshrl.u32 %v963, 7
        %v965 = vsub.s32 0, %v964
        %v966 = vrot.slane %v900, %v965
        %v967 = vlaneseq
        %v968 = vshrl.u32 %v967, 7
        %v969 = vsub.s32 0, %v968
        %v970 = vrot.slane %v883, %v969
        %v971 = vlaneseq
        %v972 = vshrl.u32 %v971, 7
        %v973 = vsub.s32 0, %v972
        %v974 = vrot.slane %v897, %v973
        %v975 = vlaneseq
        %v976 = vshrl.u32 %v975, 7
        %v977 = vsub.s32 0, %v976
        %v978 = vrot.slane %v899, %v977
        %v979 = vlaneseq
        %v980 = vshrl.u32 %v979, 7
        %v981 = vsub.s32 0, %v980
        %v982 = vrot.slane %v901, %v981
        %v983 = vlaneseq
        %v984 = vshrl.u32 %v983, 7
        %v985 = vsub.s32 0, %v984
        %v986 = vrot.slane %v925, %v985
        %v987 = vlaneseq
        %v988 = vshrl.u32 %v987, 7
        %v989 = vsub.s32 0, %v988
        %v990 = vrot.slane %v939, %v989
        %v991 = vlaneseq
        %v992 = vshrl.u32 %v991, 7
        %v993 = vsub.s32 0, %v992
        %v994 = vrot.slane %v947, %v993
        %v995 = vlaneseq
        %v996 = vshrl.u32 %v995, 7
        %v997 = vsub.s32 0, %v996
        %v998 = vrot.slane %v949, %v997
        %v999 = vlaneseq
        %v1000 = vshrl.u32 %v999, 7
        %v1001 = vsub.s32 0, %v1000
        %v1002 = vrot.slane %v932, %v1001
        %v1003 = vlaneseq
        %v1004 = vshrl.u32 %v1003, 7
        %v1005 = vsub.s32 0, %v1004
        %v1006 = vrot.slane %v946, %v1005
        %v1007 = vlaneseq
        %v1008 = vshrl.u32 %v1007, 7
        %v1009 = vsub.s32 0, %v1008
        %v1010 = vrot.slane %v948, %v1009
        %v1011 = vlaneseq
        %v1012 = vshrl.u32 %v1011, 7
        %v1013 = vsub.s32 0, %v1012
        %v1014 = vrot.slane %v950, %v1013
        %v1031 = vsub.f32 %v849, %v954
        %v1032 = vsub.f32 %v849, %v958
        %v1033 = vsub.f32 %v849, %v962
        %v1034 = vsub.f32 %v849, %v966
        %v1035 = vsub.f32 %v849, %v970
        %v1036 = vsub.f32 %v849, %v974
        %v1037 = vsub.f32 %v849, %v978
        %v1038 = vsub.f32 %v849, %v982
        %v1039 = vsub.f32 %v849, %v986
        %v1040 = vsub.f32 %v849, %v990
        %v1041 = vsub.f32 %v849, %v994
        %v1042 = vsub.f32 %v849, %v998
        %v1043 = vsub.f32 %v849, %v1002
        %v1044 = vsub.f32 %v849, %v1006
        %v1045 = vsub.f32 %v849, %v1010
        %v1046 = vsub.f32 %v849, %v1014
        %v1047 = vld [vmem:[%s718] sm:$0xff]
        %v1048 = vld [vmem:[%s718 + $0x8] sm:$0xff]
        %v1051 = vcombine.high %v1047, %v1047
        %v1053 = vunpack.c.l.s4 1966171168
        %v1054 = vunpack.c.0.s8 %v1053
        %v1055 = vlaneseq
        %v1056 = vshrl.u32 %v1055, 7
        %v1057 = vsub.s32 %v1054, %v1056
        %v1058 = vrot.slane %v1047, %v1057
        %v1060 = vunpack.c.l.s4 1966171168
        %v1061 = vunpack.c.0.s8 %v1060
        %v1062 = vlaneseq
        %v1063 = vshrl.u32 %v1062, 7
        %v1064 = vsub.s32 %v1061, %v1063
        %v1065 = vrot.slane %v1051, %v1064
        %v1066 = vcombine.high %v1058, %v1058
        %v1067 = vcombine.high %v1065, %v1065
        %v1069 = vunpack.c.l.s4 1966171168
        %v1070 = vunpack.c.0.s8 %v1069
        %v1071 = vlaneseq
        %v1072 = vshrl.u32 %v1071, 7
        %v1073 = vsub.s32 %v1070, %v1072
        %v1074 = vrot.slane %v1058, %v1073
        %v1076 = vunpack.c.l.s4 1966171168
        %v1077 = vunpack.c.0.s8 %v1076
        %v1078 = vlaneseq
        %v1079 = vshrl.u32 %v1078, 7
        %v1080 = vsub.s32 %v1077, %v1079
        %v1081 = vrot.slane %v1065, %v1080
        %v1083 = vunpack.c.l.s4 1966171168
        %v1084 = vunpack.c.0.s8 %v1083
        %v1085 = vlaneseq
        %v1086 = vshrl.u32 %v1085, 7
        %v1087 = vsub.s32 %v1084, %v1086
        %v1088 = vrot.slane %v1066, %v1087
        %v1090 = vunpack.c.l.s4 1966171168
        %v1091 = vunpack.c.0.s8 %v1090
        %v1092 = vlaneseq
        %v1093 = vshrl.u32 %v1092, 7
        %v1094 = vsub.s32 %v1091, %v1093
        %v1095 = vrot.slane %v1067, %v1094
        %v1096 = vcombine.high %v1074, %v1074
        %v1097 = vcombine.high %v1081, %v1081
        %v1098 = vcombine.high %v1088, %v1088
        %v1099 = vcombine.high %v1095, %v1095
        %v1100 = vcombine.high %v1048, %v1048
        %v1102 = vunpack.c.l.s4 1966171168
        %v1103 = vunpack.c.0.s8 %v1102
        %v1104 = vlaneseq
        %v1105 = vshrl.u32 %v1104, 7
        %v1106 = vsub.s32 %v1103, %v1105
        %v1107 = vrot.slane %v1048, %v1106
        %v1109 = vunpack.c.l.s4 1966171168
        %v1110 = vunpack.c.0.s8 %v1109
        %v1111 = vlaneseq
        %v1112 = vshrl.u32 %v1111, 7
        %v1113 = vsub.s32 %v1110, %v1112
        %v1114 = vrot.slane %v1100, %v1113
        %v1115 = vcombine.high %v1107, %v1107
        %v1116 = vcombine.high %v1114, %v1114
        %v1118 = vunpack.c.l.s4 1966171168
        %v1119 = vunpack.c.0.s8 %v1118
        %v1120 = vlaneseq
        %v1121 = vshrl.u32 %v1120, 7
        %v1122 = vsub.s32 %v1119, %v1121
        %v1123 = vrot.slane %v1107, %v1122
        %v1125 = vunpack.c.l.s4 1966171168
        %v1126 = vunpack.c.0.s8 %v1125
        %v1127 = vlaneseq
        %v1128 = vshrl.u32 %v1127, 7
        %v1129 = vsub.s32 %v1126, %v1128
        %v1130 = vrot.slane %v1114, %v1129
        %v1132 = vunpack.c.l.s4 1966171168
        %v1133 = vunpack.c.0.s8 %v1132
        %v1134 = vlaneseq
        %v1135 = vshrl.u32 %v1134, 7
        %v1136 = vsub.s32 %v1133, %v1135
        %v1137 = vrot.slane %v1115, %v1136
        %v1139 = vunpack.c.l.s4 1966171168
        %v1140 = vunpack.c.0.s8 %v1139
        %v1141 = vlaneseq
        %v1142 = vshrl.u32 %v1141, 7
        %v1143 = vsub.s32 %v1140, %v1142
        %v1144 = vrot.slane %v1116, %v1143
        %v1145 = vcombine.high %v1123, %v1123
        %v1146 = vcombine.high %v1130, %v1130
        %v1147 = vcombine.high %v1137, %v1137
        %v1148 = vcombine.high %v1144, %v1144
        %v1149 = vld [vmem:[%s727] sm:$0xff]
        %v1150 = vlaneseq
        %v1151 = vshrl.u32 %v1150, 7
        %v1152 = vsub.s32 0, %v1151
        %v1153 = vrot.slane %v1074, %v1152
        %v1154 = vlaneseq
        %v1155 = vshrl.u32 %v1154, 7
        %v1156 = vsub.s32 0, %v1155
        %v1157 = vrot.slane %v1088, %v1156
        %v1158 = vlaneseq
        %v1159 = vshrl.u32 %v1158, 7
        %v1160 = vsub.s32 0, %v1159
        %v1161 = vrot.slane %v1096, %v1160
        %v1162 = vlaneseq
        %v1163 = vshrl.u32 %v1162, 7
        %v1164 = vsub.s32 0, %v1163
        %v1165 = vrot.slane %v1098, %v1164
        %v1166 = vlaneseq
        %v1167 = vshrl.u32 %v1166, 7
        %v1168 = vsub.s32 0, %v1167
        %v1169 = vrot.slane %v1081, %v1168
        %v1170 = vlaneseq
        %v1171 = vshrl.u32 %v1170, 7
        %v1172 = vsub.s32 0, %v1171
        %v1173 = vrot.slane %v1095, %v1172
        %v1174 = vlaneseq
        %v1175 = vshrl.u32 %v1174, 7
        %v1176 = vsub.s32 0, %v1175
        %v1177 = vrot.slane %v1097, %v1176
        %v1178 = vlaneseq
        %v1179 = vshrl.u32 %v1178, 7
        %v1180 = vsub.s32 0, %v1179
        %v1181 = vrot.slane %v1099, %v1180
        %v1182 = vlaneseq
        %v1183 = vshrl.u32 %v1182, 7
        %v1184 = vsub.s32 0, %v1183
        %v1185 = vrot.slane %v1123, %v1184
        %v1186 = vlaneseq
        %v1187 = vshrl.u32 %v1186, 7
        %v1188 = vsub.s32 0, %v1187
        %v1189 = vrot.slane %v1137, %v1188
        %v1190 = vlaneseq
        %v1191 = vshrl.u32 %v1190, 7
        %v1192 = vsub.s32 0, %v1191
        %v1193 = vrot.slane %v1145, %v1192
        %v1194 = vlaneseq
        %v1195 = vshrl.u32 %v1194, 7
        %v1196 = vsub.s32 0, %v1195
        %v1197 = vrot.slane %v1147, %v1196
        %v1198 = vlaneseq
        %v1199 = vshrl.u32 %v1198, 7
        %v1200 = vsub.s32 0, %v1199
        %v1201 = vrot.slane %v1130, %v1200
        %v1202 = vlaneseq
        %v1203 = vshrl.u32 %v1202, 7
        %v1204 = vsub.s32 0, %v1203
        %v1205 = vrot.slane %v1144, %v1204
        %v1206 = vlaneseq
        %v1207 = vshrl.u32 %v1206, 7
        %v1208 = vsub.s32 0, %v1207
        %v1209 = vrot.slane %v1146, %v1208
        %v1210 = vlaneseq
        %v1211 = vshrl.u32 %v1210, 7
        %v1212 = vsub.s32 0, %v1211
        %v1213 = vrot.slane %v1148, %v1212
        %v1230 = vsub.f32 %v1153, %v1149
        %v1231 = vsub.f32 %v1157, %v1149
        %v1232 = vsub.f32 %v1161, %v1149
        %v1233 = vsub.f32 %v1165, %v1149
        %v1234 = vsub.f32 %v1169, %v1149
        %v1235 = vsub.f32 %v1173, %v1149
        %v1236 = vsub.f32 %v1177, %v1149
        %v1237 = vsub.f32 %v1181, %v1149
        %v1238 = vsub.f32 %v1185, %v1149
        %v1239 = vsub.f32 %v1189, %v1149
        %v1240 = vsub.f32 %v1193, %v1149
        %v1241 = vsub.f32 %v1197, %v1149
        %v1242 = vsub.f32 %v1201, %v1149
        %v1243 = vsub.f32 %v1205, %v1149
        %v1244 = vsub.f32 %v1209, %v1149
        %v1245 = vsub.f32 %v1213, %v1149
        %v1246 = vmax.f32 %v1230, 0.0
        %v1247 = vmax.f32 %v1231, 0.0
        %v1248 = vmax.f32 %v1232, 0.0
        %v1249 = vmax.f32 %v1233, 0.0
        %v1250 = vmax.f32 %v1234, 0.0
        %v1251 = vmax.f32 %v1235, 0.0
        %v1252 = vmax.f32 %v1236, 0.0
        %v1253 = vmax.f32 %v1237, 0.0
        %v1254 = vmax.f32 %v1238, 0.0
        %v1255 = vmax.f32 %v1239, 0.0
        %v1256 = vmax.f32 %v1240, 0.0
        %v1257 = vmax.f32 %v1241, 0.0
        %v1258 = vmax.f32 %v1242, 0.0
        %v1259 = vmax.f32 %v1243, 0.0
        %v1260 = vmax.f32 %v1244, 0.0
        %v1261 = vmax.f32 %v1245, 0.0
        %v1262 = vpack.c.bf16 %v1247, %v1246
        %v1263 = vpack.c.bf16 %v1249, %v1248
        %v1264 = vpack.c.bf16 %v1251, %v1250
        %v1265 = vpack.c.bf16 %v1253, %v1252
        %v1266 = vpack.c.bf16 %v1255, %v1254
        %v1267 = vpack.c.bf16 %v1257, %v1256
        %v1268 = vpack.c.bf16 %v1259, %v1258
        %v1269 = vpack.c.bf16 %v1261, %v1260
        %v1270 = vld [vmem:[#allocation11] sm:$0xf]
        %v1271 = vld [vmem:[#allocation11 + $0x4] sm:$0xf]
        %v1272 = vld [vmem:[#allocation11 + $0x8] sm:$0xf]
        %v1273 = vld [vmem:[#allocation11 + $0xc] sm:$0xf]
        %v1274 = vld [vmem:[#allocation13] sm:$0x1]
        %v1276 = vlaneseq
        %v1277 = vshrl.u32 %v1276, 7
        %v1278 = vsub.s32 0, %v1277
        %v1279 = vrot.slane %v1274, %v1278
        %v1285 = vunpack.c.l.b16 %v1270
        %v1286 = vunpack.c.l.b16 %v1271
        %v1287 = vunpack.c.l.b16 %v1272
        %v1288 = vunpack.c.l.b16 %v1273
        %v1289 = vpack.c.b16 %v1286, %v1285
        %v1290 = vpack.c.b16 %v1288, %v1287
        %vm1293 = vcmask 261120
        %v1295 = vsel %vm1293, %v1262, 0
        %v1298 = vsel %vm1293, %v1263, 0
        %v1301 = vsel %vm1293, %v1264, 0
        %v1304 = vsel %vm1293, %v1265, 0
        %v1307 = vsel %vm1293, %v1266, 0
        %v1310 = vsel %vm1293, %v1267, 0
        %v1313 = vsel %vm1293, %v1268, 0
        %v1316 = vsel %vm1293, %v1269, 0
        %1318 = vmatprep.subr.bf16.mxu0 0
        %1319 = vmatpush1.bf16.msra.mxu0 %v1289
        %1320 = vmatprep.subr.bf16.mxu0 0
        %1321 = vmatpush1.bf16.msra.mxu0 %v1290
        %1322 = vmatprep.subr.bf16.mxu0 0
        %1323 = vmatpush1.bf16.msra.mxu0 0
        %1324 = vmatprep.subr.bf16.mxu0 0
        %1325 = vmatpush1.bf16.msra.mxu0 0
        %1326 = vmatprep.subr.bf16.mxu0 0
        %1327 = vmatpush1.bf16.msra.mxu0 0
        %1328 = vmatprep.subr.bf16.mxu0 0
        %1329 = vmatpush1.bf16.msra.mxu0 0
        %1330 = vmatprep.subr.bf16.mxu0 0
        %1331 = vmatpush1.bf16.msra.mxu0 0
        %1332 = vmatprep.subr.bf16.mxu0 0
        %1333 = vmatpush1.bf16.msra.mxu0 0
        %1334 = vmatprep.subr.bf16.mxu0 0
        %1335 = vmatpush1.bf16.msra.mxu0 0
        %1336 = vmatprep.subr.bf16.mxu0 0
        %1337 = vmatpush1.bf16.msra.mxu0 0
        %1338 = vmatprep.subr.bf16.mxu0 0
        %1339 = vmatpush1.bf16.msra.mxu0 0
        %1340 = vmatprep.subr.bf16.mxu0 0
        %1341 = vmatpush1.bf16.msra.mxu0 0
        %1342 = vmatprep.subr.bf16.mxu0 0
        %1343 = vmatpush1.bf16.msra.mxu0 0
        %1344 = vmatprep.subr.bf16.mxu0 0
        %1345 = vmatpush1.bf16.msra.mxu0 0
        %1346 = vmatprep.subr.bf16.mxu0 0
        %1347 = vmatpush1.bf16.msra.mxu0 0
        %1348 = vmatprep.subr.bf16.mxu0 0
        %1349 = vmatpush1.bf16.msra.mxu0 0
        %1350 = vmatprep.mubr.bf16.mxu0 0
        %1351 = vmatmul.mubr.bf16.gmra.mrb[0].mxu0 %v1295
        %v1352 = vpop.f32.mrb[0].mxu0
        %v1353 = vadd.f32 %v1279, %v1352
        %v1354 = vpop.f32.mrb[0].mxu0
        %v1355 = vpop.f32.mrb[0].mxu0
        %v1356 = vadd.f32 %v1279, %v1355
        %v1357 = vpop.f32.mrb[0].mxu0
        %1358 = vmatprep.mubr.bf16.mxu0 0
        %1359 = vmatmul.mubr.bf16.gmra.mrb[0].mxu0 %v1298
        %v1360 = vpop.f32.mrb[0].mxu0
        %v1361 = vadd.f32 %v1279, %v1360
        %v1362 = vpop.f32.mrb[0].mxu0
        %v1363 = vpop.f32.mrb[0].mxu0
        %v1364 = vadd.f32 %v1279, %v1363
        %v1365 = vpop.f32.mrb[0].mxu0
        %1366 = vmatprep.mubr.bf16.mxu0 0
        %1367 = vmatmul.mubr.bf16.gmra.mrb[0].mxu0 %v1301
        %v1368 = vpop.f32.mrb[0].mxu0
        %v1369 = vadd.f32 %v1279, %v1368
        %v1370 = vpop.f32.mrb[0].mxu0
        %v1371 = vpop.f32.mrb[0].mxu0
        %v1372 = vadd.f32 %v1279, %v1371
        %v1373 = vpop.f32.mrb[0].mxu0
        %1374 = vmatprep.mubr.bf16.mxu0 0
        %1375 = vmatmul.mubr.bf16.gmra.mrb[0].mxu0 %v1304
        %v1376 = vpop.f32.mrb[0].mxu0
        %v1377 = vadd.f32 %v1279, %v1376
        %v1378 = vpop.f32.mrb[0].mxu0
        %v1379 = vpop.f32.mrb[0].mxu0
        %v1380 = vadd.f32 %v1279, %v1379
        %v1381 = vpop.f32.mrb[0].mxu0
        %1382 = vmatprep.mubr.bf16.mxu0 0
        %1383 = vmatmul.mubr.bf16.gmra.mrb[0].mxu0 %v1307
        %v1384 = vpop.f32.mrb[0].mxu0
        %v1385 = vadd.f32 %v1279, %v1384
        %v1386 = vpop.f32.mrb[0].mxu0
        %v1387 = vpop.f32.mrb[0].mxu0
        %v1388 = vadd.f32 %v1279, %v1387
        %v1389 = vpop.f32.mrb[0].mxu0
        %1390 = vmatprep.mubr.bf16.mxu0 0
        %1391 = vmatmul.mubr.bf16.gmra.mrb[0].mxu0 %v1310
        %v1392 = vpop.f32.mrb[0].mxu0
        %v1393 = vadd.f32 %v1279, %v1392
        %v1394 = vpop.f32.mrb[0].mxu0
        %v1395 = vpop.f32.mrb[0].mxu0
        %v1396 = vadd.f32 %v1279, %v1395
        %v1397 = vpop.f32.mrb[0].mxu0
        %1398 = vmatprep.mubr.bf16.mxu0 0
        %1399 = vmatmul.mubr.bf16.gmra.mrb[0].mxu0 %v1313
        %v1400 = vpop.f32.mrb[0].mxu0
        %v1401 = vadd.f32 %v1279, %v1400
        %v1402 = vpop.f32.mrb[0].mxu0
        %v1403 = vpop.f32.mrb[0].mxu0
        %v1404 = vadd.f32 %v1279, %v1403
        %v1405 = vpop.f32.mrb[0].mxu0
        %1406 = vmatprep.mubr.bf16.mxu0 0
        %1407 = vmatmul.mubr.bf16.gmra.mrb[0].mxu0 %v1316
        %v1408 = vpop.f32.mrb[0].mxu0
        %v1409 = vadd.f32 %v1279, %v1408
        %v1410 = vpop.f32.mrb[0].mxu0
        %v1411 = vpop.f32.mrb[0].mxu0
        %v1412 = vadd.f32 %v1279, %v1411
        %v1413 = vpop.f32.mrb[0].mxu0
        %1414 = vdwg.mxu0
        %v1415 = vmul.f32 %v1031, %v1353
        %v1416 = vmul.f32 %v1032, %v1356
        %v1417 = vmul.f32 %v1033, %v1361
        %v1418 = vmul.f32 %v1034, %v1364
        %v1419 = vmul.f32 %v1035, %v1369
        %v1420 = vmul.f32 %v1036, %v1372
        %v1421 = vmul.f32 %v1037, %v1377
        %v1422 = vmul.f32 %v1038, %v1380
        %v1423 = vmul.f32 %v1039, %v1385
        %v1424 = vmul.f32 %v1040, %v1388
        %v1425 = vmul.f32 %v1041, %v1393
        %v1426 = vmul.f32 %v1042, %v1396
        %v1427 = vmul.f32 %v1043, %v1401
        %v1428 = vmul.f32 %v1044, %v1404
        %v1429 = vmul.f32 %v1045, %v1409
        %v1430 = vmul.f32 %v1046, %v1412
        %v1431 = vld [vmem:[%s838] sm:$0xff]
        %v1432 = vld [vmem:[%s838 + $0x8] sm:$0xff]
        %v1435 = vcombine.high %v1431, %v1431
        %v1437 = vunpack.c.l.s4 1966171168
        %v1438 = vunpack.c.0.s8 %v1437
        %v1439 = vlaneseq
        %v1440 = vshrl.u32 %v1439, 7
        %v1441 = vsub.s32 %v1438, %v1440
        %v1442 = vrot.slane %v1431, %v1441
        %v1444 = vunpack.c.l.s4 1966171168
        %v1445 = vunpack.c.0.s8 %v1444
        %v1446 = vlaneseq
        %v1447 = vshrl.u32 %v1446, 7
        %v1448 = vsub.s32 %v1445, %v1447
        %v1449 = vrot.slane %v1435, %v1448
        %v1450 = vcombine.high %v1442, %v1442
        %v1451 = vcombine.high %v1449, %v1449
        %v1453 = vunpack.c.l.s4 1966171168
        %v1454 = vunpack.c.0.s8 %v1453
        %v1455 = vlaneseq
        %v1456 = vshrl.u32 %v1455, 7
        %v1457 = vsub.s32 %v1454, %v1456
        %v1458 = vrot.slane %v1442, %v1457
        %v1460 = vunpack.c.l.s4 1966171168
        %v1461 = vunpack.c.0.s8 %v1460
        %v1462 = vlaneseq
        %v1463 = vshrl.u32 %v1462, 7
        %v1464 = vsub.s32 %v1461, %v1463
        %v1465 = vrot.slane %v1449, %v1464
        %v1467 = vunpack.c.l.s4 1966171168
        %v1468 = vunpack.c.0.s8 %v1467
        %v1469 = vlaneseq
        %v1470 = vshrl.u32 %v1469, 7
        %v1471 = vsub.s32 %v1468, %v1470
        %v1472 = vrot.slane %v1450, %v1471
        %v1474 = vunpack.c.l.s4 1966171168
        %v1475 = vunpack.c.0.s8 %v1474
        %v1476 = vlaneseq
        %v1477 = vshrl.u32 %v1476, 7
        %v1478 = vsub.s32 %v1475, %v1477
        %v1479 = vrot.slane %v1451, %v1478
        %v1480 = vcombine.high %v1458, %v1458
        %v1481 = vcombine.high %v1465, %v1465
        %v1482 = vcombine.high %v1472, %v1472
        %v1483 = vcombine.high %v1479, %v1479
        %v1484 = vcombine.high %v1432, %v1432
        %v1486 = vunpack.c.l.s4 1966171168
        %v1487 = vunpack.c.0.s8 %v1486
        %v1488 = vlaneseq
        %v1489 = vshrl.u32 %v1488, 7
        %v1490 = vsub.s32 %v1487, %v1489
        %v1491 = vrot.slane %v1432, %v1490
        %v1493 = vunpack.c.l.s4 1966171168
        %v1494 = vunpack.c.0.s8 %v1493
        %v1495 = vlaneseq
        %v1496 = vshrl.u32 %v1495, 7
        %v1497 = vsub.s32 %v1494, %v1496
        %v1498 = vrot.slane %v1484, %v1497
        %v1499 = vcombine.high %v1491, %v1491
        %v1500 = vcombine.high %v1498, %v1498
        %v1502 = vunpack.c.l.s4 1966171168
        %v1503 = vunpack.c.0.s8 %v1502
        %v1504 = vlaneseq
        %v1505 = vshrl.u32 %v1504, 7
        %v1506 = vsub.s32 %v1503, %v1505
        %v1507 = vrot.slane %v1491, %v1506
        %v1509 = vunpack.c.l.s4 1966171168
        %v1510 = vunpack.c.0.s8 %v1509
        %v1511 = vlaneseq
        %v1512 = vshrl.u32 %v1511, 7
        %v1513 = vsub.s32 %v1510, %v1512
        %v1514 = vrot.slane %v1498, %v1513
        %v1516 = vunpack.c.l.s4 1966171168
        %v1517 = vunpack.c.0.s8 %v1516
        %v1518 = vlaneseq
        %v1519 = vshrl.u32 %v1518, 7
        %v1520 = vsub.s32 %v1517, %v1519
        %v1521 = vrot.slane %v1499, %v1520
        %v1523 = vunpack.c.l.s4 1966171168
        %v1524 = vunpack.c.0.s8 %v1523
        %v1525 = vlaneseq
        %v1526 = vshrl.u32 %v1525, 7
        %v1527 = vsub.s32 %v1524, %v1526
        %v1528 = vrot.slane %v1500, %v1527
        %v1529 = vcombine.high %v1507, %v1507
        %v1530 = vcombine.high %v1514, %v1514
        %v1531 = vcombine.high %v1521, %v1521
        %v1532 = vcombine.high %v1528, %v1528
        %v1533 = vld [vmem:[%s843] sm:$0xff]
        %v1534 = vlaneseq
        %v1535 = vshrl.u32 %v1534, 7
        %v1536 = vsub.s32 0, %v1535
        %v1537 = vrot.slane %v1458, %v1536
        %v1538 = vlaneseq
        %v1539 = vshrl.u32 %v1538, 7
        %v1540 = vsub.s32 0, %v1539
        %v1541 = vrot.slane %v1472, %v1540
        %v1542 = vlaneseq
        %v1543 = vshrl.u32 %v1542, 7
        %v1544 = vsub.s32 0, %v1543
        %v1545 = vrot.slane %v1480, %v1544
        %v1546 = vlaneseq
        %v1547 = vshrl.u32 %v1546, 7
        %v1548 = vsub.s32 0, %v1547
        %v1549 = vrot.slane %v1482, %v1548
        %v1550 = vlaneseq
        %v1551 = vshrl.u32 %v1550, 7
        %v1552 = vsub.s32 0, %v1551
        %v1553 = vrot.slane %v1465, %v1552
        %v1554 = vlaneseq
        %v1555 = vshrl.u32 %v1554, 7
        %v1556 = vsub.s32 0, %v1555
        %v1557 = vrot.slane %v1479, %v1556
        %v1558 = vlaneseq
        %v1559 = vshrl.u32 %v1558, 7
        %v1560 = vsub.s32 0, %v1559
        %v1561 = vrot.slane %v1481, %v1560
        %v1562 = vlaneseq
        %v1563 = vshrl.u32 %v1562, 7
        %v1564 = vsub.s32 0, %v1563
        %v1565 = vrot.slane %v1483, %v1564
        %v1566 = vlaneseq
        %v1567 = vshrl.u32 %v1566, 7
        %v1568 = vsub.s32 0, %v1567
        %v1569 = vrot.slane %v1507, %v1568
        %v1570 = vlaneseq
        %v1571 = vshrl.u32 %v1570, 7
        %v1572 = vsub.s32 0, %v1571
        %v1573 = vrot.slane %v1521, %v1572
        %v1574 = vlaneseq
        %v1575 = vshrl.u32 %v1574, 7
        %v1576 = vsub.s32 0, %v1575
        %v1577 = vrot.slane %v1529, %v1576
        %v1578 = vlaneseq
        %v1579 = vshrl.u32 %v1578, 7
        %v1580 = vsub.s32 0, %v1579
        %v1581 = vrot.slane %v1531, %v1580
        %v1582 = vlaneseq
        %v1583 = vshrl.u32 %v1582, 7
        %v1584 = vsub.s32 0, %v1583
        %v1585 = vrot.slane %v1514, %v1584
        %v1586 = vlaneseq
        %v1587 = vshrl.u32 %v1586, 7
        %v1588 = vsub.s32 0, %v1587
        %v1589 = vrot.slane %v1528, %v1588
        %v1590 = vlaneseq
        %v1591 = vshrl.u32 %v1590, 7
        %v1592 = vsub.s32 0, %v1591
        %v1593 = vrot.slane %v1530, %v1592
        %v1594 = vlaneseq
        %v1595 = vshrl.u32 %v1594, 7
        %v1596 = vsub.s32 0, %v1595
        %v1597 = vrot.slane %v1532, %v1596
        %v1614 = vsub.f32 %v1537, %v1533
        %v1615 = vsub.f32 %v1541, %v1533
        %v1616 = vsub.f32 %v1545, %v1533
        %v1617 = vsub.f32 %v1549, %v1533
        %v1618 = vsub.f32 %v1553, %v1533
        %v1619 = vsub.f32 %v1557, %v1533
        %v1620 = vsub.f32 %v1561, %v1533
        %v1621 = vsub.f32 %v1565, %v1533
        %v1622 = vsub.f32 %v1569, %v1533
        %v1623 = vsub.f32 %v1573, %v1533
        %v1624 = vsub.f32 %v1577, %v1533
        %v1625 = vsub.f32 %v1581, %v1533
        %v1626 = vsub.f32 %v1585, %v1533
        %v1627 = vsub.f32 %v1589, %v1533
        %v1628 = vsub.f32 %v1593, %v1533
        %v1629 = vsub.f32 %v1597, %v1533
        %v1630 = vmax.f32 %v1614, 0.0
        %v1631 = vmax.f32 %v1615, 0.0
        %v1632 = vmax.f32 %v1616, 0.0
        %v1633 = vmax.f32 %v1617, 0.0
        %v1634 = vmax.f32 %v1618, 0.0
        %v1635 = vmax.f32 %v1619, 0.0
        %v1636 = vmax.f32 %v1620, 0.0
        %v1637 = vmax.f32 %v1621, 0.0
        %v1638 = vmax.f32 %v1622, 0.0
        %v1639 = vmax.f32 %v1623, 0.0
        %v1640 = vmax.f32 %v1624, 0.0
        %v1641 = vmax.f32 %v1625, 0.0
        %v1642 = vmax.f32 %v1626, 0.0
        %v1643 = vmax.f32 %v1627, 0.0
        %v1644 = vmax.f32 %v1628, 0.0
        %v1645 = vmax.f32 %v1629, 0.0
        %v1646 = vpack.c.bf16 %v1631, %v1630
        %v1647 = vpack.c.bf16 %v1633, %v1632
        %v1648 = vpack.c.bf16 %v1635, %v1634
        %v1649 = vpack.c.bf16 %v1637, %v1636
        %v1650 = vpack.c.bf16 %v1639, %v1638
        %v1651 = vpack.c.bf16 %v1641, %v1640
        %v1652 = vpack.c.bf16 %v1643, %v1642
        %v1653 = vpack.c.bf16 %v1645, %v1644
        %v1654 = vld [vmem:[#allocation14] sm:$0xf]
        %v1655 = vld [vmem:[#allocation14 + $0x4] sm:$0xf]
        %v1656 = vld [vmem:[#allocation14 + $0x8] sm:$0xf]
        %v1657 = vld [vmem:[#allocation14 + $0xc] sm:$0xf]
        %v1658 = vld [vmem:[%s10] sm:$0x1]
        %v1660 = vlaneseq
        %v1661 = vshrl.u32 %v1660, 7
        %v1662 = vsub.s32 0, %v1661
        %v1663 = vrot.slane %v1658, %v1662
        %v1669 = vunpack.c.l.b16 %v1654
        %v1670 = vunpack.c.l.b16 %v1655
        %v1671 = vunpack.c.l.b16 %v1656
        %v1672 = vunpack.c.l.b16 %v1657
        %v1673 = vpack.c.b16 %v1670, %v1669
        %v1674 = vpack.c.b16 %v1672, %v1671
        %v1678 = vsel %vm1293, %v1646, 0
        %v1681 = vsel %vm1293, %v1647, 0
        %v1684 = vsel %vm1293, %v1648, 0
        %v1687 = vsel %vm1293, %v1649, 0
        %v1690 = vsel %vm1293, %v1650, 0
        %v1693 = vsel %vm1293, %v1651, 0
        %v1696 = vsel %vm1293, %v1652, 0
        %v1699 = vsel %vm1293, %v1653, 0
        %1701 = vmatprep.subr.bf16.mxu0 0
        %1702 = vmatpush1.bf16.msra.mxu0 %v1673
        %1703 = vmatprep.subr.bf16.mxu0 0
        %1704 = vmatpush1.bf16.msra.mxu0 %v1674
        %1705 = vmatprep.subr.bf16.mxu0 0
        %1706 = vmatpush1.bf16.msra.mxu0 0
        %1707 = vmatprep.subr.bf16.mxu0 0
        %1708 = vmatpush1.bf16.msra.mxu0 0
        %1709 = vmatprep.subr.bf16.mxu0 0
        %1710 = vmatpush1.bf16.msra.mxu0 0
        %1711 = vmatprep.subr.bf16.mxu0 0
        %1712 = vmatpush1.bf16.msra.mxu0 0
        %1713 = vmatprep.subr.bf16.mxu0 0
        %1714 = vmatpush1.bf16.msra.mxu0 0
        %1715 = vmatprep.subr.bf16.mxu0 0
        %1716 = vmatpush1.bf16.msra.mxu0 0
        %1717 = vmatprep.subr.bf16.mxu0 0
        %1718 = vmatpush1.bf16.msra.mxu0 0
        %1719 = vmatprep.subr.bf16.mxu0 0
        %1720 = vmatpush1.bf16.msra.mxu0 0
        %1721 = vmatprep.subr.bf16.mxu0 0
        %1722 = vmatpush1.bf16.msra.mxu0 0
        %1723 = vmatprep.subr.bf16.mxu0 0
        %1724 = vmatpush1.bf16.msra.mxu0 0
        %1725 = vmatprep.subr.bf16.mxu0 0
        %1726 = vmatpush1.bf16.msra.mxu0 0
        %1727 = vmatprep.subr.bf16.mxu0 0
        %1728 = vmatpush1.bf16.msra.mxu0 0
        %1729 = vmatprep.subr.bf16.mxu0 0
        %1730 = vmatpush1.bf16.msra.mxu0 0
        %1731 = vmatprep.subr.bf16.mxu0 0
        %1732 = vmatpush1.bf16.msra.mxu0 0
        %1733 = vmatprep.mubr.bf16.mxu0 0
        %1734 = vmatmul.mubr.bf16.gmra.mrb[0].mxu0 %v1678
        %v1735 = vpop.f32.mrb[0].mxu0
        %v1736 = vadd.f32 %v1663, %v1735
        %v1737 = vpop.f32.mrb[0].mxu0
        %v1738 = vpop.f32.mrb[0].mxu0
        %v1739 = vadd.f32 %v1663, %v1738
        %v1740 = vpop.f32.mrb[0].mxu0
        %1741 = vmatprep.mubr.bf16.mxu0 0
        %1742 = vmatmul.mubr.bf16.gmra.mrb[0].mxu0 %v1681
        %v1743 = vpop.f32.mrb[0].mxu0
        %v1744 = vadd.f32 %v1663, %v1743
        %v1745 = vpop.f32.mrb[0].mxu0
        %v1746 = vpop.f32.mrb[0].mxu0
        %v1747 = vadd.f32 %v1663, %v1746
        %v1748 = vpop.f32.mrb[0].mxu0
        %1749 = vmatprep.mubr.bf16.mxu0 0
        %1750 = vmatmul.mubr.bf16.gmra.mrb[0].mxu0 %v1684
        %v1751 = vpop.f32.mrb[0].mxu0
        %v1752 = vadd.f32 %v1663, %v1751
        %v1753 = vpop.f32.mrb[0].mxu0
        %v1754 = vpop.f32.mrb[0].mxu0
        %v1755 = vadd.f32 %v1663, %v1754
        %v1756 = vpop.f32.mrb[0].mxu0
        %1757 = vmatprep.mubr.bf16.mxu0 0
        %1758 = vmatmul.mubr.bf16.gmra.mrb[0].mxu0 %v1687
        %v1759 = vpop.f32.mrb[0].mxu0
        %v1760 = vadd.f32 %v1663, %v1759
        %v1761 = vpop.f32.mrb[0].mxu0
        %v1762 = vpop.f32.mrb[0].mxu0
        %v1763 = vadd.f32 %v1663, %v1762
        %v1764 = vpop.f32.mrb[0].mxu0
        %1765 = vmatprep.mubr.bf16.mxu0 0
        %1766 = vmatmul.mubr.bf16.gmra.mrb[0].mxu0 %v1690
        %v1767 = vpop.f32.mrb[0].mxu0
        %v1768 = vadd.f32 %v1663, %v1767
        %v1769 = vpop.f32.mrb[0].mxu0
        %v1770 = vpop.f32.mrb[0].mxu0
        %v1771 = vadd.f32 %v1663, %v1770
        %v1772 = vpop.f32.mrb[0].mxu0
        %1773 = vmatprep.mubr.bf16.mxu0 0
        %1774 = vmatmul.mubr.bf16.gmra.mrb[0].mxu0 %v1693
        %v1775 = vpop.f32.mrb[0].mxu0
        %v1776 = vadd.f32 %v1663, %v1775
        %v1777 = vpop.f32.mrb[0].mxu0
        %v1778 = vpop.f32.mrb[0].mxu0
        %v1779 = vadd.f32 %v1663, %v1778
        %v1780 = vpop.f32.mrb[0].mxu0
        %1781 = vmatprep.mubr.bf16.mxu0 0
        %1782 = vmatmul.mubr.bf16.gmra.mrb[0].mxu0 %v1696
        %v1783 = vpop.f32.mrb[0].mxu0
        %v1784 = vadd.f32 %v1663, %v1783
        %v1785 = vpop.f32.mrb[0].mxu0
        %v1786 = vpop.f32.mrb[0].mxu0
        %v1787 = vadd.f32 %v1663, %v1786
        %v1788 = vpop.f32.mrb[0].mxu0
        %1789 = vmatprep.mubr.bf16.mxu0 0
        %1790 = vmatmul.mubr.bf16.gmra.mrb[0].mxu0 %v1699
        %v1791 = vpop.f32.mrb[0].mxu0
        %v1792 = vadd.f32 %v1663, %v1791
        %v1793 = vpop.f32.mrb[0].mxu0
        %v1794 = vpop.f32.mrb[0].mxu0
        %v1795 = vadd.f32 %v1663, %v1794
        %v1796 = vpop.f32.mrb[0].mxu0
        %1797 = vdwg.mxu0
        %v1798 = vadd.f32 %v1415, %v1736
        %v1799 = vadd.f32 %v1416, %v1739
        %v1800 = vadd.f32 %v1417, %v1744
        %v1801 = vadd.f32 %v1418, %v1747
        %v1802 = vadd.f32 %v1419, %v1752
        %v1803 = vadd.f32 %v1420, %v1755
        %v1804 = vadd.f32 %v1421, %v1760
        %v1805 = vadd.f32 %v1422, %v1763
        %v1806 = vadd.f32 %v1423, %v1768
        %v1807 = vadd.f32 %v1424, %v1771
        %v1808 = vadd.f32 %v1425, %v1776
        %v1809 = vadd.f32 %v1426, %v1779
        %v1810 = vadd.f32 %v1427, %v1784
        %v1811 = vadd.f32 %v1428, %v1787
        %v1812 = vadd.f32 %v1429, %v1792
        %v1813 = vadd.f32 %v1430, %v1795
        %v1814 = vpack.c.bf16 %v1799, %v1798
        %v1815 = vpack.c.bf16 %v1801, %v1800
        %v1816 = vpack.c.bf16 %v1803, %v1802
        %v1817 = vpack.c.bf16 %v1805, %v1804
        %v1818 = vpack.c.bf16 %v1807, %v1806
        %v1819 = vpack.c.bf16 %v1809, %v1808
        %v1820 = vpack.c.bf16 %v1811, %v1810
        %v1821 = vpack.c.bf16 %v1813, %v1812
        %v1822 = vld [vmem:[%s11] sm:$0xf]
        %v1823 = vld [vmem:[%s11 + $0x4] sm:$0xf]
        %v1824 = vld [vmem:[%s11 + $0x8] sm:$0xf]
        %v1825 = vld [vmem:[%s11 + $0xc] sm:$0xf]
        %v1826 = vld [vmem:[%s12] sm:$0x1]
        %v1828 = vlaneseq
        %v1829 = vshrl.u32 %v1828, 7
        %v1830 = vsub.s32 0, %v1829
        %v1831 = vrot.slane %v1826, %v1830
        %v1837 = vunpack.c.l.b16 %v1822
        %v1838 = vunpack.c.l.b16 %v1823
        %v1839 = vunpack.c.l.b16 %v1824
        %v1840 = vunpack.c.l.b16 %v1825
        %v1841 = vpack.c.b16 %v1838, %v1837
        %v1842 = vpack.c.b16 %v1840, %v1839
        %v1846 = vsel %vm1293, %v1814, 0
        %v1849 = vsel %vm1293, %v1815, 0
        %v1852 = vsel %vm1293, %v1816, 0
        %v1855 = vsel %vm1293, %v1817, 0
        %v1858 = vsel %vm1293, %v1818, 0
        %v1861 = vsel %vm1293, %v1819, 0
        %v1864 = vsel %vm1293, %v1820, 0
        %v1867 = vsel %vm1293, %v1821, 0
        %1869 = vmatprep.subr.bf16.mxu0 0
        %1870 = vmatpush1.bf16.msra.mxu0 %v1841
        %1871 = vmatprep.subr.bf16.mxu0 0
        %1872 = vmatpush1.bf16.msra.mxu0 %v1842
        %1873 = vmatprep.subr.bf16.mxu0 0
        %1874 = vmatpush1.bf16.msra.mxu0 0
        %1875 = vmatprep.subr.bf16.mxu0 0
        %1876 = vmatpush1.bf16.msra.mxu0 0
        %1877 = vmatprep.subr.bf16.mxu0 0
        %1878 = vmatpush1.bf16.msra.mxu0 0
        %1879 = vmatprep.subr.bf16.mxu0 0
        %1880 = vmatpush1.bf16.msra.mxu0 0
        %1881 = vmatprep.subr.bf16.mxu0 0
        %1882 = vmatpush1.bf16.msra.mxu0 0
        %1883 = vmatprep.subr.bf16.mxu0 0
        %1884 = vmatpush1.bf16.msra.mxu0 0
        %1885 = vmatprep.subr.bf16.mxu0 0
        %1886 = vmatpush1.bf16.msra.mxu0 0
        %1887 = vmatprep.subr.bf16.mxu0 0
        %1888 = vmatpush1.bf16.msra.mxu0 0
        %1889 = vmatprep.subr.bf16.mxu0 0
        %1890 = vmatpush1.bf16.msra.mxu0 0
        %1891 = vmatprep.subr.bf16.mxu0 0
        %1892 = vmatpush1.bf16.msra.mxu0 0
        %1893 = vmatprep.subr.bf16.mxu0 0
        %1894 = vmatpush1.bf16.msra.mxu0 0
        %1895 = vmatprep.subr.bf16.mxu0 0
        %1896 = vmatpush1.bf16.msra.mxu0 0
        %1897 = vmatprep.subr.bf16.mxu0 0
        %1898 = vmatpush1.bf16.msra.mxu0 0
        %1899 = vmatprep.subr.bf16.mxu0 0
        %1900 = vmatpush1.bf16.msra.mxu0 0
        %1901 = vmatprep.mubr.bf16.mxu0 0
        %1902 = vmatmul.mubr.bf16.gmra.mrb[0].mxu0 %v1846
        %v1903 = vpop.f32.mrb[0].mxu0
        %v1904 = vadd.f32 %v1831, %v1903
        %v1905 = vpop.f32.mrb[0].mxu0
        %v1906 = vpop.f32.mrb[0].mxu0
        %v1907 = vadd.f32 %v1831, %v1906
        %v1908 = vpop.f32.mrb[0].mxu0
        %1909 = vmatprep.mubr.bf16.mxu0 0
        %1910 = vmatmul.mubr.bf16.gmra.mrb[0].mxu0 %v1849
        %v1911 = vpop.f32.mrb[0].mxu0
        %v1912 = vadd.f32 %v1831, %v1911
        %v1913 = vpop.f32.mrb[0].mxu0
        %v1914 = vpop.f32.mrb[0].mxu0
        %v1915 = vadd.f32 %v1831, %v1914
        %v1916 = vpop.f32.mrb[0].mxu0
        %1917 = vmatprep.mubr.bf16.mxu0 0
        %1918 = vmatmul.mubr.bf16.gmra.mrb[0].mxu0 %v1852
        %v1919 = vpop.f32.mrb[0].mxu0
        %v1920 = vadd.f32 %v1831, %v1919
        %v1921 = vpop.f32.mrb[0].mxu0
        %v1922 = vpop.f32.mrb[0].mxu0
        %v1923 = vadd.f32 %v1831, %v1922
        %v1924 = vpop.f32.mrb[0].mxu0
        %1925 = vmatprep.mubr.bf16.mxu0 0
        %1926 = vmatmul.mubr.bf16.gmra.mrb[0].mxu0 %v1855
        %v1927 = vpop.f32.mrb[0].mxu0
        %v1928 = vadd.f32 %v1831, %v1927
        %v1929 = vpop.f32.mrb[0].mxu0
        %v1930 = vpop.f32.mrb[0].mxu0
        %v1931 = vadd.f32 %v1831, %v1930
        %v1932 = vpop.f32.mrb[0].mxu0
        %1933 = vmatprep.mubr.bf16.mxu0 0
        %1934 = vmatmul.mubr.bf16.gmra.mrb[0].mxu0 %v1858
        %v1935 = vpop.f32.mrb[0].mxu0
        %v1936 = vadd.f32 %v1831, %v1935
        %v1937 = vpop.f32.mrb[0].mxu0
        %v1938 = vpop.f32.mrb[0].mxu0
        %v1939 = vadd.f32 %v1831, %v1938
        %v1940 = vpop.f32.mrb[0].mxu0
        %1941 = vmatprep.mubr.bf16.mxu0 0
        %1942 = vmatmul.mubr.bf16.gmra.mrb[0].mxu0 %v1861
        %v1943 = vpop.f32.mrb[0].mxu0
        %v1944 = vadd.f32 %v1831, %v1943
        %v1945 = vpop.f32.mrb[0].mxu0
        %v1946 = vpop.f32.mrb[0].mxu0
        %v1947 = vadd.f32 %v1831, %v1946
        %v1948 = vpop.f32.mrb[0].mxu0
        %1949 = vmatprep.mubr.bf16.mxu0 0
        %1950 = vmatmul.mubr.bf16.gmra.mrb[0].mxu0 %v1864
        %v1951 = vpop.f32.mrb[0].mxu0
        %v1952 = vadd.f32 %v1831, %v1951
        %v1953 = vpop.f32.mrb[0].mxu0
        %v1954 = vpop.f32.mrb[0].mxu0
        %v1955 = vadd.f32 %v1831, %v1954
        %v1956 = vpop.f32.mrb[0].mxu0
        %1957 = vmatprep.mubr.bf16.mxu0 0
        %1958 = vmatmul.mubr.bf16.gmra.mrb[0].mxu0 %v1867
        %v1959 = vpop.f32.mrb[0].mxu0
        %v1960 = vadd.f32 %v1831, %v1959
        %v1961 = vpop.f32.mrb[0].mxu0
        %v1962 = vpop.f32.mrb[0].mxu0
        %v1963 = vadd.f32 %v1831, %v1962
        %v1964 = vpop.f32.mrb[0].mxu0
        %1965 = vdwg.mxu0
        %v1966 = vmax.f32 %v1904, 0.0
        %v1967 = vmax.f32 %v1907, 0.0
        %v1968 = vmax.f32 %v1912, 0.0
        %v1969 = vmax.f32 %v1915, 0.0
        %v1970 = vmax.f32 %v1920, 0.0
        %v1971 = vmax.f32 %v1923, 0.0
        %v1972 = vmax.f32 %v1928, 0.0
        %v1973 = vmax.f32 %v1931, 0.0
        %v1974 = vmax.f32 %v1936, 0.0
        %v1975 = vmax.f32 %v1939, 0.0
        %v1976 = vmax.f32 %v1944, 0.0
        %v1977 = vmax.f32 %v1947, 0.0
        %v1978 = vmax.f32 %v1952, 0.0
        %v1979 = vmax.f32 %v1955, 0.0
        %v1980 = vmax.f32 %v1960, 0.0
        %v1981 = vmax.f32 %v1963, 0.0
        %v1982 = vpack.c.bf16 %v1967, %v1966
        %v1983 = vpack.c.bf16 %v1969, %v1968
        %v1984 = vpack.c.bf16 %v1971, %v1970
        %v1985 = vpack.c.bf16 %v1973, %v1972
        %v1986 = vpack.c.bf16 %v1975, %v1974
        %v1987 = vpack.c.bf16 %v1977, %v1976
        %v1988 = vpack.c.bf16 %v1979, %v1978
        %v1989 = vpack.c.bf16 %v1981, %v1980
        %v1990 = vld [vmem:[%s13] sm:$0x3]
        %v1991 = vld [vmem:[%s14] sm:$0x1]
        %v1993 = vlaneseq
        %v1994 = vshrl.u32 %v1993, 7
        %v1995 = vsub.s32 0, %v1994
        %v1996 = vrot.slane %v1991, %v1995
        %vm1998 = vcmask 31744
        %v2000 = vsel %vm1998, %v1982, 0
        %v2003 = vsel %vm1998, %v1983, 0
        %v2006 = vsel %vm1998, %v1984, 0
        %v2009 = vsel %vm1998, %v1985, 0
        %v2012 = vsel %vm1998, %v1986, 0
        %v2015 = vsel %vm1998, %v1987, 0
        %v2018 = vsel %vm1998, %v1988, 0
        %v2021 = vsel %vm1998, %v1989, 0
        %vm2023 = vcmask 1041408
        %v2025 = vsel %vm2023, %v1990, 0
        %2027 = vmatprep.subr.bf16.mxu0 0
        %2028 = vmatpush1.bf16.msra.mxu0 %v2025
        %2029 = vmatprep.subr.bf16.mxu0 0
        %2030 = vmatpush1.bf16.msra.mxu0 0
        %2031 = vmatprep.subr.bf16.mxu0 0
        %2032 = vmatpush1.bf16.msra.mxu0 0
        %2033 = vmatprep.subr.bf16.mxu0 0
        %2034 = vmatpush1.bf16.msra.mxu0 0
        %2035 = vmatprep.subr.bf16.mxu0 0
        %2036 = vmatpush1.bf16.msra.mxu0 0
        %2037 = vmatprep.subr.bf16.mxu0 0
        %2038 = vmatpush1.bf16.msra.mxu0 0
        %2039 = vmatprep.subr.bf16.mxu0 0
        %2040 = vmatpush1.bf16.msra.mxu0 0
        %2041 = vmatprep.subr.bf16.mxu0 0
        %2042 = vmatpush1.bf16.msra.mxu0 0
        %2043 = vmatprep.subr.bf16.mxu0 0
        %2044 = vmatpush1.bf16.msra.mxu0 0
        %2045 = vmatprep.subr.bf16.mxu0 0
        %2046 = vmatpush1.bf16.msra.mxu0 0
        %2047 = vmatprep.subr.bf16.mxu0 0
        %2048 = vmatpush1.bf16.msra.mxu0 0
        %2049 = vmatprep.subr.bf16.mxu0 0
        %2050 = vmatpush1.bf16.msra.mxu0 0
        %2051 = vmatprep.subr.bf16.mxu0 0
        %2052 = vmatpush1.bf16.msra.mxu0 0
        %2053 = vmatprep.subr.bf16.mxu0 0
        %2054 = vmatpush1.bf16.msra.mxu0 0
        %2055 = vmatprep.subr.bf16.mxu0 0
        %2056 = vmatpush1.bf16.msra.mxu0 0
        %2057 = vmatprep.subr.bf16.mxu0 0
        %2058 = vmatpush1.bf16.msra.mxu0 0
        %2059 = vmatprep.mubr.bf16.mxu0 0
        %2060 = vmatmul.mubr.bf16.gmra.mrb[0].mxu0 %v2000
        %v2061 = vpop.f32.mrb[0].mxu0
        %v2062 = vadd.f32 %v1996, %v2061
        %v2063 = vpop.f32.mrb[0].mxu0
        %v2064 = vpop.f32.mrb[0].mxu0
        %v2065 = vadd.f32 %v1996, %v2064
        %v2066 = vpop.f32.mrb[0].mxu0
        %2067 = vmatprep.mubr.bf16.mxu0 0
        %2068 = vmatmul.mubr.bf16.gmra.mrb[0].mxu0 %v2003
        %v2069 = vpop.f32.mrb[0].mxu0
        %v2070 = vadd.f32 %v1996, %v2069
        %v2071 = vpop.f32.mrb[0].mxu0
        %v2072 = vpop.f32.mrb[0].mxu0
        %v2073 = vadd.f32 %v1996, %v2072
        %v2074 = vpop.f32.mrb[0].mxu0
        %2075 = vmatprep.mubr.bf16.mxu0 0
        %2076 = vmatmul.mubr.bf16.gmra.mrb[0].mxu0 %v2006
        %v2077 = vpop.f32.mrb[0].mxu0
        %v2078 = vadd.f32 %v1996, %v2077
        %v2079 = vpop.f32.mrb[0].mxu0
        %v2080 = vpop.f32.mrb[0].mxu0
        %v2081 = vadd.f32 %v1996, %v2080
        %v2082 = vpop.f32.mrb[0].mxu0
        %2083 = vmatprep.mubr.bf16.mxu0 0
        %2084 = vmatmul.mubr.bf16.gmra.mrb[0].mxu0 %v2009
        %v2085 = vpop.f32.mrb[0].mxu0
        %v2086 = vadd.f32 %v1996, %v2085
        %v2087 = vpop.f32.mrb[0].mxu0
        %v2088 = vpop.f32.mrb[0].mxu0
        %v2089 = vadd.f32 %v1996, %v2088
        %v2090 = vpop.f32.mrb[0].mxu0
        %2091 = vmatprep.mubr.bf16.mxu0 0
        %2092 = vmatmul.mubr.bf16.gmra.mrb[0].mxu0 %v2012
        %v2093 = vpop.f32.mrb[0].mxu0
        %v2094 = vadd.f32 %v1996, %v2093
        %v2095 = vpop.f32.mrb[0].mxu0
        %v2096 = vpop.f32.mrb[0].mxu0
        %v2097 = vadd.f32 %v1996, %v2096
        %v2098 = vpop.f32.mrb[0].mxu0
        %2099 = vmatprep.mubr.bf16.mxu0 0
        %2100 = vmatmul.mubr.bf16.gmra.mrb[0].mxu0 %v2015
        %v2101 = vpop.f32.mrb[0].mxu0
        %v2102 = vadd.f32 %v1996, %v2101
        %v2103 = vpop.f32.mrb[0].mxu0
        %v2104 = vpop.f32.mrb[0].mxu0
        %v2105 = vadd.f32 %v1996, %v2104
        %v2106 = vpop.f32.mrb[0].mxu0
        %2107 = vmatprep.mubr.bf16.mxu0 0
        %2108 = vmatmul.mubr.bf16.gmra.mrb[0].mxu0 %v2018
        %v2109 = vpop.f32.mrb[0].mxu0
        %v2110 = vadd.f32 %v1996, %v2109
        %v2111 = vpop.f32.mrb[0].mxu0
        %v2112 = vpop.f32.mrb[0].mxu0
        %v2113 = vadd.f32 %v1996, %v2112
        %v2114 = vpop.f32.mrb[0].mxu0
        %2115 = vmatprep.mubr.bf16.mxu0 0
        %2116 = vmatmul.mubr.bf16.gmra.mrb[0].mxu0 %v2021
        %v2117 = vpop.f32.mrb[0].mxu0
        %v2118 = vadd.f32 %v1996, %v2117
        %v2119 = vpop.f32.mrb[0].mxu0
        %v2120 = vpop.f32.mrb[0].mxu0
        %v2121 = vadd.f32 %v1996, %v2120
        %v2122 = vpop.f32.mrb[0].mxu0
        %2123 = vdwg.mxu0
        %2124 = vxpose.xlu0.b32.start [1/16] %v2062, 128
        %2125 = vxpose.xlu0.b32.cont [2/16] 0.0, 128
        %2126 = vxpose.xlu0.b32.cont [3/16] 0.0, 128
        %2127 = vxpose.xlu0.b32.cont [4/16] 0.0, 128
        %2128 = vxpose.xlu0.b32.cont [5/16] 0.0, 128
        %2129 = vxpose.xlu0.b32.cont [6/16] 0.0, 128
        %2130 = vxpose.xlu0.b32.cont [7/16] 0.0, 128
        %2131 = vxpose.xlu0.b32.cont [8/16] 0.0, 128
        %2132 = vxpose.xlu0.b32.cont [9/16] 0.0, 128
        %2133 = vxpose.xlu0.b32.cont [10/16] 0.0, 128
        %2134 = vxpose.xlu0.b32.cont [11/16] 0.0, 128
        %2135 = vxpose.xlu0.b32.cont [12/16] 0.0, 128
        %2136 = vxpose.xlu0.b32.cont [13/16] 0.0, 128
        %2137 = vxpose.xlu0.b32.cont [14/16] 0.0, 128
        %2138 = vxpose.xlu0.b32.cont [15/16] 0.0, 128
        %2139 = vxpose.xlu0.b32.end [16/16] 0.0, 128
        %v2140 = vpop.trf.xlu0
        %v2141 = vpop.trf.xlu0
        %v2142 = vpop.trf.xlu0
        %v2143 = vpop.trf.xlu0
        %v2144 = vpop.trf.xlu0
        %v2145 = vpop.trf.xlu0
        %v2146 = vpop.trf.xlu0
        %v2147 = vpop.trf.xlu0
        %v2148 = vpop.trf.xlu0
        %v2149 = vpop.trf.xlu0
        %v2150 = vpop.trf.xlu0
        %v2151 = vpop.trf.xlu0
        %v2152 = vpop.trf.xlu0
        %v2153 = vpop.trf.xlu0
        %v2154 = vpop.trf.xlu0
        %v2155 = vpop.trf.xlu0
        %2156 = vxpose.xlu0.b32.start [1/16] %v2065, 128
        %2157 = vxpose.xlu0.b32.cont [2/16] 0.0, 128
        %2158 = vxpose.xlu0.b32.cont [3/16] 0.0, 128
        %2159 = vxpose.xlu0.b32.cont [4/16] 0.0, 128
        %2160 = vxpose.xlu0.b32.cont [5/16] 0.0, 128
        %2161 = vxpose.xlu0.b32.cont [6/16] 0.0, 128
        %2162 = vxpose.xlu0.b32.cont [7/16] 0.0, 128
        %2163 = vxpose.xlu0.b32.cont [8/16] 0.0, 128
        %2164 = vxpose.xlu0.b32.cont [9/16] 0.0, 128
        %2165 = vxpose.xlu0.b32.cont [10/16] 0.0, 128
        %2166 = vxpose.xlu0.b32.cont [11/16] 0.0, 128
        %2167 = vxpose.xlu0.b32.cont [12/16] 0.0, 128
        %2168 = vxpose.xlu0.b32.cont [13/16] 0.0, 128
        %2169 = vxpose.xlu0.b32.cont [14/16] 0.0, 128
        %2170 = vxpose.xlu0.b32.cont [15/16] 0.0, 128
        %2171 = vxpose.xlu0.b32.end [16/16] 0.0, 128
        %v2172 = vpop.trf.xlu0
        %v2173 = vpop.trf.xlu0
        %v2174 = vpop.trf.xlu0
        %v2175 = vpop.trf.xlu0
        %v2176 = vpop.trf.xlu0
        %v2177 = vpop.trf.xlu0
        %v2178 = vpop.trf.xlu0
        %v2179 = vpop.trf.xlu0
        %v2180 = vpop.trf.xlu0
        %v2181 = vpop.trf.xlu0
        %v2182 = vpop.trf.xlu0
        %v2183 = vpop.trf.xlu0
        %v2184 = vpop.trf.xlu0
        %v2185 = vpop.trf.xlu0
        %v2186 = vpop.trf.xlu0
        %v2187 = vpop.trf.xlu0
        %2188 = vxpose.xlu0.b32.start [1/16] %v2070, 128
        %2189 = vxpose.xlu0.b32.cont [2/16] 0.0, 128
        %2190 = vxpose.xlu0.b32.cont [3/16] 0.0, 128
        %2191 = vxpose.xlu0.b32.cont [4/16] 0.0, 128
        %2192 = vxpose.xlu0.b32.cont [5/16] 0.0, 128
        %2193 = vxpose.xlu0.b32.cont [6/16] 0.0, 128
        %2194 = vxpose.xlu0.b32.cont [7/16] 0.0, 128
        %2195 = vxpose.xlu0.b32.cont [8/16] 0.0, 128
        %2196 = vxpose.xlu0.b32.cont [9/16] 0.0, 128
        %2197 = vxpose.xlu0.b32.cont [10/16] 0.0, 128
        %2198 = vxpose.xlu0.b32.cont [11/16] 0.0, 128
        %2199 = vxpose.xlu0.b32.cont [12/16] 0.0, 128
        %2200 = vxpose.xlu0.b32.cont [13/16] 0.0, 128
        %2201 = vxpose.xlu0.b32.cont [14/16] 0.0, 128
        %2202 = vxpose.xlu0.b32.cont [15/16] 0.0, 128
        %2203 = vxpose.xlu0.b32.end [16/16] 0.0, 128
        %v2204 = vpop.trf.xlu0
        %v2205 = vpop.trf.xlu0
        %v2206 = vpop.trf.xlu0
        %v2207 = vpop.trf.xlu0
        %v2208 = vpop.trf.xlu0
        %v2209 = vpop.trf.xlu0
        %v2210 = vpop.trf.xlu0
        %v2211 = vpop.trf.xlu0
        %v2212 = vpop.trf.xlu0
        %v2213 = vpop.trf.xlu0
        %v2214 = vpop.trf.xlu0
        %v2215 = vpop.trf.xlu0
        %v2216 = vpop.trf.xlu0
        %v2217 = vpop.trf.xlu0
        %v2218 = vpop.trf.xlu0
        %v2219 = vpop.trf.xlu0
        %2220 = vxpose.xlu0.b32.start [1/16] %v2073, 128
        %2221 = vxpose.xlu0.b32.cont [2/16] 0.0, 128
        %2222 = vxpose.xlu0.b32.cont [3/16] 0.0, 128
        %2223 = vxpose.xlu0.b32.cont [4/16] 0.0, 128
        %2224 = vxpose.xlu0.b32.cont [5/16] 0.0, 128
        %2225 = vxpose.xlu0.b32.cont [6/16] 0.0, 128
        %2226 = vxpose.xlu0.b32.cont [7/16] 0.0, 128
        %2227 = vxpose.xlu0.b32.cont [8/16] 0.0, 128
        %2228 = vxpose.xlu0.b32.cont [9/16] 0.0, 128
        %2229 = vxpose.xlu0.b32.cont [10/16] 0.0, 128
        %2230 = vxpose.xlu0.b32.cont [11/16] 0.0, 128
        %2231 = vxpose.xlu0.b32.cont [12/16] 0.0, 128
        %2232 = vxpose.xlu0.b32.cont [13/16] 0.0, 128
        %2233 = vxpose.xlu0.b32.cont [14/16] 0.0, 128
        %2234 = vxpose.xlu0.b32.cont [15/16] 0.0, 128
        %2235 = vxpose.xlu0.b32.end [16/16] 0.0, 128
        %v2236 = vpop.trf.xlu0
        %v2237 = vpop.trf.xlu0
        %v2238 = vpop.trf.xlu0
        %v2239 = vpop.trf.xlu0
        %v2240 = vpop.trf.xlu0
        %v2241 = vpop.trf.xlu0
        %v2242 = vpop.trf.xlu0
        %v2243 = vpop.trf.xlu0
        %v2244 = vpop.trf.xlu0
        %v2245 = vpop.trf.xlu0
        %v2246 = vpop.trf.xlu0
        %v2247 = vpop.trf.xlu0
        %v2248 = vpop.trf.xlu0
        %v2249 = vpop.trf.xlu0
        %v2250 = vpop.trf.xlu0
        %v2251 = vpop.trf.xlu0
        %2252 = vxpose.xlu0.b32.start [1/16] %v2078, 128
        %2253 = vxpose.xlu0.b32.cont [2/16] 0.0, 128
        %2254 = vxpose.xlu0.b32.cont [3/16] 0.0, 128
        %2255 = vxpose.xlu0.b32.cont [4/16] 0.0, 128
        %2256 = vxpose.xlu0.b32.cont [5/16] 0.0, 128
        %2257 = vxpose.xlu0.b32.cont [6/16] 0.0, 128
        %2258 = vxpose.xlu0.b32.cont [7/16] 0.0, 128
        %2259 = vxpose.xlu0.b32.cont [8/16] 0.0, 128
        %2260 = vxpose.xlu0.b32.cont [9/16] 0.0, 128
        %2261 = vxpose.xlu0.b32.cont [10/16] 0.0, 128
        %2262 = vxpose.xlu0.b32.cont [11/16] 0.0, 128
        %2263 = vxpose.xlu0.b32.cont [12/16] 0.0, 128
        %2264 = vxpose.xlu0.b32.cont [13/16] 0.0, 128
        %2265 = vxpose.xlu0.b32.cont [14/16] 0.0, 128
        %2266 = vxpose.xlu0.b32.cont [15/16] 0.0, 128
        %2267 = vxpose.xlu0.b32.end [16/16] 0.0, 128
        %v2268 = vpop.trf.xlu0
        %v2269 = vpop.trf.xlu0
        %v2270 = vpop.trf.xlu0
        %v2271 = vpop.trf.xlu0
        %v2272 = vpop.trf.xlu0
        %v2273 = vpop.trf.xlu0
        %v2274 = vpop.trf.xlu0
        %v2275 = vpop.trf.xlu0
        %v2276 = vpop.trf.xlu0
        %v2277 = vpop.trf.xlu0
        %v2278 = vpop.trf.xlu0
        %v2279 = vpop.trf.xlu0
        %v2280 = vpop.trf.xlu0
        %v2281 = vpop.trf.xlu0
        %v2282 = vpop.trf.xlu0
        %v2283 = vpop.trf.xlu0
        %2284 = vxpose.xlu0.b32.start [1/16] %v2081, 128
        %2285 = vxpose.xlu0.b32.cont [2/16] 0.0, 128
        %2286 = vxpose.xlu0.b32.cont [3/16] 0.0, 128
        %2287 = vxpose.xlu0.b32.cont [4/16] 0.0, 128
        %2288 = vxpose.xlu0.b32.cont [5/16] 0.0, 128
        %2289 = vxpose.xlu0.b32.cont [6/16] 0.0, 128
        %2290 = vxpose.xlu0.b32.cont [7/16] 0.0, 128
        %2291 = vxpose.xlu0.b32.cont [8/16] 0.0, 128
        %2292 = vxpose.xlu0.b32.cont [9/16] 0.0, 128
        %2293 = vxpose.xlu0.b32.cont [10/16] 0.0, 128
        %2294 = vxpose.xlu0.b32.cont [11/16] 0.0, 128
        %2295 = vxpose.xlu0.b32.cont [12/16] 0.0, 128
        %2296 = vxpose.xlu0.b32.cont [13/16] 0.0, 128
        %2297 = vxpose.xlu0.b32.cont [14/16] 0.0, 128
        %2298 = vxpose.xlu0.b32.cont [15/16] 0.0, 128
        %2299 = vxpose.xlu0.b32.end [16/16] 0.0, 128
        %v2300 = vpop.trf.xlu0
        %v2301 = vpop.trf.xlu0
        %v2302 = vpop.trf.xlu0
        %v2303 = vpop.trf.xlu0
        %v2304 = vpop.trf.xlu0
        %v2305 = vpop.trf.xlu0
        %v2306 = vpop.trf.xlu0
        %v2307 = vpop.trf.xlu0
        %v2308 = vpop.trf.xlu0
        %v2309 = vpop.trf.xlu0
        %v2310 = vpop.trf.xlu0
        %v2311 = vpop.trf.xlu0
        %v2312 = vpop.trf.xlu0
        %v2313 = vpop.trf.xlu0
        %v2314 = vpop.trf.xlu0
        %v2315 = vpop.trf.xlu0
        %2316 = vxpose.xlu0.b32.start [1/16] %v2086, 128
        %2317 = vxpose.xlu0.b32.cont [2/16] 0.0, 128
        %2318 = vxpose.xlu0.b32.cont [3/16] 0.0, 128
        %2319 = vxpose.xlu0.b32.cont [4/16] 0.0, 128
        %2320 = vxpose.xlu0.b32.cont [5/16] 0.0, 128
        %2321 = vxpose.xlu0.b32.cont [6/16] 0.0, 128
        %2322 = vxpose.xlu0.b32.cont [7/16] 0.0, 128
        %2323 = vxpose.xlu0.b32.cont [8/16] 0.0, 128
        %2324 = vxpose.xlu0.b32.cont [9/16] 0.0, 128
        %2325 = vxpose.xlu0.b32.cont [10/16] 0.0, 128
        %2326 = vxpose.xlu0.b32.cont [11/16] 0.0, 128
        %2327 = vxpose.xlu0.b32.cont [12/16] 0.0, 128
        %2328 = vxpose.xlu0.b32.cont [13/16] 0.0, 128
        %2329 = vxpose.xlu0.b32.cont [14/16] 0.0, 128
        %2330 = vxpose.xlu0.b32.cont [15/16] 0.0, 128
        %2331 = vxpose.xlu0.b32.end [16/16] 0.0, 128
        %v2332 = vpop.trf.xlu0
        %v2333 = vpop.trf.xlu0
        %v2334 = vpop.trf.xlu0
        %v2335 = vpop.trf.xlu0
        %v2336 = vpop.trf.xlu0
        %v2337 = vpop.trf.xlu0
        %v2338 = vpop.trf.xlu0
        %v2339 = vpop.trf.xlu0
        %v2340 = vpop.trf.xlu0
        %v2341 = vpop.trf.xlu0
        %v2342 = vpop.trf.xlu0
        %v2343 = vpop.trf.xlu0
        %v2344 = vpop.trf.xlu0
        %v2345 = vpop.trf.xlu0
        %v2346 = vpop.trf.xlu0
        %v2347 = vpop.trf.xlu0
        %2348 = vxpose.xlu0.b32.start [1/16] %v2089, 128
        %2349 = vxpose.xlu0.b32.cont [2/16] 0.0, 128
        %2350 = vxpose.xlu0.b32.cont [3/16] 0.0, 128
        %2351 = vxpose.xlu0.b32.cont [4/16] 0.0, 128
        %2352 = vxpose.xlu0.b32.cont [5/16] 0.0, 128
        %2353 = vxpose.xlu0.b32.cont [6/16] 0.0, 128
        %2354 = vxpose.xlu0.b32.cont [7/16] 0.0, 128
        %2355 = vxpose.xlu0.b32.cont [8/16] 0.0, 128
        %2356 = vxpose.xlu0.b32.cont [9/16] 0.0, 128
        %2357 = vxpose.xlu0.b32.cont [10/16] 0.0, 128
        %2358 = vxpose.xlu0.b32.cont [11/16] 0.0, 128
        %2359 = vxpose.xlu0.b32.cont [12/16] 0.0, 128
        %2360 = vxpose.xlu0.b32.cont [13/16] 0.0, 128
        %2361 = vxpose.xlu0.b32.cont [14/16] 0.0, 128
        %2362 = vxpose.xlu0.b32.cont [15/16] 0.0, 128
        %2363 = vxpose.xlu0.b32.end [16/16] 0.0, 128
        %v2364 = vpop.trf.xlu0
        %v2365 = vpop.trf.xlu0
        %v2366 = vpop.trf.xlu0
        %v2367 = vpop.trf.xlu0
        %v2368 = vpop.trf.xlu0
        %v2369 = vpop.trf.xlu0
        %v2370 = vpop.trf.xlu0
        %v2371 = vpop.trf.xlu0
        %v2372 = vpop.trf.xlu0
        %v2373 = vpop.trf.xlu0
        %v2374 = vpop.trf.xlu0
        %v2375 = vpop.trf.xlu0
        %v2376 = vpop.trf.xlu0
        %v2377 = vpop.trf.xlu0
        %v2378 = vpop.trf.xlu0
        %v2379 = vpop.trf.xlu0
        %2380 = vxpose.xlu0.b32.start [1/16] %v2094, 128
        %2381 = vxpose.xlu0.b32.cont [2/16] 0.0, 128
        %2382 = vxpose.xlu0.b32.cont [3/16] 0.0, 128
        %2383 = vxpose.xlu0.b32.cont [4/16] 0.0, 128
        %2384 = vxpose.xlu0.b32.cont [5/16] 0.0, 128
        %2385 = vxpose.xlu0.b32.cont [6/16] 0.0, 128
        %2386 = vxpose.xlu0.b32.cont [7/16] 0.0, 128
        %2387 = vxpose.xlu0.b32.cont [8/16] 0.0, 128
        %2388 = vxpose.xlu0.b32.cont [9/16] 0.0, 128
        %2389 = vxpose.xlu0.b32.cont [10/16] 0.0, 128
        %2390 = vxpose.xlu0.b32.cont [11/16] 0.0, 128
        %2391 = vxpose.xlu0.b32.cont [12/16] 0.0, 128
        %2392 = vxpose.xlu0.b32.cont [13/16] 0.0, 128
        %2393 = vxpose.xlu0.b32.cont [14/16] 0.0, 128
        %2394 = vxpose.xlu0.b32.cont [15/16] 0.0, 128
        %2395 = vxpose.xlu0.b32.end [16/16] 0.0, 128
        %v2396 = vpop.trf.xlu0
        %v2397 = vpop.trf.xlu0
        %v2398 = vpop.trf.xlu0
        %v2399 = vpop.trf.xlu0
        %v2400 = vpop.trf.xlu0
        %v2401 = vpop.trf.xlu0
        %v2402 = vpop.trf.xlu0
        %v2403 = vpop.trf.xlu0
        %v2404 = vpop.trf.xlu0
        %v2405 = vpop.trf.xlu0
        %v2406 = vpop.trf.xlu0
        %v2407 = vpop.trf.xlu0
        %v2408 = vpop.trf.xlu0
        %v2409 = vpop.trf.xlu0
        %v2410 = vpop.trf.xlu0
        %v2411 = vpop.trf.xlu0
        %2412 = vxpose.xlu0.b32.start [1/16] %v2097, 128
        %2413 = vxpose.xlu0.b32.cont [2/16] 0.0, 128
        %2414 = vxpose.xlu0.b32.cont [3/16] 0.0, 128
        %2415 = vxpose.xlu0.b32.cont [4/16] 0.0, 128
        %2416 = vxpose.xlu0.b32.cont [5/16] 0.0, 128
        %2417 = vxpose.xlu0.b32.cont [6/16] 0.0, 128
        %2418 = vxpose.xlu0.b32.cont [7/16] 0.0, 128
        %2419 = vxpose.xlu0.b32.cont [8/16] 0.0, 128
        %2420 = vxpose.xlu0.b32.cont [9/16] 0.0, 128
        %2421 = vxpose.xlu0.b32.cont [10/16] 0.0, 128
        %2422 = vxpose.xlu0.b32.cont [11/16] 0.0, 128
        %2423 = vxpose.xlu0.b32.cont [12/16] 0.0, 128
        %2424 = vxpose.xlu0.b32.cont [13/16] 0.0, 128
        %2425 = vxpose.xlu0.b32.cont [14/16] 0.0, 128
        %2426 = vxpose.xlu0.b32.cont [15/16] 0.0, 128
        %2427 = vxpose.xlu0.b32.end [16/16] 0.0, 128
        %v2428 = vpop.trf.xlu0
        %v2429 = vpop.trf.xlu0
        %v2430 = vpop.trf.xlu0
        %v2431 = vpop.trf.xlu0
        %v2432 = vpop.trf.xlu0
        %v2433 = vpop.trf.xlu0
        %v2434 = vpop.trf.xlu0
        %v2435 = vpop.trf.xlu0
        %v2436 = vpop.trf.xlu0
        %v2437 = vpop.trf.xlu0
        %v2438 = vpop.trf.xlu0
        %v2439 = vpop.trf.xlu0
        %v2440 = vpop.trf.xlu0
        %v2441 = vpop.trf.xlu0
        %v2442 = vpop.trf.xlu0
        %v2443 = vpop.trf.xlu0
        %2444 = vxpose.xlu0.b32.start [1/16] %v2102, 128
        %2445 = vxpose.xlu0.b32.cont [2/16] 0.0, 128
        %2446 = vxpose.xlu0.b32.cont [3/16] 0.0, 128
        %2447 = vxpose.xlu0.b32.cont [4/16] 0.0, 128
        %2448 = vxpose.xlu0.b32.cont [5/16] 0.0, 128
        %2449 = vxpose.xlu0.b32.cont [6/16] 0.0, 128
        %2450 = vxpose.xlu0.b32.cont [7/16] 0.0, 128
        %2451 = vxpose.xlu0.b32.cont [8/16] 0.0, 128
        %2452 = vxpose.xlu0.b32.cont [9/16] 0.0, 128
        %2453 = vxpose.xlu0.b32.cont [10/16] 0.0, 128
        %2454 = vxpose.xlu0.b32.cont [11/16] 0.0, 128
        %2455 = vxpose.xlu0.b32.cont [12/16] 0.0, 128
        %2456 = vxpose.xlu0.b32.cont [13/16] 0.0, 128
        %2457 = vxpose.xlu0.b32.cont [14/16] 0.0, 128
        %2458 = vxpose.xlu0.b32.cont [15/16] 0.0, 128
        %2459 = vxpose.xlu0.b32.end [16/16] 0.0, 128
        %v2460 = vpop.trf.xlu0
        %v2461 = vpop.trf.xlu0
        %v2462 = vpop.trf.xlu0
        %v2463 = vpop.trf.xlu0
        %v2464 = vpop.trf.xlu0
        %v2465 = vpop.trf.xlu0
        %v2466 = vpop.trf.xlu0
        %v2467 = vpop.trf.xlu0
        %v2468 = vpop.trf.xlu0
        %v2469 = vpop.trf.xlu0
        %v2470 = vpop.trf.xlu0
        %v2471 = vpop.trf.xlu0
        %v2472 = vpop.trf.xlu0
        %v2473 = vpop.trf.xlu0
        %v2474 = vpop.trf.xlu0
        %v2475 = vpop.trf.xlu0
        %2476 = vxpose.xlu0.b32.start [1/16] %v2105, 128
        %2477 = vxpose.xlu0.b32.cont [2/16] 0.0, 128
        %2478 = vxpose.xlu0.b32.cont [3/16] 0.0, 128
        %2479 = vxpose.xlu0.b32.cont [4/16] 0.0, 128
        %2480 = vxpose.xlu0.b32.cont [5/16] 0.0, 128
        %2481 = vxpose.xlu0.b32.cont [6/16] 0.0, 128
        %2482 = vxpose.xlu0.b32.cont [7/16] 0.0, 128
        %2483 = vxpose.xlu0.b32.cont [8/16] 0.0, 128
        %2484 = vxpose.xlu0.b32.cont [9/16] 0.0, 128
        %2485 = vxpose.xlu0.b32.cont [10/16] 0.0, 128
        %2486 = vxpose.xlu0.b32.cont [11/16] 0.0, 128
        %2487 = vxpose.xlu0.b32.cont [12/16] 0.0, 128
        %2488 = vxpose.xlu0.b32.cont [13/16] 0.0, 128
        %2489 = vxpose.xlu0.b32.cont [14/16] 0.0, 128
        %2490 = vxpose.xlu0.b32.cont [15/16] 0.0, 128
        %2491 = vxpose.xlu0.b32.end [16/16] 0.0, 128
        %v2492 = vpop.trf.xlu0
        %v2493 = vpop.trf.xlu0
        %v2494 = vpop.trf.xlu0
        %v2495 = vpop.trf.xlu0
        %v2496 = vpop.trf.xlu0
        %v2497 = vpop.trf.xlu0
        %v2498 = vpop.trf.xlu0
        %v2499 = vpop.trf.xlu0
        %v2500 = vpop.trf.xlu0
        %v2501 = vpop.trf.xlu0
        %v2502 = vpop.trf.xlu0
        %v2503 = vpop.trf.xlu0
        %v2504 = vpop.trf.xlu0
        %v2505 = vpop.trf.xlu0
        %v2506 = vpop.trf.xlu0
        %v2507 = vpop.trf.xlu0
        %2508 = vxpose.xlu0.b32.start [1/16] %v2110, 128
        %2509 = vxpose.xlu0.b32.cont [2/16] 0.0, 128
        %2510 = vxpose.xlu0.b32.cont [3/16] 0.0, 128
        %2511 = vxpose.xlu0.b32.cont [4/16] 0.0, 128
        %2512 = vxpose.xlu0.b32.cont [5/16] 0.0, 128
        %2513 = vxpose.xlu0.b32.cont [6/16] 0.0, 128
        %2514 = vxpose.xlu0.b32.cont [7/16] 0.0, 128
        %2515 = vxpose.xlu0.b32.cont [8/16] 0.0, 128
        %2516 = vxpose.xlu0.b32.cont [9/16] 0.0, 128
        %2517 = vxpose.xlu0.b32.cont [10/16] 0.0, 128
        %2518 = vxpose.xlu0.b32.cont [11/16] 0.0, 128
        %2519 = vxpose.xlu0.b32.cont [12/16] 0.0, 128
        %2520 = vxpose.xlu0.b32.cont [13/16] 0.0, 128
        %2521 = vxpose.xlu0.b32.cont [14/16] 0.0, 128
        %2522 = vxpose.xlu0.b32.cont [15/16] 0.0, 128
        %2523 = vxpose.xlu0.b32.end [16/16] 0.0, 128
        %v2524 = vpop.trf.xlu0
        %v2525 = vpop.trf.xlu0
        %v2526 = vpop.trf.xlu0
        %v2527 = vpop.trf.xlu0
        %v2528 = vpop.trf.xlu0
        %v2529 = vpop.trf.xlu0
        %v2530 = vpop.trf.xlu0
        %v2531 = vpop.trf.xlu0
        %v2532 = vpop.trf.xlu0
        %v2533 = vpop.trf.xlu0
        %v2534 = vpop.trf.xlu0
        %v2535 = vpop.trf.xlu0
        %v2536 = vpop.trf.xlu0
        %v2537 = vpop.trf.xlu0
        %v2538 = vpop.trf.xlu0
        %v2539 = vpop.trf.xlu0
        %2540 = vxpose.xlu0.b32.start [1/16] %v2113, 128
        %2541 = vxpose.xlu0.b32.cont [2/16] 0.0, 128
        %2542 = vxpose.xlu0.b32.cont [3/16] 0.0, 128
        %2543 = vxpose.xlu0.b32.cont [4/16] 0.0, 128
        %2544 = vxpose.xlu0.b32.cont [5/16] 0.0, 128
        %2545 = vxpose.xlu0.b32.cont [6/16] 0.0, 128
        %2546 = vxpose.xlu0.b32.cont [7/16] 0.0, 128
        %2547 = vxpose.xlu0.b32.cont [8/16] 0.0, 128
        %2548 = vxpose.xlu0.b32.cont [9/16] 0.0, 128
        %2549 = vxpose.xlu0.b32.cont [10/16] 0.0, 128
        %2550 = vxpose.xlu0.b32.cont [11/16] 0.0, 128
        %2551 = vxpose.xlu0.b32.cont [12/16] 0.0, 128
        %2552 = vxpose.xlu0.b32.cont [13/16] 0.0, 128
        %2553 = vxpose.xlu0.b32.cont [14/16] 0.0, 128
        %2554 = vxpose.xlu0.b32.cont [15/16] 0.0, 128
        %2555 = vxpose.xlu0.b32.end [16/16] 0.0, 128
        %v2556 = vpop.trf.xlu0
        %v2557 = vpop.trf.xlu0
        %v2558 = vpop.trf.xlu0
        %v2559 = vpop.trf.xlu0
        %v2560 = vpop.trf.xlu0
        %v2561 = vpop.trf.xlu0
        %v2562 = vpop.trf.xlu0
        %v2563 = vpop.trf.xlu0
        %v2564 = vpop.trf.xlu0
        %v2565 = vpop.trf.xlu0
        %v2566 = vpop.trf.xlu0
        %v2567 = vpop.trf.xlu0
        %v2568 = vpop.trf.xlu0
        %v2569 = vpop.trf.xlu0
        %v2570 = vpop.trf.xlu0
        %v2571 = vpop.trf.xlu0
        %2572 = vxpose.xlu0.b32.start [1/16] %v2118, 128
        %2573 = vxpose.xlu0.b32.cont [2/16] 0.0, 128
        %2574 = vxpose.xlu0.b32.cont [3/16] 0.0, 128
        %2575 = vxpose.xlu0.b32.cont [4/16] 0.0, 128
        %2576 = vxpose.xlu0.b32.cont [5/16] 0.0, 128
        %2577 = vxpose.xlu0.b32.cont [6/16] 0.0, 128
        %2578 = vxpose.xlu0.b32.cont [7/16] 0.0, 128
        %2579 = vxpose.xlu0.b32.cont [8/16] 0.0, 128
        %2580 = vxpose.xlu0.b32.cont [9/16] 0.0, 128
        %2581 = vxpose.xlu0.b32.cont [10/16] 0.0, 128
        %2582 = vxpose.xlu0.b32.cont [11/16] 0.0, 128
        %2583 = vxpose.xlu0.b32.cont [12/16] 0.0, 128
        %2584 = vxpose.xlu0.b32.cont [13/16] 0.0, 128
        %2585 = vxpose.xlu0.b32.cont [14/16] 0.0, 128
        %2586 = vxpose.xlu0.b32.cont [15/16] 0.0, 128
        %2587 = vxpose.xlu0.b32.end [16/16] 0.0, 128
        %v2588 = vpop.trf.xlu0
        %v2589 = vpop.trf.xlu0
        %v2590 = vpop.trf.xlu0
        %v2591 = vpop.trf.xlu0
        %v2592 = vpop.trf.xlu0
        %v2593 = vpop.trf.xlu0
        %v2594 = vpop.trf.xlu0
        %v2595 = vpop.trf.xlu0
        %v2596 = vpop.trf.xlu0
        %v2597 = vpop.trf.xlu0
        %v2598 = vpop.trf.xlu0
        %v2599 = vpop.trf.xlu0
        %v2600 = vpop.trf.xlu0
        %v2601 = vpop.trf.xlu0
        %v2602 = vpop.trf.xlu0
        %v2603 = vpop.trf.xlu0
        %2604 = vxpose.xlu0.b32.start [1/16] %v2121, 128
        %2605 = vxpose.xlu0.b32.cont [2/16] 0.0, 128
        %2606 = vxpose.xlu0.b32.cont [3/16] 0.0, 128
        %2607 = vxpose.xlu0.b32.cont [4/16] 0.0, 128
        %2608 = vxpose.xlu0.b32.cont [5/16] 0.0, 128
        %2609 = vxpose.xlu0.b32.cont [6/16] 0.0, 128
        %2610 = vxpose.xlu0.b32.cont [7/16] 0.0, 128
        %2611 = vxpose.xlu0.b32.cont [8/16] 0.0, 128
        %2612 = vxpose.xlu0.b32.cont [9/16] 0.0, 128
        %2613 = vxpose.xlu0.b32.cont [10/16] 0.0, 128
        %2614 = vxpose.xlu0.b32.cont [11/16] 0.0, 128
        %2615 = vxpose.xlu0.b32.cont [12/16] 0.0, 128
        %2616 = vxpose.xlu0.b32.cont [13/16] 0.0, 128
        %2617 = vxpose.xlu0.b32.cont [14/16] 0.0, 128
        %2618 = vxpose.xlu0.b32.cont [15/16] 0.0, 128
        %2619 = vxpose.xlu0.b32.end [16/16] 0.0, 128
        %v2620 = vpop.trf.xlu0
        %v2621 = vpop.trf.xlu0
        %v2622 = vpop.trf.xlu0
        %v2623 = vpop.trf.xlu0
        %v2624 = vpop.trf.xlu0
        %v2625 = vpop.trf.xlu0
        %v2626 = vpop.trf.xlu0
        %v2627 = vpop.trf.xlu0
        %v2628 = vpop.trf.xlu0
        %v2629 = vpop.trf.xlu0
        %v2630 = vpop.trf.xlu0
        %v2631 = vpop.trf.xlu0
        %v2632 = vpop.trf.xlu0
        %v2633 = vpop.trf.xlu0
        %v2634 = vpop.trf.xlu0
        %v2635 = vpop.trf.xlu0
        %v2636 = vcombine.low %v2140, %v2204
        %v2638 = vunpack.c.l.s4 1983009808
        %v2639 = vunpack.c.0.s8 %v2638
        %v2640 = vlaneseq
        %v2641 = vshrl.u32 %v2640, 7
        %v2642 = vsub.s32 %v2639, %v2641
        %v2643 = vrot.slane %v2636, %v2642
        %v2644 = vcombine.low %v2172, %v2236
        %v2646 = vunpack.c.l.s4 1983009808
        %v2647 = vunpack.c.0.s8 %v2646
        %v2648 = vlaneseq
        %v2649 = vshrl.u32 %v2648, 7
        %v2650 = vsub.s32 %v2647, %v2649
        %v2651 = vrot.slane %v2644, %v2650
        %v2652 = vcombine.low %v2268, %v2332
        %v2654 = vunpack.c.l.s4 1983009808
        %v2655 = vunpack.c.0.s8 %v2654
        %v2656 = vlaneseq
        %v2657 = vshrl.u32 %v2656, 7
        %v2658 = vsub.s32 %v2655, %v2657
        %v2659 = vrot.slane %v2652, %v2658
        %v2660 = vcombine.low %v2300, %v2364
        %v2662 = vunpack.c.l.s4 1983009808
        %v2663 = vunpack.c.0.s8 %v2662
        %v2664 = vlaneseq
        %v2665 = vshrl.u32 %v2664, 7
        %v2666 = vsub.s32 %v2663, %v2665
        %v2667 = vrot.slane %v2660, %v2666
        %v2668 = vcombine.low %v2643, %v2651
        %v2669 = vcombine.high %v2643, %v2651
        %v2671 = vunpack.c.l.s4 1934713408
        %v2672 = vunpack.c.0.s8 %v2671
        %v2673 = vlaneseq
        %v2674 = vshrl.u32 %v2673, 7
        %v2675 = vsub.s32 %v2672, %v2674
        %v2676 = vrot.slane %v2668, %v2675
        %v2678 = vunpack.c.l.s4 1934713408
        %v2679 = vunpack.c.0.s8 %v2678
        %v2680 = vlaneseq
        %v2681 = vshrl.u32 %v2680, 7
        %v2682 = vsub.s32 %v2679, %v2681
        %v2683 = vrot.slane %v2669, %v2682
        %v2684 = vcombine.low %v2659, %v2667
        %v2685 = vcombine.high %v2659, %v2667
        %v2687 = vunpack.c.l.s4 1934713408
        %v2688 = vunpack.c.0.s8 %v2687
        %v2689 = vlaneseq
        %v2690 = vshrl.u32 %v2689, 7
        %v2691 = vsub.s32 %v2688, %v2690
        %v2692 = vrot.slane %v2684, %v2691
        %v2694 = vunpack.c.l.s4 1934713408
        %v2695 = vunpack.c.0.s8 %v2694
        %v2696 = vlaneseq
        %v2697 = vshrl.u32 %v2696, 7
        %v2698 = vsub.s32 %v2695, %v2697
        %v2699 = vrot.slane %v2685, %v2698
        %v2700 = vcombine.low %v2676, %v2692
        %v2701 = vcombine.high %v2676, %v2692
        %v2702 = vcombine.low %v2683, %v2699
        %v2703 = vcombine.high %v2683, %v2699
        %v2704 = vcombine.low %v2396, %v2460
        %v2706 = vunpack.c.l.s4 1983009808
        %v2707 = vunpack.c.0.s8 %v2706
        %v2708 = vlaneseq
        %v2709 = vshrl.u32 %v2708, 7
        %v2710 = vsub.s32 %v2707, %v2709
        %v2711 = vrot.slane %v2704, %v2710
        %v2712 = vcombine.low %v2428, %v2492
        %v2714 = vunpack.c.l.s4 1983009808
        %v2715 = vunpack.c.0.s8 %v2714
        %v2716 = vlaneseq
        %v2717 = vshrl.u32 %v2716, 7
        %v2718 = vsub.s32 %v2715, %v2717
        %v2719 = vrot.slane %v2712, %v2718
        %v2720 = vcombine.low %v2524, %v2588
        %v2722 = vunpack.c.l.s4 1983009808
        %v2723 = vunpack.c.0.s8 %v2722
        %v2724 = vlaneseq
        %v2725 = vshrl.u32 %v2724, 7
        %v2726 = vsub.s32 %v2723, %v2725
        %v2727 = vrot.slane %v2720, %v2726
        %v2728 = vcombine.low %v2556, %v2620
        %v2730 = vunpack.c.l.s4 1983009808
        %v2731 = vunpack.c.0.s8 %v2730
        %v2732 = vlaneseq
        %v2733 = vshrl.u32 %v2732, 7
        %v2734 = vsub.s32 %v2731, %v2733
        %v2735 = vrot.slane %v2728, %v2734
        %v2736 = vcombine.low %v2711, %v2719
        %v2737 = vcombine.high %v2711, %v2719
        %v2739 = vunpack.c.l.s4 1934713408
        %v2740 = vunpack.c.0.s8 %v2739
        %v2741 = vlaneseq
        %v2742 = vshrl.u32 %v2741, 7
        %v2743 = vsub.s32 %v2740, %v2742
        %v2744 = vrot.slane %v2736, %v2743
        %v2746 = vunpack.c.l.s4 1934713408
        %v2747 = vunpack.c.0.s8 %v2746
        %v2748 = vlaneseq
        %v2749 = vshrl.u32 %v2748, 7
        %v2750 = vsub.s32 %v2747, %v2749
        %v2751 = vrot.slane %v2737, %v2750
        %v2752 = vcombine.low %v2727, %v2735
        %v2753 = vcombine.high %v2727, %v2735
        %v2755 = vunpack.c.l.s4 1934713408
        %v2756 = vunpack.c.0.s8 %v2755
        %v2757 = vlaneseq
        %v2758 = vshrl.u32 %v2757, 7
        %v2759 = vsub.s32 %v2756, %v2758
        %v2760 = vrot.slane %v2752, %v2759
        %v2762 = vunpack.c.l.s4 1934713408
        %v2763 = vunpack.c.0.s8 %v2762
        %v2764 = vlaneseq
        %v2765 = vshrl.u32 %v2764, 7
        %v2766 = vsub.s32 %v2763, %v2765
        %v2767 = vrot.slane %v2753, %v2766
        %v2768 = vcombine.low %v2744, %v2760
        %v2769 = vcombine.high %v2744, %v2760
        %v2770 = vcombine.low %v2751, %v2767
        %v2771 = vcombine.high %v2751, %v2767
        %2774 = vrot.lane.b32.xlu0 %v2701, 8
        %v2775 = vpop.permute.xlu0 %2774
        %2776 = vrot.lane.b32.xlu0 %v2769, 8
        %v2777 = vpop.permute.xlu0 %2776
        %2782 = vrot.lane.b32.xlu0 %v2702, 16
        %v2783 = vpop.permute.xlu0 %2782
        %2784 = vrot.lane.b32.xlu0 %v2770, 16
        %v2785 = vpop.permute.xlu0 %2784
        %2790 = vrot.lane.b32.xlu0 %v2703, 24
        %v2791 = vpop.permute.xlu0 %2790
        %2792 = vrot.lane.b32.xlu0 %v2771, 24
        %v2793 = vpop.permute.xlu0 %2792
        %vm2796 = vcmask 64512
        %v2797 = vsel %vm2796, %v2700, %v2775
        %v2798 = vsel %vm2796, %v2768, %v2777
        %vm2799 = vcmask 130048
        %v2800 = vsel %vm2799, %v2797, %v2783
        %v2801 = vsel %vm2799, %v2798, %v2785
        %vm2802 = vcmask 195584
        %v2803 = vsel %vm2802, %v2800, %v2791
        %v2804 = vsel %vm2802, %v2801, %v2793
        %v2805 = vpack.c.bf16 %v2804, %v2803
        %v2807 = vunpack.c.l.b16 %v2805
        %v2808 = vunpack.c.h.b16 %v2805
        %v2809 = vpack.c.b16 %v2807, %v2807
        %v2810 = vpack.c.b16 %v2808, %v2808
        %vm2813 = vcmask 257024
        %2814 = vst.msk [vmem:[%s827] sm:$0xf] %vm2813, %v2809
        %2815 = vst.msk [vmem:[%s827 + $0x4] sm:$0xf] %vm2813, %v2810
        %vm2816 = vcmask 60416
        %v2817 = vsel %vm2816, %v2140, -inf
        %2818 = vmax.xlane.f32.xlu0 %v2817
        %v2819 = vpop.xlane.xlu0 %2818
        %v2820 = vsel %vm2816, %v2172, -inf
        %2821 = vmax.xlane.f32.xlu0 %v2820
        %v2822 = vpop.xlane.xlu0 %2821
        %v2823 = vsel %vm2816, %v2204, -inf
        %2824 = vmax.xlane.f32.xlu0 %v2823
        %v2825 = vpop.xlane.xlu0 %2824
        %v2826 = vsel %vm2816, %v2236, -inf
        %2827 = vmax.xlane.f32.xlu0 %v2826
        %v2828 = vpop.xlane.xlu0 %2827
        %v2829 = vsel %vm2816, %v2268, -inf
        %2830 = vmax.xlane.f32.xlu0 %v2829
        %v2831 = vpop.xlane.xlu0 %2830
        %v2832 = vsel %vm2816, %v2300, -inf
        %2833 = vmax.xlane.f32.xlu0 %v2832
        %v2834 = vpop.xlane.xlu0 %2833
        %v2835 = vsel %vm2816, %v2332, -inf
        %2836 = vmax.xlane.f32.xlu0 %v2835
        %v2837 = vpop.xlane.xlu0 %2836
        %v2838 = vsel %vm2816, %v2364, -inf
        %2839 = vmax.xlane.f32.xlu0 %v2838
        %v2840 = vpop.xlane.xlu0 %2839
        %v2841 = vsel %vm2816, %v2396, -inf
        %2842 = vmax.xlane.f32.xlu0 %v2841
        %v2843 = vpop.xlane.xlu0 %2842
        %v2844 = vsel %vm2816, %v2428, -inf
        %2845 = vmax.xlane.f32.xlu0 %v2844
        %v2846 = vpop.xlane.xlu0 %2845
        %v2847 = vsel %vm2816, %v2460, -inf
        %2848 = vmax.xlane.f32.xlu0 %v2847
        %v2849 = vpop.xlane.xlu0 %2848
        %v2850 = vsel %vm2816, %v2492, -inf
        %2851 = vmax.xlane.f32.xlu0 %v2850
        %v2852 = vpop.xlane.xlu0 %2851
        %v2853 = vsel %vm2816, %v2524, -inf
        %2854 = vmax.xlane.f32.xlu0 %v2853
        %v2855 = vpop.xlane.xlu0 %2854
        %v2856 = vsel %vm2816, %v2556, -inf
        %2857 = vmax.xlane.f32.xlu0 %v2856
        %v2858 = vpop.xlane.xlu0 %2857
        %v2859 = vsel %vm2816, %v2588, -inf
        %2860 = vmax.xlane.f32.xlu0 %v2859
        %v2861 = vpop.xlane.xlu0 %2860
        %v2862 = vsel %vm2816, %v2620, -inf
        %2863 = vmax.xlane.f32.xlu0 %v2862
        %v2864 = vpop.xlane.xlu0 %2863
        %v2865 = vsub.f32 %v2140, %v2819
        %v2866 = vsub.f32 %v2172, %v2822
        %v2867 = vsub.f32 %v2204, %v2825
        %v2868 = vsub.f32 %v2236, %v2828
        %v2869 = vsub.f32 %v2268, %v2831
        %v2870 = vsub.f32 %v2300, %v2834
        %v2871 = vsub.f32 %v2332, %v2837
        %v2872 = vsub.f32 %v2364, %v2840
        %v2873 = vsub.f32 %v2396, %v2843
        %v2874 = vsub.f32 %v2428, %v2846
        %v2875 = vsub.f32 %v2460, %v2849
        %v2876 = vsub.f32 %v2492, %v2852
        %v2877 = vsub.f32 %v2524, %v2855
        %v2878 = vsub.f32 %v2556, %v2858
        %v2879 = vsub.f32 %v2588, %v2861
        %v2880 = vsub.f32 %v2620, %v2864
        %v2881 = vmul.f32 %v2865, 1.442695
        %v2882 = vpow.pop %v2881
        %v2883 = vmul.f32 %v2866, 1.442695
        %v2884 = vpow.pop %v2883
        %v2885 = vmul.f32 %v2867, 1.442695
        %v2886 = vpow.pop %v2885
        %v2887 = vmul.f32 %v2868, 1.442695
        %v2888 = vpow.pop %v2887
        %v2889 = vmul.f32 %v2869, 1.442695
        %v2890 = vpow.pop %v2889
        %v2891 = vmul.f32 %v2870, 1.442695
        %v2892 = vpow.pop %v2891
        %v2893 = vmul.f32 %v2871, 1.442695
        %v2894 = vpow.pop %v2893
        %v2895 = vmul.f32 %v2872, 1.442695
        %v2896 = vpow.pop %v2895
        %v2897 = vmul.f32 %v2873, 1.442695
        %v2898 = vpow.pop %v2897
        %v2899 = vmul.f32 %v2874, 1.442695
        %v2900 = vpow.pop %v2899
        %v2901 = vmul.f32 %v2875, 1.442695
        %v2902 = vpow.pop %v2901
        %v2903 = vmul.f32 %v2876, 1.442695
        %v2904 = vpow.pop %v2903
        %v2905 = vmul.f32 %v2877, 1.442695
        %v2906 = vpow.pop %v2905
        %v2907 = vmul.f32 %v2878, 1.442695
        %v2908 = vpow.pop %v2907
        %v2909 = vmul.f32 %v2879, 1.442695
        %v2910 = vpow.pop %v2909
        %v2911 = vmul.f32 %v2880, 1.442695
        %v2912 = vpow.pop %v2911
        %v2913 = vsel %vm2816, %v2882, 0.0
        %2914 = vadd.xlane.f32.xlu0 %v2913
        %v2915 = vpop.xlane.xlu0 %2914
        %v2916 = vsel %vm2816, %v2884, 0.0
        %2917 = vadd.xlane.f32.xlu0 %v2916
        %v2918 = vpop.xlane.xlu0 %2917
        %v2919 = vsel %vm2816, %v2886, 0.0
        %2920 = vadd.xlane.f32.xlu0 %v2919
        %v2921 = vpop.xlane.xlu0 %2920
        %v2922 = vsel %vm2816, %v2888, 0.0
        %2923 = vadd.xlane.f32.xlu0 %v2922
        %v2924 = vpop.xlane.xlu0 %2923
        %v2925 = vsel %vm2816, %v2890, 0.0
        %2926 = vadd.xlane.f32.xlu0 %v2925
        %v2927 = vpop.xlane.xlu0 %2926
        %v2928 = vsel %vm2816, %v2892, 0.0
        %2929 = vadd.xlane.f32.xlu0 %v2928
        %v2930 = vpop.xlane.xlu0 %2929
        %v2931 = vsel %vm2816, %v2894, 0.0
        %2932 = vadd.xlane.f32.xlu0 %v2931
        %v2933 = vpop.xlane.xlu0 %2932
        %v2934 = vsel %vm2816, %v2896, 0.0
        %2935 = vadd.xlane.f32.xlu0 %v2934
        %v2936 = vpop.xlane.xlu0 %2935
        %v2937 = vsel %vm2816, %v2898, 0.0
        %2938 = vadd.xlane.f32.xlu0 %v2937
        %v2939 = vpop.xlane.xlu0 %2938
        %v2940 = vsel %vm2816, %v2900, 0.0
        %2941 = vadd.xlane.f32.xlu0 %v2940
        %v2942 = vpop.xlane.xlu0 %2941
        %v2943 = vsel %vm2816, %v2902, 0.0
        %2944 = vadd.xlane.f32.xlu0 %v2943
        %v2945 = vpop.xlane.xlu0 %2944
        %v2946 = vsel %vm2816, %v2904, 0.0
        %2947 = vadd.xlane.f32.xlu0 %v2946
        %v2948 = vpop.xlane.xlu0 %2947
        %v2949 = vsel %vm2816, %v2906, 0.0
        %2950 = vadd.xlane.f32.xlu0 %v2949
        %v2951 = vpop.xlane.xlu0 %2950
        %v2952 = vsel %vm2816, %v2908, 0.0
        %2953 = vadd.xlane.f32.xlu0 %v2952
        %v2954 = vpop.xlane.xlu0 %2953
        %v2955 = vsel %vm2816, %v2910, 0.0
        %2956 = vadd.xlane.f32.xlu0 %v2955
        %v2957 = vpop.xlane.xlu0 %2956
        %v2958 = vsel %vm2816, %v2912, 0.0
        %2959 = vadd.xlane.f32.xlu0 %v2958
        %v2960 = vpop.xlane.xlu0 %2959
        %v2961 = vrcp.pop %v2915
        %v2962 = vrcp.pop %v2918
        %v2963 = vrcp.pop %v2921
        %v2964 = vrcp.pop %v2924
        %v2965 = vrcp.pop %v2927
        %v2966 = vrcp.pop %v2930
        %v2967 = vrcp.pop %v2933
        %v2968 = vrcp.pop %v2936
        %v2969 = vrcp.pop %v2939
        %v2970 = vrcp.pop %v2942
        %v2971 = vrcp.pop %v2945
        %v2972 = vrcp.pop %v2948
        %v2973 = vrcp.pop %v2951
        %v2974 = vrcp.pop %v2954
        %v2975 = vrcp.pop %v2957
        %v2976 = vrcp.pop %v2960
        %v2977 = vmul.f32 %v2882, %v2961
        %v2978 = vmul.f32 %v2884, %v2962
        %v2979 = vmul.f32 %v2886, %v2963
        %v2980 = vmul.f32 %v2888, %v2964
        %v2981 = vmul.f32 %v2890, %v2965
        %v2982 = vmul.f32 %v2892, %v2966
        %v2983 = vmul.f32 %v2894, %v2967
        %v2984 = vmul.f32 %v2896, %v2968
        %v2985 = vmul.f32 %v2898, %v2969
        %v2986 = vmul.f32 %v2900, %v2970
        %v2987 = vmul.f32 %v2902, %v2971
        %v2988 = vmul.f32 %v2904, %v2972
        %v2989 = vmul.f32 %v2906, %v2973
        %v2990 = vmul.f32 %v2908, %v2974
        %v2991 = vmul.f32 %v2910, %v2975
        %v2992 = vmul.f32 %v2912, %v2976
        %v2993 = vpack.c.bf16 %v850, %v850
        %v2994 = vld [vmem:[%s15] sm:$0x3]
        %v2997 = vunpack.c.l.s4 1966171168
        %v2998 = vunpack.c.0.s8 %v2997
        %v2999 = vlaneseq
        %v3000 = vshrl.u32 %v2999, 7
        %v3001 = vsub.s32 %v2998, %v3000
        %v3002 = vrot.slane %v2994, %v3001
        %v3003 = vcombine.high %v3002, %v3002
        %v3004 = vunpack.i.l.s16 %v3002
        %v3005 = vunpack.i.h.s16 %v3002
        %v3006 = vunpack.i.l.s16 %v3003
        %v3007 = vunpack.i.h.s16 %v3003
        %v3008 = vpack.i.b16 %v3004, %v3004
        %v3009 = vpack.i.b16 %v3005, %v3005
        %v3010 = vpack.i.b16 %v3006, %v3006
        %v3011 = vpack.i.b16 %v3007, %v3007
        %v3012 = vlaneseq
        %v3013 = vshrl.u32 %v3012, 7
        %v3014 = vsub.s32 0, %v3013
        %v3015 = vrot.slane %v3008, %v3014
        %v3016 = vlaneseq
        %v3017 = vshrl.u32 %v3016, 7
        %v3018 = vsub.s32 0, %v3017
        %v3019 = vrot.slane %v3009, %v3018
        %v3020 = vlaneseq
        %v3021 = vshrl.u32 %v3020, 7
        %v3022 = vsub.s32 0, %v3021
        %v3023 = vrot.slane %v3010, %v3022
        %v3024 = vlaneseq
        %v3025 = vshrl.u32 %v3024, 7
        %v3026 = vsub.s32 0, %v3025
        %v3027 = vrot.slane %v3011, %v3026
        %v3029 = vpack.i.b16 %v3015, %v3015
        %v3031 = vlaneseq
        %v3032 = vshrl.u32 %v3031, 7
        %v3033 = vsub.s32 0, %v3032
        %v3034 = vrot.slane %v3029, %v3033
        %v3036 = vpack.i.b16 %v3019, %v3019
        %v3038 = vlaneseq
        %v3039 = vshrl.u32 %v3038, 7
        %v3040 = vsub.s32 0, %v3039
        %v3041 = vrot.slane %v3036, %v3040
        %v3043 = vpack.i.b16 %v3023, %v3023
        %v3045 = vlaneseq
        %v3046 = vshrl.u32 %v3045, 7
        %v3047 = vsub.s32 0, %v3046
        %v3048 = vrot.slane %v3043, %v3047
        %v3050 = vpack.i.b16 %v3027, %v3027
        %v3052 = vlaneseq
        %v3053 = vshrl.u32 %v3052, 7
        %v3054 = vsub.s32 0, %v3053
        %v3055 = vrot.slane %v3050, %v3054
        %v3056 = vmul.bf16 %v2993, %v3034
        %v3057 = vmul.bf16 %v2993, %v3041
        %v3058 = vmul.bf16 %v2993, %v3048
        %v3059 = vmul.bf16 %v2993, %v3055
        %v3060 = vcombine.low %v2977, %v2979
        %v3062 = vunpack.c.l.s4 1983009808
        %v3063 = vunpack.c.0.s8 %v3062
        %v3064 = vlaneseq
        %v3065 = vshrl.u32 %v3064, 7
        %v3066 = vsub.s32 %v3063, %v3065
        %v3067 = vrot.slane %v3060, %v3066
        %v3068 = vcombine.low %v2978, %v2980
        %v3070 = vunpack.c.l.s4 1983009808
        %v3071 = vunpack.c.0.s8 %v3070
        %v3072 = vlaneseq
        %v3073 = vshrl.u32 %v3072, 7
        %v3074 = vsub.s32 %v3071, %v3073
        %v3075 = vrot.slane %v3068, %v3074
        %v3076 = vcombine.low %v2981, %v2983
        %v3078 = vunpack.c.l.s4 1983009808
        %v3079 = vunpack.c.0.s8 %v3078
        %v3080 = vlaneseq
        %v3081 = vshrl.u32 %v3080, 7
        %v3082 = vsub.s32 %v3079, %v3081
        %v3083 = vrot.slane %v3076, %v3082
        %v3084 = vcombine.low %v2982, %v2984
        %v3086 = vunpack.c.l.s4 1983009808
        %v3087 = vunpack.c.0.s8 %v3086
        %v3088 = vlaneseq
        %v3089 = vshrl.u32 %v3088, 7
        %v3090 = vsub.s32 %v3087, %v3089
        %v3091 = vrot.slane %v3084, %v3090
        %v3092 = vcombine.low %v3067, %v3075
        %v3093 = vcombine.high %v3067, %v3075
        %v3095 = vunpack.c.l.s4 1934713408
        %v3096 = vunpack.c.0.s8 %v3095
        %v3097 = vlaneseq
        %v3098 = vshrl.u32 %v3097, 7
        %v3099 = vsub.s32 %v3096, %v3098
        %v3100 = vrot.slane %v3092, %v3099
        %v3102 = vunpack.c.l.s4 1934713408
        %v3103 = vunpack.c.0.s8 %v3102
        %v3104 = vlaneseq
        %v3105 = vshrl.u32 %v3104, 7
        %v3106 = vsub.s32 %v3103, %v3105
        %v3107 = vrot.slane %v3093, %v3106
        %v3108 = vcombine.low %v3083, %v3091
        %v3109 = vcombine.high %v3083, %v3091
        %v3111 = vunpack.c.l.s4 1934713408
        %v3112 = vunpack.c.0.s8 %v3111
        %v3113 = vlaneseq
        %v3114 = vshrl.u32 %v3113, 7
        %v3115 = vsub.s32 %v3112, %v3114
        %v3116 = vrot.slane %v3108, %v3115
        %v3118 = vunpack.c.l.s4 1934713408
        %v3119 = vunpack.c.0.s8 %v3118
        %v3120 = vlaneseq
        %v3121 = vshrl.u32 %v3120, 7
        %v3122 = vsub.s32 %v3119, %v3121
        %v3123 = vrot.slane %v3109, %v3122
        %v3124 = vcombine.low %v3100, %v3116
        %v3125 = vcombine.high %v3100, %v3116
        %v3126 = vcombine.low %v3107, %v3123
        %v3127 = vcombine.high %v3107, %v3123
        %v3128 = vcombine.low %v2985, %v2987
        %v3130 = vunpack.c.l.s4 1983009808
        %v3131 = vunpack.c.0.s8 %v3130
        %v3132 = vlaneseq
        %v3133 = vshrl.u32 %v3132, 7
        %v3134 = vsub.s32 %v3131, %v3133
        %v3135 = vrot.slane %v3128, %v3134
        %v3136 = vcombine.low %v2986, %v2988
        %v3138 = vunpack.c.l.s4 1983009808
        %v3139 = vunpack.c.0.s8 %v3138
        %v3140 = vlaneseq
        %v3141 = vshrl.u32 %v3140, 7
        %v3142 = vsub.s32 %v3139, %v3141
        %v3143 = vrot.slane %v3136, %v3142
        %v3144 = vcombine.low %v2989, %v2991
        %v3146 = vunpack.c.l.s4 1983009808
        %v3147 = vunpack.c.0.s8 %v3146
        %v3148 = vlaneseq
        %v3149 = vshrl.u32 %v3148, 7
        %v3150 = vsub.s32 %v3147, %v3149
        %v3151 = vrot.slane %v3144, %v3150
        %v3152 = vcombine.low %v2990, %v2992
        %v3154 = vunpack.c.l.s4 1983009808
        %v3155 = vunpack.c.0.s8 %v3154
        %v3156 = vlaneseq
        %v3157 = vshrl.u32 %v3156, 7
        %v3158 = vsub.s32 %v3155, %v3157
        %v3159 = vrot.slane %v3152, %v3158
        %v3160 = vcombine.low %v3135, %v3143
        %v3161 = vcombine.high %v3135, %v3143
        %v3163 = vunpack.c.l.s4 1934713408
        %v3164 = vunpack.c.0.s8 %v3163
        %v3165 = vlaneseq
        %v3166 = vshrl.u32 %v3165, 7
        %v3167 = vsub.s32 %v3164, %v3166
        %v3168 = vrot.slane %v3160, %v3167
        %v3170 = vunpack.c.l.s4 1934713408
        %v3171 = vunpack.c.0.s8 %v3170
        %v3172 = vlaneseq
        %v3173 = vshrl.u32 %v3172, 7
        %v3174 = vsub.s32 %v3171, %v3173
        %v3175 = vrot.slane %v3161, %v3174
        %v3176 = vcombine.low %v3151, %v3159
        %v3177 = vcombine.high %v3151, %v3159
        %v3179 = vunpack.c.l.s4 1934713408
        %v3180 = vunpack.c.0.s8 %v3179
        %v3181 = vlaneseq
        %v3182 = vshrl.u32 %v3181, 7
        %v3183 = vsub.s32 %v3180, %v3182
        %v3184 = vrot.slane %v3176, %v3183
        %v3186 = vunpack.c.l.s4 1934713408
        %v3187 = vunpack.c.0.s8 %v3186
        %v3188 = vlaneseq
        %v3189 = vshrl.u32 %v3188, 7
        %v3190 = vsub.s32 %v3187, %v3189
        %v3191 = vrot.slane %v3177, %v3190
        %v3192 = vcombine.low %v3168, %v3184
        %v3193 = vcombine.high %v3168, %v3184
        %v3194 = vcombine.low %v3175, %v3191
        %v3195 = vcombine.high %v3175, %v3191
        %3198 = vrot.lane.b32.xlu0 %v3125, 8
        %v3199 = vpop.permute.xlu0 %3198
        %3200 = vrot.lane.b32.xlu0 %v3193, 8
        %v3201 = vpop.permute.xlu0 %3200
        %3206 = vrot.lane.b32.xlu0 %v3126, 16
        %v3207 = vpop.permute.xlu0 %3206
        %3208 = vrot.lane.b32.xlu0 %v3194, 16
        %v3209 = vpop.permute.xlu0 %3208
        %3214 = vrot.lane.b32.xlu0 %v3127, 24
        %v3215 = vpop.permute.xlu0 %3214
        %3216 = vrot.lane.b32.xlu0 %v3195, 24
        %v3217 = vpop.permute.xlu0 %3216
        %v3220 = vsel %vm2796, %v3124, %v3199
        %v3221 = vsel %vm2796, %v3192, %v3201
        %v3222 = vsel %vm2799, %v3220, %v3207
        %v3223 = vsel %vm2799, %v3221, %v3209
        %v3224 = vsel %vm2802, %v3222, %v3215
        %v3225 = vsel %vm2802, %v3223, %v3217
        %v3226 = vpack.c.bf16 %v3225, %v3224
        %v3243 = vlaneseq
        %v3244 = vand.u32 %v3243, 127
        %v3245 = vlaneseq
        %v3246 = vshrl.u32 %v3245, 7
        %v3247 = vsub.s32 %v3244, %v3246
        %v3248 = vrot.slane %v2819, %v3247
        %v3249 = vlaneseq
        %v3250 = vshrl.u32 %v3249, 7
        %v3251 = vsub.s32 %v3244, %v3250
        %v3252 = vrot.slane %v2822, %v3251
        %v3253 = vlaneseq
        %v3254 = vshrl.u32 %v3253, 7
        %v3255 = vsub.s32 %v3244, %v3254
        %v3256 = vrot.slane %v2825, %v3255
        %v3257 = vlaneseq
        %v3258 = vshrl.u32 %v3257, 7
        %v3259 = vsub.s32 %v3244, %v3258
        %v3260 = vrot.slane %v2828, %v3259
        %v3261 = vlaneseq
        %v3262 = vshrl.u32 %v3261, 7
        %v3263 = vsub.s32 %v3244, %v3262
        %v3264 = vrot.slane %v2831, %v3263
        %v3265 = vlaneseq
        %v3266 = vshrl.u32 %v3265, 7
        %v3267 = vsub.s32 %v3244, %v3266
        %v3268 = vrot.slane %v2834, %v3267
        %v3269 = vlaneseq
        %v3270 = vshrl.u32 %v3269, 7
        %v3271 = vsub.s32 %v3244, %v3270
        %v3272 = vrot.slane %v2837, %v3271
        %v3273 = vlaneseq
        %v3274 = vshrl.u32 %v3273, 7
        %v3275 = vsub.s32 %v3244, %v3274
        %v3276 = vrot.slane %v2840, %v3275
        %v3277 = vlaneseq
        %v3278 = vshrl.u32 %v3277, 7
        %v3279 = vsub.s32 %v3244, %v3278
        %v3280 = vrot.slane %v2843, %v3279
        %v3281 = vlaneseq
        %v3282 = vshrl.u32 %v3281, 7
        %v3283 = vsub.s32 %v3244, %v3282
        %v3284 = vrot.slane %v2846, %v3283
        %v3285 = vlaneseq
        %v3286 = vshrl.u32 %v3285, 7
        %v3287 = vsub.s32 %v3244, %v3286
        %v3288 = vrot.slane %v2849, %v3287
        %v3289 = vlaneseq
        %v3290 = vshrl.u32 %v3289, 7
        %v3291 = vsub.s32 %v3244, %v3290
        %v3292 = vrot.slane %v2852, %v3291
        %v3293 = vlaneseq
        %v3294 = vshrl.u32 %v3293, 7
        %v3295 = vsub.s32 %v3244, %v3294
        %v3296 = vrot.slane %v2855, %v3295
        %v3297 = vlaneseq
        %v3298 = vshrl.u32 %v3297, 7
        %v3299 = vsub.s32 %v3244, %v3298
        %v3300 = vrot.slane %v2858, %v3299
        %v3301 = vlaneseq
        %v3302 = vshrl.u32 %v3301, 7
        %v3303 = vsub.s32 %v3244, %v3302
        %v3304 = vrot.slane %v2861, %v3303
        %v3305 = vlaneseq
        %v3306 = vshrl.u32 %v3305, 7
        %v3307 = vsub.s32 %v3244, %v3306
        %v3308 = vrot.slane %v2864, %v3307
        %vm3309 = vcmask 1041409
        %vm3310 = vcmask 1042434
        %v3311 = vsel %vm3310, %v3248, %v3248
        %vm3312 = vcmask 1043459
        %v3313 = vsel %vm3312, %v3248, %v3311
        %vm3314 = vcmask 1044484
        %v3315 = vsel %vm3314, %v3248, %v3313
        %vm3316 = vcmask 1045509
        %v3317 = vsel %vm3316, %v3248, %v3315
        %vm3318 = vcmask 1046534
        %v3319 = vsel %vm3318, %v3248, %v3317
        %vm3320 = vcmask 1047559
        %v3321 = vsel %vm3320, %v3248, %v3319
        %v3322 = vsel %vm3310, %v3252, %v3252
        %v3323 = vsel %vm3312, %v3252, %v3322
        %v3324 = vsel %vm3314, %v3252, %v3323
        %v3325 = vsel %vm3316, %v3252, %v3324
        %v3326 = vsel %vm3318, %v3252, %v3325
        %v3327 = vsel %vm3320, %v3252, %v3326
        %v3328 = vsel %vm3310, %v3256, %v3256
        %v3329 = vsel %vm3312, %v3256, %v3328
        %v3330 = vsel %vm3314, %v3256, %v3329
        %v3331 = vsel %vm3316, %v3256, %v3330
        %v3332 = vsel %vm3318, %v3256, %v3331
        %v3333 = vsel %vm3320, %v3256, %v3332
        %v3334 = vsel %vm3310, %v3260, %v3260
        %v3335 = vsel %vm3312, %v3260, %v3334
        %v3336 = vsel %vm3314, %v3260, %v3335
        %v3337 = vsel %vm3316, %v3260, %v3336
        %v3338 = vsel %vm3318, %v3260, %v3337
        %v3339 = vsel %vm3320, %v3260, %v3338
        %v3340 = vsel %vm3310, %v3264, %v3264
        %v3341 = vsel %vm3312, %v3264, %v3340
        %v3342 = vsel %vm3314, %v3264, %v3341
        %v3343 = vsel %vm3316, %v3264, %v3342
        %v3344 = vsel %vm3318, %v3264, %v3343
        %v3345 = vsel %vm3320, %v3264, %v3344
        %v3346 = vsel %vm3310, %v3268, %v3268
        %v3347 = vsel %vm3312, %v3268, %v3346
        %v3348 = vsel %vm3314, %v3268, %v3347
        %v3349 = vsel %vm3316, %v3268, %v3348
        %v3350 = vsel %vm3318, %v3268, %v3349
        %v3351 = vsel %vm3320, %v3268, %v3350
        %v3352 = vsel %vm3310, %v3272, %v3272
        %v3353 = vsel %vm3312, %v3272, %v3352
        %v3354 = vsel %vm3314, %v3272, %v3353
        %v3355 = vsel %vm3316, %v3272, %v3354
        %v3356 = vsel %vm3318, %v3272, %v3355
        %v3357 = vsel %vm3320, %v3272, %v3356
        %v3358 = vsel %vm3310, %v3276, %v3276
        %v3359 = vsel %vm3312, %v3276, %v3358
        %v3360 = vsel %vm3314, %v3276, %v3359
        %v3361 = vsel %vm3316, %v3276, %v3360
        %v3362 = vsel %vm3318, %v3276, %v3361
        %v3363 = vsel %vm3320, %v3276, %v3362
        %v3364 = vsel %vm3310, %v3280, %v3280
        %v3365 = vsel %vm3312, %v3280, %v3364
        %v3366 = vsel %vm3314, %v3280, %v3365
        %v3367 = vsel %vm3316, %v3280, %v3366
        %v3368 = vsel %vm3318, %v3280, %v3367
        %v3369 = vsel %vm3320, %v3280, %v3368
        %v3370 = vsel %vm3310, %v3284, %v3284
        %v3371 = vsel %vm3312, %v3284, %v3370
        %v3372 = vsel %vm3314, %v3284, %v3371
        %v3373 = vsel %vm3316, %v3284, %v3372
        %v3374 = vsel %vm3318, %v3284, %v3373
        %v3375 = vsel %vm3320, %v3284, %v3374
        %v3376 = vsel %vm3310, %v3288, %v3288
        %v3377 = vsel %vm3312, %v3288, %v3376
        %v3378 = vsel %vm3314, %v3288, %v3377
        %v3379 = vsel %vm3316, %v3288, %v3378
        %v3380 = vsel %vm3318, %v3288, %v3379
        %v3381 = vsel %vm3320, %v3288, %v3380
        %v3382 = vsel %vm3310, %v3292, %v3292
        %v3383 = vsel %vm3312, %v3292, %v3382
        %v3384 = vsel %vm3314, %v3292, %v3383
        %v3385 = vsel %vm3316, %v3292, %v3384
        %v3386 = vsel %vm3318, %v3292, %v3385
        %v3387 = vsel %vm3320, %v3292, %v3386
        %v3388 = vsel %vm3310, %v3296, %v3296
        %v3389 = vsel %vm3312, %v3296, %v3388
        %v3390 = vsel %vm3314, %v3296, %v3389
        %v3391 = vsel %vm3316, %v3296, %v3390
        %v3392 = vsel %vm3318, %v3296, %v3391
        %v3393 = vsel %vm3320, %v3296, %v3392
        %v3394 = vsel %vm3310, %v3300, %v3300
        %v3395 = vsel %vm3312, %v3300, %v3394
        %v3396 = vsel %vm3314, %v3300, %v3395
        %v3397 = vsel %vm3316, %v3300, %v3396
        %v3398 = vsel %vm3318, %v3300, %v3397
        %v3399 = vsel %vm3320, %v3300, %v3398
        %v3400 = vsel %vm3310, %v3304, %v3304
        %v3401 = vsel %vm3312, %v3304, %v3400
        %v3402 = vsel %vm3314, %v3304, %v3401
        %v3403 = vsel %vm3316, %v3304, %v3402
        %v3404 = vsel %vm3318, %v3304, %v3403
        %v3405 = vsel %vm3320, %v3304, %v3404
        %v3406 = vsel %vm3310, %v3308, %v3308
        %v3407 = vsel %vm3312, %v3308, %v3406
        %v3408 = vsel %vm3314, %v3308, %v3407
        %v3409 = vsel %vm3316, %v3308, %v3408
        %v3410 = vsel %vm3318, %v3308, %v3409
        %v3411 = vsel %vm3320, %v3308, %v3410
        %v3428 = vsub.f32 %v2062, %v3321
        %v3429 = vsub.f32 %v2065, %v3327
        %v3430 = vsub.f32 %v2070, %v3333
        %v3431 = vsub.f32 %v2073, %v3339
        %v3432 = vsub.f32 %v2078, %v3345
        %v3433 = vsub.f32 %v2081, %v3351
        %v3434 = vsub.f32 %v2086, %v3357
        %v3435 = vsub.f32 %v2089, %v3363
        %v3436 = vsub.f32 %v2094, %v3369
        %v3437 = vsub.f32 %v2097, %v3375
        %v3438 = vsub.f32 %v2102, %v3381
        %v3439 = vsub.f32 %v2105, %v3387
        %v3440 = vsub.f32 %v2110, %v3393
        %v3441 = vsub.f32 %v2113, %v3399
        %v3442 = vsub.f32 %v2118, %v3405
        %v3443 = vsub.f32 %v2121, %v3411
        %v3444 = vmul.f32 %v3428, 1.442695
        %v3445 = vpow.pop %v3444
        %v3446 = vmul.f32 %v3429, 1.442695
        %v3447 = vpow.pop %v3446
        %v3448 = vmul.f32 %v3430, 1.442695
        %v3449 = vpow.pop %v3448
        %v3450 = vmul.f32 %v3431, 1.442695
        %v3451 = vpow.pop %v3450
        %v3452 = vmul.f32 %v3432, 1.442695
        %v3453 = vpow.pop %v3452
        %v3454 = vmul.f32 %v3433, 1.442695
        %v3455 = vpow.pop %v3454
        %v3456 = vmul.f32 %v3434, 1.442695
        %v3457 = vpow.pop %v3456
        %v3458 = vmul.f32 %v3435, 1.442695
        %v3459 = vpow.pop %v3458
        %v3460 = vmul.f32 %v3436, 1.442695
        %v3461 = vpow.pop %v3460
        %v3462 = vmul.f32 %v3437, 1.442695
        %v3463 = vpow.pop %v3462
        %v3464 = vmul.f32 %v3438, 1.442695
        %v3465 = vpow.pop %v3464
        %v3466 = vmul.f32 %v3439, 1.442695
        %v3467 = vpow.pop %v3466
        %v3468 = vmul.f32 %v3440, 1.442695
        %v3469 = vpow.pop %v3468
        %v3470 = vmul.f32 %v3441, 1.442695
        %v3471 = vpow.pop %v3470
        %v3472 = vmul.f32 %v3442, 1.442695
        %v3473 = vpow.pop %v3472
        %v3474 = vmul.f32 %v3443, 1.442695
        %v3475 = vpow.pop %v3474
        %v3492 = vlaneseq
        %v3493 = vshrl.u32 %v3492, 7
        %v3494 = vsub.s32 %v3244, %v3493
        %v3495 = vrot.slane %v2961, %v3494
        %v3496 = vlaneseq
        %v3497 = vshrl.u32 %v3496, 7
        %v3498 = vsub.s32 %v3244, %v3497
        %v3499 = vrot.slane %v2962, %v3498
        %v3500 = vlaneseq
        %v3501 = vshrl.u32 %v3500, 7
        %v3502 = vsub.s32 %v3244, %v3501
        %v3503 = vrot.slane %v2963, %v3502
        %v3504 = vlaneseq
        %v3505 = vshrl.u32 %v3504, 7
        %v3506 = vsub.s32 %v3244, %v3505
        %v3507 = vrot.slane %v2964, %v3506
        %v3508 = vlaneseq
        %v3509 = vshrl.u32 %v3508, 7
        %v3510 = vsub.s32 %v3244, %v3509
        %v3511 = vrot.slane %v2965, %v3510
        %v3512 = vlaneseq
        %v3513 = vshrl.u32 %v3512, 7
        %v3514 = vsub.s32 %v3244, %v3513
        %v3515 = vrot.slane %v2966, %v3514
        %v3516 = vlaneseq
        %v3517 = vshrl.u32 %v3516, 7
        %v3518 = vsub.s32 %v3244, %v3517
        %v3519 = vrot.slane %v2967, %v3518
        %v3520 = vlaneseq
        %v3521 = vshrl.u32 %v3520, 7
        %v3522 = vsub.s32 %v3244, %v3521
        %v3523 = vrot.slane %v2968, %v3522
        %v3524 = vlaneseq
        %v3525 = vshrl.u32 %v3524, 7
        %v3526 = vsub.s32 %v3244, %v3525
        %v3527 = vrot.slane %v2969, %v3526
        %v3528 = vlaneseq
        %v3529 = vshrl.u32 %v3528, 7
        %v3530 = vsub.s32 %v3244, %v3529
        %v3531 = vrot.slane %v2970, %v3530
        %v3532 = vlaneseq
        %v3533 = vshrl.u32 %v3532, 7
        %v3534 = vsub.s32 %v3244, %v3533
        %v3535 = vrot.slane %v2971, %v3534
        %v3536 = vlaneseq
        %v3537 = vshrl.u32 %v3536, 7
        %v3538 = vsub.s32 %v3244, %v3537
        %v3539 = vrot.slane %v2972, %v3538
        %v3540 = vlaneseq
        %v3541 = vshrl.u32 %v3540, 7
        %v3542 = vsub.s32 %v3244, %v3541
        %v3543 = vrot.slane %v2973, %v3542
        %v3544 = vlaneseq
        %v3545 = vshrl.u32 %v3544, 7
        %v3546 = vsub.s32 %v3244, %v3545
        %v3547 = vrot.slane %v2974, %v3546
        %v3548 = vlaneseq
        %v3549 = vshrl.u32 %v3548, 7
        %v3550 = vsub.s32 %v3244, %v3549
        %v3551 = vrot.slane %v2975, %v3550
        %v3552 = vlaneseq
        %v3553 = vshrl.u32 %v3552, 7
        %v3554 = vsub.s32 %v3244, %v3553
        %v3555 = vrot.slane %v2976, %v3554
        %v3556 = vsel %vm3310, %v3495, %v3495
        %v3557 = vsel %vm3312, %v3495, %v3556
        %v3558 = vsel %vm3314, %v3495, %v3557
        %v3559 = vsel %vm3316, %v3495, %v3558
        %v3560 = vsel %vm3318, %v3495, %v3559
        %v3561 = vsel %vm3320, %v3495, %v3560
        %v3562 = vsel %vm3310, %v3499, %v3499
        %v3563 = vsel %vm3312, %v3499, %v3562
        %v3564 = vsel %vm3314, %v3499, %v3563
        %v3565 = vsel %vm3316, %v3499, %v3564
        %v3566 = vsel %vm3318, %v3499, %v3565
        %v3567 = vsel %vm3320, %v3499, %v3566
        %v3568 = vsel %vm3310, %v3503, %v3503
        %v3569 = vsel %vm3312, %v3503, %v3568
        %v3570 = vsel %vm3314, %v3503, %v3569
        %v3571 = vsel %vm3316, %v3503, %v3570
        %v3572 = vsel %vm3318, %v3503, %v3571
        %v3573 = vsel %vm3320, %v3503, %v3572
        %v3574 = vsel %vm3310, %v3507, %v3507
        %v3575 = vsel %vm3312, %v3507, %v3574
        %v3576 = vsel %vm3314, %v3507, %v3575
        %v3577 = vsel %vm3316, %v3507, %v3576
        %v3578 = vsel %vm3318, %v3507, %v3577
        %v3579 = vsel %vm3320, %v3507, %v3578
        %v3580 = vsel %vm3310, %v3511, %v3511
        %v3581 = vsel %vm3312, %v3511, %v3580
        %v3582 = vsel %vm3314, %v3511, %v3581
        %v3583 = vsel %vm3316, %v3511, %v3582
        %v3584 = vsel %vm3318, %v3511, %v3583
        %v3585 = vsel %vm3320, %v3511, %v3584
        %v3586 = vsel %vm3310, %v3515, %v3515
        %v3587 = vsel %vm3312, %v3515, %v3586
        %v3588 = vsel %vm3314, %v3515, %v3587
        %v3589 = vsel %vm3316, %v3515, %v3588
        %v3590 = vsel %vm3318, %v3515, %v3589
        %v3591 = vsel %vm3320, %v3515, %v3590
        %v3592 = vsel %vm3310, %v3519, %v3519
        %v3593 = vsel %vm3312, %v3519, %v3592
        %v3594 = vsel %vm3314, %v3519, %v3593
        %v3595 = vsel %vm3316, %v3519, %v3594
        %v3596 = vsel %vm3318, %v3519, %v3595
        %v3597 = vsel %vm3320, %v3519, %v3596
        %v3598 = vsel %vm3310, %v3523, %v3523
        %v3599 = vsel %vm3312, %v3523, %v3598
        %v3600 = vsel %vm3314, %v3523, %v3599
        %v3601 = vsel %vm3316, %v3523, %v3600
        %v3602 = vsel %vm3318, %v3523, %v3601
        %v3603 = vsel %vm3320, %v3523, %v3602
        %v3604 = vsel %vm3310, %v3527, %v3527
        %v3605 = vsel %vm3312, %v3527, %v3604
        %v3606 = vsel %vm3314, %v3527, %v3605
        %v3607 = vsel %vm3316, %v3527, %v3606
        %v3608 = vsel %vm3318, %v3527, %v3607
        %v3609 = vsel %vm3320, %v3527, %v3608
        %v3610 = vsel %vm3310, %v3531, %v3531
        %v3611 = vsel %vm3312, %v3531, %v3610
        %v3612 = vsel %vm3314, %v3531, %v3611
        %v3613 = vsel %vm3316, %v3531, %v3612
        %v3614 = vsel %vm3318, %v3531, %v3613
        %v3615 = vsel %vm3320, %v3531, %v3614
        %v3616 = vsel %vm3310, %v3535, %v3535
        %v3617 = vsel %vm3312, %v3535, %v3616
        %v3618 = vsel %vm3314, %v3535, %v3617
        %v3619 = vsel %vm3316, %v3535, %v3618
        %v3620 = vsel %vm3318, %v3535, %v3619
        %v3621 = vsel %vm3320, %v3535, %v3620
        %v3622 = vsel %vm3310, %v3539, %v3539
        %v3623 = vsel %vm3312, %v3539, %v3622
        %v3624 = vsel %vm3314, %v3539, %v3623
        %v3625 = vsel %vm3316, %v3539, %v3624
        %v3626 = vsel %vm3318, %v3539, %v3625
        %v3627 = vsel %vm3320, %v3539, %v3626
        %v3628 = vsel %vm3310, %v3543, %v3543
        %v3629 = vsel %vm3312, %v3543, %v3628
        %v3630 = vsel %vm3314, %v3543, %v3629
        %v3631 = vsel %vm3316, %v3543, %v3630
        %v3632 = vsel %vm3318, %v3543, %v3631
        %v3633 = vsel %vm3320, %v3543, %v3632
        %v3634 = vsel %vm3310, %v3547, %v3547
        %v3635 = vsel %vm3312, %v3547, %v3634
        %v3636 = vsel %vm3314, %v3547, %v3635
        %v3637 = vsel %vm3316, %v3547, %v3636
        %v3638 = vsel %vm3318, %v3547, %v3637
        %v3639 = vsel %vm3320, %v3547, %v3638
        %v3640 = vsel %vm3310, %v3551, %v3551
        %v3641 = vsel %vm3312, %v3551, %v3640
        %v3642 = vsel %vm3314, %v3551, %v3641
        %v3643 = vsel %vm3316, %v3551, %v3642
        %v3644 = vsel %vm3318, %v3551, %v3643
        %v3645 = vsel %vm3320, %v3551, %v3644
        %v3646 = vsel %vm3310, %v3555, %v3555
        %v3647 = vsel %vm3312, %v3555, %v3646
        %v3648 = vsel %vm3314, %v3555, %v3647
        %v3649 = vsel %vm3316, %v3555, %v3648
        %v3650 = vsel %vm3318, %v3555, %v3649
        %v3651 = vsel %vm3320, %v3555, %v3650
        %v3668 = vmul.f32 %v3445, %v3561
        %v3669 = vmul.f32 %v3447, %v3567
        %v3670 = vmul.f32 %v3449, %v3573
        %v3671 = vmul.f32 %v3451, %v3579
        %v3672 = vmul.f32 %v3453, %v3585
        %v3673 = vmul.f32 %v3455, %v3591
        %v3674 = vmul.f32 %v3457, %v3597
        %v3675 = vmul.f32 %v3459, %v3603
        %v3676 = vmul.f32 %v3461, %v3609
        %v3677 = vmul.f32 %v3463, %v3615
        %v3678 = vmul.f32 %v3465, %v3621
        %v3679 = vmul.f32 %v3467, %v3627
        %v3680 = vmul.f32 %v3469, %v3633
        %v3681 = vmul.f32 %v3471, %v3639
        %v3682 = vmul.f32 %v3473, %v3645
        %v3683 = vmul.f32 %v3475, %v3651
        %v3684 = vpack.c.bf16 %v3669, %v3668
        %v3685 = vpack.c.bf16 %v3671, %v3670
        %v3686 = vpack.c.bf16 %v3673, %v3672
        %v3687 = vpack.c.bf16 %v3675, %v3674
        %v3688 = vpack.c.bf16 %v3677, %v3676
        %v3689 = vpack.c.bf16 %v3679, %v3678
        %v3690 = vpack.c.bf16 %v3681, %v3680
        %v3691 = vpack.c.bf16 %v3683, %v3682
        %v3693 = vsel %vm1998, %v3684, 0
        %v3696 = vsel %vm1998, %v3685, 0
        %v3699 = vsel %vm1998, %v3686, 0
        %v3702 = vsel %vm1998, %v3687, 0
        %v3705 = vsel %vm1998, %v3688, 0
        %v3708 = vsel %vm1998, %v3689, 0
        %v3711 = vsel %vm1998, %v3690, 0
        %v3714 = vsel %vm1998, %v3691, 0
        %v3717 = vsel %vm2023, %v2994, 0
        %3719 = vmatprep.subr.bf16.mxu0 0
        %3720 = vmatpush1.bf16.msra.mxu0 %v3717
        %3721 = vmatprep.subr.bf16.mxu0 0
        %3722 = vmatpush1.bf16.msra.mxu0 0
        %3723 = vmatprep.subr.bf16.mxu0 0
        %3724 = vmatpush1.bf16.msra.mxu0 0
        %3725 = vmatprep.subr.bf16.mxu0 0
        %3726 = vmatpush1.bf16.msra.mxu0 0
        %3727 = vmatprep.subr.bf16.mxu0 0
        %3728 = vmatpush1.bf16.msra.mxu0 0
        %3729 = vmatprep.subr.bf16.mxu0 0
        %3730 = vmatpush1.bf16.msra.mxu0 0
        %3731 = vmatprep.subr.bf16.mxu0 0
        %3732 = vmatpush1.bf16.msra.mxu0 0
        %3733 = vmatprep.subr.bf16.mxu0 0
        %3734 = vmatpush1.bf16.msra.mxu0 0
        %3735 = vmatprep.subr.bf16.mxu0 0
        %3736 = vmatpush1.bf16.msra.mxu0 0
        %3737 = vmatprep.subr.bf16.mxu0 0
        %3738 = vmatpush1.bf16.msra.mxu0 0
        %3739 = vmatprep.subr.bf16.mxu0 0
        %3740 = vmatpush1.bf16.msra.mxu0 0
        %3741 = vmatprep.subr.bf16.mxu0 0
        %3742 = vmatpush1.bf16.msra.mxu0 0
        %3743 = vmatprep.subr.bf16.mxu0 0
        %3744 = vmatpush1.bf16.msra.mxu0 0
        %3745 = vmatprep.subr.bf16.mxu0 0
        %3746 = vmatpush1.bf16.msra.mxu0 0
        %3747 = vmatprep.subr.bf16.mxu0 0
        %3748 = vmatpush1.bf16.msra.mxu0 0
        %3749 = vmatprep.subr.bf16.mxu0 0
        %3750 = vmatpush1.bf16.msra.mxu0 0
        %3751 = vmatprep.mubr.bf16.mxu0 0
        %3752 = vmatmul.mubr.bf16.gmra.mrb[0].mxu0 %v3693
        %v3753 = vpop.f32.mrb[0].mxu0
        %v3754 = vadd.f32 0.0, %v3753
        %v3755 = vpop.f32.mrb[0].mxu0
        %v3756 = vpop.f32.mrb[0].mxu0
        %v3757 = vadd.f32 0.0, %v3756
        %v3758 = vpop.f32.mrb[0].mxu0
        %3759 = vmatprep.mubr.bf16.mxu0 0
        %3760 = vmatmul.mubr.bf16.gmra.mrb[0].mxu0 %v3696
        %v3761 = vpop.f32.mrb[0].mxu0
        %v3762 = vadd.f32 0.0, %v3761
        %v3763 = vpop.f32.mrb[0].mxu0
        %v3764 = vpop.f32.mrb[0].mxu0
        %v3765 = vadd.f32 0.0, %v3764
        %v3766 = vpop.f32.mrb[0].mxu0
        %3767 = vmatprep.mubr.bf16.mxu0 0
        %3768 = vmatmul.mubr.bf16.gmra.mrb[0].mxu0 %v3699
        %v3769 = vpop.f32.mrb[0].mxu0
        %v3770 = vadd.f32 0.0, %v3769
        %v3771 = vpop.f32.mrb[0].mxu0
        %v3772 = vpop.f32.mrb[0].mxu0
        %v3773 = vadd.f32 0.0, %v3772
        %v3774 = vpop.f32.mrb[0].mxu0
        %3775 = vmatprep.mubr.bf16.mxu0 0
        %3776 = vmatmul.mubr.bf16.gmra.mrb[0].mxu0 %v3702
        %v3777 = vpop.f32.mrb[0].mxu0
        %v3778 = vadd.f32 0.0, %v3777
        %v3779 = vpop.f32.mrb[0].mxu0
        %v3780 = vpop.f32.mrb[0].mxu0
        %v3781 = vadd.f32 0.0, %v3780
        %v3782 = vpop.f32.mrb[0].mxu0
        %3783 = vmatprep.mubr.bf16.mxu0 0
        %3784 = vmatmul.mubr.bf16.gmra.mrb[0].mxu0 %v3705
        %v3785 = vpop.f32.mrb[0].mxu0
        %v3786 = vadd.f32 0.0, %v3785
        %v3787 = vpop.f32.mrb[0].mxu0
        %v3788 = vpop.f32.mrb[0].mxu0
        %v3789 = vadd.f32 0.0, %v3788
        %v3790 = vpop.f32.mrb[0].mxu0
        %3791 = vmatprep.mubr.bf16.mxu0 0
        %3792 = vmatmul.mubr.bf16.gmra.mrb[0].mxu0 %v3708
        %v3793 = vpop.f32.mrb[0].mxu0
        %v3794 = vadd.f32 0.0, %v3793
        %v3795 = vpop.f32.mrb[0].mxu0
        %v3796 = vpop.f32.mrb[0].mxu0
        %v3797 = vadd.f32 0.0, %v3796
        %v3798 = vpop.f32.mrb[0].mxu0
        %3799 = vmatprep.mubr.bf16.mxu0 0
        %3800 = vmatmul.mubr.bf16.gmra.mrb[0].mxu0 %v3711
        %v3801 = vpop.f32.mrb[0].mxu0
        %v3802 = vadd.f32 0.0, %v3801
        %v3803 = vpop.f32.mrb[0].mxu0
        %v3804 = vpop.f32.mrb[0].mxu0
        %v3805 = vadd.f32 0.0, %v3804
        %v3806 = vpop.f32.mrb[0].mxu0
        %3807 = vmatprep.mubr.bf16.mxu0 0
        %3808 = vmatmul.mubr.bf16.gmra.mrb[0].mxu0 %v3714
        %v3809 = vpop.f32.mrb[0].mxu0
        %v3810 = vadd.f32 0.0, %v3809
        %v3811 = vpop.f32.mrb[0].mxu0
        %v3812 = vpop.f32.mrb[0].mxu0
        %v3813 = vadd.f32 0.0, %v3812
        %v3814 = vpop.f32.mrb[0].mxu0
        %3815 = vdwg.mxu0
        %v3816 = vmul.f32 %v1736, %v3754
        %v3817 = vmul.f32 %v1739, %v3757
        %v3818 = vmul.f32 %v1744, %v3762
        %v3819 = vmul.f32 %v1747, %v3765
        %v3820 = vmul.f32 %v1752, %v3770
        %v3821 = vmul.f32 %v1755, %v3773
        %v3822 = vmul.f32 %v1760, %v3778
        %v3823 = vmul.f32 %v1763, %v3781
        %v3824 = vmul.f32 %v1768, %v3786
        %v3825 = vmul.f32 %v1771, %v3789
        %v3826 = vmul.f32 %v1776, %v3794
        %v3827 = vmul.f32 %v1779, %v3797
        %v3828 = vmul.f32 %v1784, %v3802
        %v3829 = vmul.f32 %v1787, %v3805
        %v3830 = vmul.f32 %v1792, %v3810
        %v3831 = vmul.f32 %v1795, %v3813
        %v3832 = vsel %vm1293, %v3816, 0.0
        %v3833 = vrot.slane %v3832, 4
        %v3834 = vadd.f32 %v3832, %v3833
        %v3835 = vrot.slane %v3834, 2
        %v3836 = vadd.f32 %v3834, %v3835
        %v3837 = vrot.slane %v3836, 1
        %v3838 = vadd.f32 %v3836, %v3837
        %v3839 = vsel %vm1293, %v3817, 0.0
        %v3840 = vrot.slane %v3839, 4
        %v3841 = vadd.f32 %v3839, %v3840
        %v3842 = vrot.slane %v3841, 2
        %v3843 = vadd.f32 %v3841, %v3842
        %v3844 = vrot.slane %v3843, 1
        %v3845 = vadd.f32 %v3843, %v3844
        %v3846 = vsel %vm1293, %v3818, 0.0
        %v3847 = vrot.slane %v3846, 4
        %v3848 = vadd.f32 %v3846, %v3847
        %v3849 = vrot.slane %v3848, 2
        %v3850 = vadd.f32 %v3848, %v3849
        %v3851 = vrot.slane %v3850, 1
        %v3852 = vadd.f32 %v3850, %v3851
        %v3853 = vsel %vm1293, %v3819, 0.0
        %v3854 = vrot.slane %v3853, 4
        %v3855 = vadd.f32 %v3853, %v3854
        %v3856 = vrot.slane %v3855, 2
        %v3857 = vadd.f32 %v3855, %v3856
        %v3858 = vrot.slane %v3857, 1
        %v3859 = vadd.f32 %v3857, %v3858
        %v3860 = vsel %vm1293, %v3820, 0.0
        %v3861 = vrot.slane %v3860, 4
        %v3862 = vadd.f32 %v3860, %v3861
        %v3863 = vrot.slane %v3862, 2
        %v3864 = vadd.f32 %v3862, %v3863
        %v3865 = vrot.slane %v3864, 1
        %v3866 = vadd.f32 %v3864, %v3865
        %v3867 = vsel %vm1293, %v3821, 0.0
        %v3868 = vrot.slane %v3867, 4
        %v3869 = vadd.f32 %v3867, %v3868
        %v3870 = vrot.slane %v3869, 2
        %v3871 = vadd.f32 %v3869, %v3870
        %v3872 = vrot.slane %v3871, 1
        %v3873 = vadd.f32 %v3871, %v3872
        %v3874 = vsel %vm1293, %v3822, 0.0
        %v3875 = vrot.slane %v3874, 4
        %v3876 = vadd.f32 %v3874, %v3875
        %v3877 = vrot.slane %v3876, 2
        %v3878 = vadd.f32 %v3876, %v3877
        %v3879 = vrot.slane %v3878, 1
        %v3880 = vadd.f32 %v3878, %v3879
        %v3881 = vsel %vm1293, %v3823, 0.0
        %v3882 = vrot.slane %v3881, 4
        %v3883 = vadd.f32 %v3881, %v3882
        %v3884 = vrot.slane %v3883, 2
        %v3885 = vadd.f32 %v3883, %v3884
        %v3886 = vrot.slane %v3885, 1
        %v3887 = vadd.f32 %v3885, %v3886
        %v3888 = vsel %vm1293, %v3824, 0.0
        %v3889 = vrot.slane %v3888, 4
        %v3890 = vadd.f32 %v3888, %v3889
        %v3891 = vrot.slane %v3890, 2
        %v3892 = vadd.f32 %v3890, %v3891
        %v3893 = vrot.slane %v3892, 1
        %v3894 = vadd.f32 %v3892, %v3893
        %v3895 = vsel %vm1293, %v3825, 0.0
        %v3896 = vrot.slane %v3895, 4
        %v3897 = vadd.f32 %v3895, %v3896
        %v3898 = vrot.slane %v3897, 2
        %v3899 = vadd.f32 %v3897, %v3898
        %v3900 = vrot.slane %v3899, 1
        %v3901 = vadd.f32 %v3899, %v3900
        %v3902 = vsel %vm1293, %v3826, 0.0
        %v3903 = vrot.slane %v3902, 4
        %v3904 = vadd.f32 %v3902, %v3903
        %v3905 = vrot.slane %v3904, 2
        %v3906 = vadd.f32 %v3904, %v3905
        %v3907 = vrot.slane %v3906, 1
        %v3908 = vadd.f32 %v3906, %v3907
        %v3909 = vsel %vm1293, %v3827, 0.0
        %v3910 = vrot.slane %v3909, 4
        %v3911 = vadd.f32 %v3909, %v3910
        %v3912 = vrot.slane %v3911, 2
        %v3913 = vadd.f32 %v3911, %v3912
        %v3914 = vrot.slane %v3913, 1
        %v3915 = vadd.f32 %v3913, %v3914
        %v3916 = vsel %vm1293, %v3828, 0.0
        %v3917 = vrot.slane %v3916, 4
        %v3918 = vadd.f32 %v3916, %v3917
        %v3919 = vrot.slane %v3918, 2
        %v3920 = vadd.f32 %v3918, %v3919
        %v3921 = vrot.slane %v3920, 1
        %v3922 = vadd.f32 %v3920, %v3921
        %v3923 = vsel %vm1293, %v3829, 0.0
        %v3924 = vrot.slane %v3923, 4
        %v3925 = vadd.f32 %v3923, %v3924
        %v3926 = vrot.slane %v3925, 2
        %v3927 = vadd.f32 %v3925, %v3926
        %v3928 = vrot.slane %v3927, 1
        %v3929 = vadd.f32 %v3927, %v3928
        %v3930 = vsel %vm1293, %v3830, 0.0
        %v3931 = vrot.slane %v3930, 4
        %v3932 = vadd.f32 %v3930, %v3931
        %v3933 = vrot.slane %v3932, 2
        %v3934 = vadd.f32 %v3932, %v3933
        %v3935 = vrot.slane %v3934, 1
        %v3936 = vadd.f32 %v3934, %v3935
        %v3937 = vsel %vm1293, %v3831, 0.0
        %v3938 = vrot.slane %v3937, 4
        %v3939 = vadd.f32 %v3937, %v3938
        %v3940 = vrot.slane %v3939, 2
        %v3941 = vadd.f32 %v3939, %v3940
        %v3942 = vrot.slane %v3941, 1
        %v3943 = vadd.f32 %v3941, %v3942
        %v3948 = vunpack.c.l.b16 %v3056
        %v3949 = vunpack.c.l.b16 %v3057
        %v3950 = vunpack.c.l.b16 %v3058
        %v3951 = vunpack.c.l.b16 %v3059
        %v3952 = vpack.c.b16 %v3949, %v3948
        %v3953 = vpack.c.b16 %v3951, %v3950
        %v3972 = vsel %vm3309, %v3845, %v3838
        %v3973 = vsel %vm3310, %v3852, %v3972
        %v3974 = vsel %vm3312, %v3859, %v3973
        %v3975 = vsel %vm3314, %v3866, %v3974
        %v3976 = vsel %vm3316, %v3873, %v3975
        %v3977 = vsel %vm3318, %v3880, %v3976
        %v3978 = vsel %vm3320, %v3887, %v3977
        %v3979 = vsel %vm3309, %v3901, %v3894
        %v3980 = vsel %vm3310, %v3908, %v3979
        %v3981 = vsel %vm3312, %v3915, %v3980
        %v3982 = vsel %vm3314, %v3922, %v3981
        %v3983 = vsel %vm3316, %v3929, %v3982
        %v3984 = vsel %vm3318, %v3936, %v3983
        %v3985 = vsel %vm3320, %v3943, %v3984
        %v3989 = vsel %vm1293, %v3226, 0
        %3991 = vmatprep.subr.bf16.mxu0 0
        %3992 = vmatpush1.bf16.msra.mxu0 %v3952
        %3993 = vmatprep.subr.bf16.mxu0 0
        %3994 = vmatpush1.bf16.msra.mxu0 %v3953
        %3995 = vmatprep.subr.bf16.mxu0 0
        %3996 = vmatpush1.bf16.msra.mxu0 0
        %3997 = vmatprep.subr.bf16.mxu0 0
        %3998 = vmatpush1.bf16.msra.mxu0 0
        %3999 = vmatprep.subr.bf16.mxu0 0
        %4000 = vmatpush1.bf16.msra.mxu0 0
        %4001 = vmatprep.subr.bf16.mxu0 0
        %4002 = vmatpush1.bf16.msra.mxu0 0
        %4003 = vmatprep.subr.bf16.mxu0 0
        %4004 = vmatpush1.bf16.msra.mxu0 0
        %4005 = vmatprep.subr.bf16.mxu0 0
        %4006 = vmatpush1.bf16.msra.mxu0 0
        %4007 = vmatprep.subr.bf16.mxu0 0
        %4008 = vmatpush1.bf16.msra.mxu0 0
        %4009 = vmatprep.subr.bf16.mxu0 0
        %4010 = vmatpush1.bf16.msra.mxu0 0
        %4011 = vmatprep.subr.bf16.mxu0 0
        %4012 = vmatpush1.bf16.msra.mxu0 0
        %4013 = vmatprep.subr.bf16.mxu0 0
        %4014 = vmatpush1.bf16.msra.mxu0 0
        %4015 = vmatprep.subr.bf16.mxu0 0
        %4016 = vmatpush1.bf16.msra.mxu0 0
        %4017 = vmatprep.subr.bf16.mxu0 0
        %4018 = vmatpush1.bf16.msra.mxu0 0
        %4019 = vmatprep.subr.bf16.mxu0 0
        %4020 = vmatpush1.bf16.msra.mxu0 0
        %4021 = vmatprep.subr.bf16.mxu0 0
        %4022 = vmatpush1.bf16.msra.mxu0 0
        %4023 = vmatprep.mubr.bf16.mxu0 0
        %4024 = vmatmul.mubr.bf16.gmra.mrb[0].mxu0 %v3989
        %v4025 = vpop.f32.mrb[0].mxu0
        %v4026 = vadd.f32 %v3978, %v4025
        %v4027 = vpop.f32.mrb[0].mxu0
        %v4028 = vpop.f32.mrb[0].mxu0
        %v4029 = vadd.f32 %v3985, %v4028
        %v4030 = vpop.f32.mrb[0].mxu0
        %4031 = vdwg.mxu0
        %4032 = vst.msk [vmem:[%s820] sm:$0xff] %vm1293, %v4026
        %4033 = vst.msk [vmem:[%s820 + $0x8] sm:$0xff] %vm1293, %v4029
        %s4034 = sand.u32 %s445, 1
        %s4035 = scalar_lea.sflag [#allocation4], %s4034
        %s4036 = sand.u32 %s445, 1
        %s4037 = smul.addr %s4036, 16
        %s4038 = scalar_lea.vmem [#allocation16], %s4037
        %s4039 = sand.u32 %s473, 1
        %s4040 = scalar_lea.sflag [#allocation18], %s4039
        %s4041 = sand.u32 %s473, 1
        %s4042 = smul.addr %s4041, 8
        %s4043 = scalar_lea.vmem [#allocation17], %s4042
        // Predicated region
        $region117: #{tpu_custom_call.1} parent=83 // pred_check
          %p4044 = pneg %p455
        $region118: #{tpu_custom_call.1} parent=83 // pred_check_branch
          %4046 = sbr.rel (%p4044) target = $region120
        $region119: #{tpu_custom_call.1} parent=83 // pred_region
          %s4047 = smul.u32 2, %s51
          %s4049 = ssub.s32 256, 256
          %4050 = vsyncadd %s4035, %s4049
          %s4051 = smul.addr %s50, 2
          %s4052 = sadd.s32 %s4047, %s4051
          %s4053 = smul.addr %s4052, 128
          %s4054 = scalar_lea.hbm %s16, %s4053
          %s4055 = sshll.u32 %s4038, 4
          %s4056 = int_to_ptr.vmem [resolvable:$true] %s4055
          %4061 = dma.vmem_to_hbm [thread:$0]  %s4056, 256, %s4054, %s4035, 128, 128, 8
        $region120: #{tpu_custom_call.1} parent=83 // pred_fallthru
          _
        // Predicated region
        $region121: #{tpu_custom_call.1} parent=83 // pred_check
          %p4062 = pneg %p483
        $region122: #{tpu_custom_call.1} parent=83 // pred_check_branch
          %4064 = sbr.rel (%p4062) target = $region124
        $region123: #{tpu_custom_call.1} parent=83 // pred_region
          %s4065 = smul.u32 2, %s51
          %s4067 = ssub.s32 128, 128
          %4068 = vsyncadd %s4040, %s4067
          %s4069 = smul.addr %s50, 2
          %s4070 = sadd.s32 %s4065, %s4069
          %s4071 = smul.addr %s4070, 64
          %s4072 = scalar_lea.hbm %s17, %s4071
          %s4073 = sshll.u32 %s4043, 4
          %s4074 = int_to_ptr.vmem [resolvable:$true] %s4073
          %4079 = dma.vmem_to_hbm [thread:$0]  %s4074, 128, %s4072, %s4040, 64, 64, 4
        $region124: #{tpu_custom_call.1} parent=83 // pred_fallthru
          _
      $region84: #{tpu_custom_call.1} parent=5 // pred_fallthru
        _
      %p4080 = scmp.le.s32.totalorder 2, %s41
      // Predicated region
      $region125: #{tpu_custom_call.1} parent=5 // pred_check
        %p4081 = pneg %p4080
      $region126: #{tpu_custom_call.1} parent=5 // pred_check_branch
        %4083 = sbr.rel (%p4081) target = $region128
      $region127: #{tpu_custom_call.1} parent=5 // pred_region
        %s4084 = ssub.s32 %s41, 2
        // Predicated region
        $region129: #{tpu_custom_call.1} parent=127 // pred_check
          %p4085 = pneg %p461
        $region130: #{tpu_custom_call.1} parent=127 // pred_check_branch
          %4087 = sbr.rel (%p4085) target = $region132
        $region131: #{tpu_custom_call.1} parent=127 // pred_region
          %s4088 = sand.u32 %s446, 1
          %s4089 = scalar_lea.sflag [#allocation4], %s4088
          %s4090 = sand.u32 %s446, 1
          %s4091 = smul.addr %s4090, 16
          %s4092 = scalar_lea.vmem [#allocation16], %s4091
          %4093 = dma.done %s4089, 256
        $region132: #{tpu_custom_call.1} parent=127 // pred_fallthru
          _
        // Predicated region
        $region133: #{tpu_custom_call.1} parent=127 // pred_check
          %p4094 = pneg %p489
        $region134: #{tpu_custom_call.1} parent=127 // pred_check_branch
          %4096 = sbr.rel (%p4094) target = $region136
        $region135: #{tpu_custom_call.1} parent=127 // pred_region
          %s4097 = sand.u32 %s474, 1
          %s4098 = scalar_lea.sflag [#allocation18], %s4097
          %s4099 = sand.u32 %s474, 1
          %s4100 = smul.addr %s4099, 8
          %s4101 = scalar_lea.vmem [#allocation17], %s4100
          %4102 = dma.done %s4098, 128
        $region136: #{tpu_custom_call.1} parent=127 // pred_fallthru
          _
      $region128: #{tpu_custom_call.1} parent=5 // pred_fallthru
        _
    $region6: #{tpu_custom_call.1} parent=1 // loop_footer
      %s45 = sadd.s32 1, %s41
    $region7: #{tpu_custom_call.1} parent=1 // loop_footer_branch
      %40 = sbr.rel target = $region3
    $region8: #{tpu_custom_call.1} parent=1 // loop_exit
      _
    %4103 = vsyncpa [#allocation3], 1
    %s4104 = scalar_lea.sflag [#allocation3], 1
    %4105 = vsyncpa %s4104, 1
    %4106 = vsyncpa [#allocation6], 1
    %s4107 = scalar_lea.sflag [#allocation6], 1
    %4108 = vsyncpa %s4107, 1
    %4109 = vsyncpa [#allocation9], 1
    %s4110 = scalar_lea.sflag [#allocation9], 1
    %4111 = vsyncpa %s4110, 1
    %4112 = vsyncpa [#allocation12], 1
    %4113 = vsyncpa [#allocation15], 1
    %4114 = vsyncpa [#allocation4], 1
    %s4115 = scalar_lea.sflag [#allocation4], 1
    %4116 = vsyncpa %s4115, 1
    %4117 = vsyncpa [#allocation18], 1
    %s4118 = scalar_lea.sflag [#allocation18], 1
    %4119 = vsyncpa %s4118, 1

</llo_original>
